<compile_context>
chip_gen: v7x
topology: tpu7x:2x2x1
jax: 0.10.0
libtpu: 0.0.40
codegen_flags: <defaults>
</compile_context>

<pallas_src>
import functools

import jax
import jax.numpy as jnp
from jax.experimental import pallas as pl
from jax.experimental.pallas import tpu as pltpu


BN_EPS = 1e-5

# Kernel-argument order (all f32, kernel convention: weights (out, in) for MXU
# layers, (in, out) for VPU tail layers, biases as (out, 1) columns).
_W_NAMES = ("w1u", "w1i", "b1", "w2", "b2", "w3", "b3", "w4t", "b4", "w5t", "b5")


def _round_up(n, m):
    return ((n + m - 1) // m) * m


# ----------------------------------------------------------------------------
# Kernel (transposed layout: activations are (features, TILE_B), batch on lanes)
# ----------------------------------------------------------------------------
def _ncf_kernel(u_ref, i_ref,
                w1u_ref, w1i_ref, b1_ref,
                w2_ref, b2_ref,
                w3_ref, b3_ref,
                w4t_ref, b4_ref,
                w5t_ref, b5_ref,
                logits_ref):
    f32 = jnp.float32

    # Single upcast of the streamed batch tile (bf16 streaming path); weights
    # and all inter-layer activations stay f32 -> no per-layer casts.
    u = u_ref[...].astype(f32)                      # (user_dim, TB)
    v = i_ref[...].astype(f32)                      # (item_dim, TB)

    # Layer 1 = embeddings + eval-BN folded into the first MLP Linear.
    h = (jnp.dot(w1u_ref[...], u, preferred_element_type=f32)
         + jnp.dot(w1i_ref[...], v, preferred_element_type=f32))
    h = jnp.maximum(h + b1_ref[...], 0.0)           # (E, TB)

    # Layers 2 and 3: MXU (outputs come back stacked along sublanes).
    h = jnp.maximum(jnp.dot(w2_ref[...], h, preferred_element_type=f32)
                    + b2_ref[...], 0.0)             # (E/2, TB)
    h = jnp.maximum(jnp.dot(w3_ref[...], h, preferred_element_type=f32)
                    + b3_ref[...], 0.0)             # (E/4, TB)

    # Layers 4 (d4 x d3) and 5 (1 x d4): tiny M/K -> VPU broadcast-multiply +
    # sublane reduce instead of two almost-fully-padded MXU round trips.
    w4t = w4t_ref[...]                              # (d3, d4)  (in, out)
    b4 = b4_ref[...]                                # (d4, 1)
    h4_rows = []
    for n in range(w4t.shape[1]):
        r = jnp.sum(w4t[:, n:n + 1] * h, axis=0, keepdims=True) + b4[n:n + 1, :]
        h4_rows.append(jnp.maximum(r, 0.0))         # (1, TB)

    w5t = w5t_ref[...]                              # (d4, 1)
    logits = b5_ref[...]                            # (1, 1) -> lane-broadcast
    for n, row in enumerate(h4_rows):
        logits = logits + w5t[n:n + 1, :] * row     # (1, TB)
    logits_ref[...] = logits                        # lane-dense store


# ----------------------------------------------------------------------------
# Wrapper
# ----------------------------------------------------------------------------
def ncf_forward(user, item, label, kparams, *, block_batch=None,
                input_dtype=jnp.float32):
    """NCF forward as a batch-tiled Pallas kernel.

    kparams: output of prepare_kernel_params (BN + embeddings folded into w1).
    input_dtype: dtype used to STREAM the batch inputs (f32 or bf16); weights
                 and in-kernel arithmetic are always f32.
    """
    B, user_dim = user.shape
    item_dim = item.shape[1]
    E = kparams["b1"].shape[0]

    # ---- batch tile (lane axis) selection -------------------------------
    if block_batch is None:
        block_batch = 4096
    block_batch = max(128, _round_up(min(block_batch, _round_up(B, 128)), 128))
    if B > 128 and pl.cdiv(B, block_batch) < 2:
        # Keep >= 2 grid steps so the "parallel" axis can feed both v7x TCs.
        block_batch = max(128, _round_up(pl.cdiv(B, 2), 128))
    num_tiles = pl.cdiv(B, block_batch)

    # ---- inputs: one fused transpose+cast pass each; no concat, no pad ---
    user_t = user.T.astype(input_dtype)             # (user_dim, B)
    item_t = item.T.astype(input_dtype)             # (item_dim, B)

    w_args = [kparams[n] for n in _W_NAMES]

    # Weights: whole-array blocks with a constant index_map -> DMA'd once,
    # stay VMEM-resident across the batch grid.
    weight_specs = [pl.BlockSpec(w.shape, lambda i: (0, 0)) for w in w_args]
    in_specs = [
        # Ragged last tile handled by Pallas partial-block logic; OOB lanes are
        # garbage but lanes never mix (contraction is over the feature axis).
        # TODO(synk): if profiling shows exposed input DMA on v5e at large
        #             tiles, add pipeline_mode=pl.Buffered(3) here.
        pl.BlockSpec((user_dim, block_batch), lambda i: (0, i)),
        pl.BlockSpec((item_dim, block_batch), lambda i: (0, i)),
    ] + weight_specs
    out_specs = pl.BlockSpec((1, block_batch), lambda i: (0, i))
    out_shape = jax.ShapeDtypeStruct((1, B), jnp.float32)   # exact, no padding

    # ---- advisory cost estimate + generation-aware VMEM budget ----------
    in_itemsize = jnp.dtype(input_dtype).itemsize
    weight_bytes = sum(int(w.size) * w.dtype.itemsize for w in w_args)
    flops_per_row = 2 * sum(int(kparams[n].size) for n in
                            ("w1u", "w1i", "w2", "w3", "w4t", "w5t"))
    bytes_accessed = (B * (user_dim + item_dim) * in_itemsize
                      + weight_bytes + B * 4)

    in_tile_bytes = (user_dim + item_dim) * block_batch * in_itemsize
    act_bytes = 4 * E * block_batch * 4            # loose bound on live temps
    vmem_needed = weight_bytes + 2 * (in_tile_bytes + block_batch * 4) + act_bytes
    try:
        vmem_cap = int(pltpu.get_tpu_info().vmem_capacity_bytes)
    except Exception:                               # conservative: v7x = 64 MiB
        vmem_cap = 64 * 1024 * 1024
    vmem_limit = int(min(vmem_cap * 3 // 4,
                         max(16 * 1024 * 1024, 4 * vmem_needed)))

    logits_row = pl.pallas_call(
        _ncf_kernel,
        grid=(num_tiles,),
        in_specs=in_specs,
        out_specs=out_specs,
        out_shape=out_shape,
        compiler_params=pltpu.CompilerParams(
            dimension_semantics=("parallel",),
            vmem_limit_bytes=vmem_limit,
        ),
        cost_estimate=pl.CostEstimate(
            flops=int(B) * int(flops_per_row),
            transcendentals=0,
            bytes_accessed=int(bytes_accessed),
        ),
    )(user_t, item_t, *w_args)

    logits = logits_row.reshape(B, 1)
    if label is None:
        return logits, None
    loss = jnp.mean((logits - label.astype(jnp.float32)) ** 2)
    return logits, loss


# ----------------------------------------------------------------------------
# Parameters (PyTorch conventions) + folding into the kernel layout
# ----------------------------------------------------------------------------
def _init_linear(key, in_dim, out_dim):
    """PyTorch nn.Linear init: W (out, in), b (out,), U(-1/sqrt(in), 1/sqrt(in))."""
    kw, kb = jax.random.split(key)
    bound = 1.0 / (in_dim ** 0.5)
    w = jax.random.uniform(kw, (out_dim, in_dim), jnp.float32, -bound, bound)
    b = jax.random.uniform(kb, (out_dim,), jnp.float32, -bound, bound)
    return w, b


def make_params(key, user_dim, item_dim, embedding_dim):
    E = embedding_dim
    dims = [2 * E, E, int(0.5 * E), int(0.25 * E), int(0.1 * E), 1]
    keys = jax.random.split(key, 11)

    wu, bu = _init_linear(keys[0], user_dim, E)
    wi, bi = _init_linear(keys[1], item_dim, E)

    # BatchNorm1d(2E) parameters + running stats (deterministic, non-trivial).
    bn_gamma = 1.0 + 0.1 * jax.random.normal(keys[2], (2 * E,), jnp.float32)
    bn_beta = 0.1 * jax.random.normal(keys[3], (2 * E,), jnp.float32)
    bn_mean = 0.05 * jax.random.normal(keys[4], (2 * E,), jnp.float32)
    bn_var = 1.0 + 0.1 * jax.random.uniform(keys[5], (2 * E,), jnp.float32)

    params = dict(wu=wu, bu=bu, wi=wi, bi=bi,
                  bn_gamma=bn_gamma, bn_beta=bn_beta,
                  bn_mean=bn_mean, bn_var=bn_var)
    for idx in range(5):
        w, b = _init_linear(keys[6 + idx], dims[idx], dims[idx + 1])
        params[f"w{idx + 1}"] = w
        params[f"b{idx + 1}"] = b
    return params


def prepare_kernel_params(params):
    """Fold eval-mode BatchNorm AND the embedding Linears into MLP layer 1.

    With scale = gamma / sqrt(var + eps), shift = beta - mean * scale and
    W1s = W1 * scale:
        W1u_f = W1s[:, :E] @ Wu            (E, user_dim)
        W1i_f = W1s[:, E:] @ Wi            (E, item_dim)
        b1_f  = W1s[:, :E] @ bu + W1s[:, E:] @ bi + W1 @ shift + b1
    Weights stay f32 (tiny, DMA'd once); only the streamed input may be bf16.
    """
    E = params["wu"].shape[0]
    scale = params["bn_gamma"] / jnp.sqrt(params["bn_var"] + BN_EPS)   # (2E,)
    shift = params["bn_beta"] - params["bn_mean"] * scale              # (2E,)
    W1 = params["w1"]                                                  # (E, 2E)
    W1s = W1 * scale[None, :]

    w1u = W1s[:, :E] @ params["wu"]
    w1i = W1s[:, E:] @ params["wi"]
    b1 = (W1s[:, :E] @ params["bu"] + W1s[:, E:] @ params["bi"]
          + W1 @ shift + params["b1"])

    kp = {
        "w1u": w1u.astype(jnp.float32),
        "w1i": w1i.astype(jnp.float32),
        "b1": b1[:, None].astype(jnp.float32),
        "w2": params["w2"].astype(jnp.float32),
        "b2": params["b2"][:, None].astype(jnp.float32),
        "w3": params["w3"].astype(jnp.float32),
        "b3": params["b3"][:, None].astype(jnp.float32),
        # VPU tail layers stored (in, out) so a column slice broadcasts against
        # the (in, TILE_B) activation.
        "w4t": params["w4"].T.astype(jnp.float32),
        "b4": params["b4"][:, None].astype(jnp.float32),
        "w5t": params["w5"].reshape(-1, 1).astype(jnp.float32),        # (d4, 1)
        "b5": params["b5"].reshape(1, 1).astype(jnp.float32),
    }
    return kp


def reference_forward(user, item, label, params):
    """Pure-JAX reference (natural layout, PyTorch conventions)."""
    ue = user @ params["wu"].T + params["bu"]
    ie = item @ params["wi"].T + params["bi"]
    x = jnp.concatenate([ue, ie], axis=1)
    x = (x - params["bn_mean"]) / jnp.sqrt(params["bn_var"] + BN_EPS)
    x = x * params["bn_gamma"] + params["bn_beta"]
    h = x
    for idx in range(1, 5):
        h = jnp.maximum(h @ params[f"w{idx}"].T + params[f"b{idx}"], 0.0)
    logits = h @ params["w5"].T + params["b5"]
    loss = jnp.mean((logits - label) ** 2)
    return logits, loss


# ----------------------------------------------------------------------------
# Demo / self-check
# ----------------------------------------------------------------------------
if __name__ == "__main__":
    B = 300                  # not a tile multiple -> exercises the ragged last tile
    user_dim, item_dim = 32, 24
    embedding_dim = 40       # MLP widths: 80 -> 40 -> 20 -> 10 -> 4 -> 1

    key = jax.random.PRNGKey(0)
    k_user, k_item, k_label, k_params = jax.random.split(key, 4)

    user = jax.random.normal(k_user, (B, user_dim), jnp.float32)
    item = jax.random.normal(k_item, (B, item_dim), jnp.float32)
    label = 5.0 * jax.random.uniform(k_label, (B, 1), jnp.float32)

    params = make_params(k_params, user_dim, item_dim, embedding_dim)
    ref_logits, ref_loss = reference_forward(user, item, label, params)
    kp = prepare_kernel_params(params)

    # f32 input streaming: exact-parity path (preferred when bandwidth-rich).
    fwd32 = jax.jit(functools.partial(ncf_forward, input_dtype=jnp.float32))
    logits, loss = fwd32(user, item, label, kp)
    jax.block_until_ready((logits, loss))
    assert logits.shape == (B, 1)
    assert jnp.allclose(logits, ref_logits, atol=2e-3, rtol=2e-3), "f32 logits mismatch"
    assert jnp.allclose(loss, ref_loss, atol=2e-3, rtol=2e-3), "f32 loss mismatch"

    # bf16 *input streaming* (halves per-step HBM batch traffic on all gens);
    # weights and all in-kernel arithmetic remain f32.
    fwd16 = jax.jit(functools.partial(ncf_forward, input_dtype=jnp.bfloat16))
    logits16, loss16 = fwd16(user, item, label, kp)
    jax.block_until_ready((logits16, loss16))
    assert logits16.shape == (B, 1)
    assert jnp.allclose(logits16, ref_logits, atol=0.1, rtol=0.1), "bf16 logits mismatch"
    assert jnp.allclose(loss16, ref_loss, atol=0.3, rtol=0.1), "bf16 loss mismatch"

    print("KERNEL_OK")
</pallas_src>

<mosaic_0001>
module attributes {stable_mosaic.version = 11 : i64} {
  func.func @_ncf_kernel(%arg0: i32, %arg1: memref<32x256xf32, #tpu.memory_space<vmem>>, %arg2: memref<24x256xf32, #tpu.memory_space<vmem>>, %arg3: memref<40x32xf32, #tpu.memory_space<vmem>>, %arg4: memref<40x24xf32, #tpu.memory_space<vmem>>, %arg5: memref<40x1xf32, #tpu.memory_space<vmem>>, %arg6: memref<20x40xf32, #tpu.memory_space<vmem>>, %arg7: memref<20x1xf32, #tpu.memory_space<vmem>>, %arg8: memref<10x20xf32, #tpu.memory_space<vmem>>, %arg9: memref<10x1xf32, #tpu.memory_space<vmem>>, %arg10: memref<10x4xf32, #tpu.memory_space<vmem>>, %arg11: memref<4x1xf32, #tpu.memory_space<vmem>>, %arg12: memref<4x1xf32, #tpu.memory_space<vmem>>, %arg13: memref<1x1xf32, #tpu.memory_space<vmem>>, %arg14: memref<1x256xf32, #tpu.memory_space<vmem>>) attributes {dimension_semantics = [#tpu.dimension_semantics<parallel>], iteration_bounds = array<i64: 2>, scalar_prefetch = 0 : i64, scratch_operands = 0 : i64, tpu.core_type = #tpu.core_type<tc>, window_params = [{transform_indices = @transform_0, window_bounds = array<i64: 32, 256>}, {transform_indices = @transform_1, window_bounds = array<i64: 24, 256>}, {pipeline_mode = #tpu.pipeline_mode<synchronous>, transform_indices = @transform_2, window_bounds = array<i64: 40, 32>}, {pipeline_mode = #tpu.pipeline_mode<synchronous>, transform_indices = @transform_3, window_bounds = array<i64: 40, 24>}, {pipeline_mode = #tpu.pipeline_mode<synchronous>, transform_indices = @transform_4, window_bounds = array<i64: 40, 1>}, {pipeline_mode = #tpu.pipeline_mode<synchronous>, transform_indices = @transform_5, window_bounds = array<i64: 20, 40>}, {pipeline_mode = #tpu.pipeline_mode<synchronous>, transform_indices = @transform_6, window_bounds = array<i64: 20, 1>}, {pipeline_mode = #tpu.pipeline_mode<synchronous>, transform_indices = @transform_7, window_bounds = array<i64: 10, 20>}, {pipeline_mode = #tpu.pipeline_mode<synchronous>, transform_indices = @transform_8, window_bounds = array<i64: 10, 1>}, {pipeline_mode = #tpu.pipeline_mode<synchronous>, transform_indices = @transform_9, window_bounds = array<i64: 10, 4>}, {pipeline_mode = #tpu.pipeline_mode<synchronous>, transform_indices = @transform_10, window_bounds = array<i64: 4, 1>}, {pipeline_mode = #tpu.pipeline_mode<synchronous>, transform_indices = @transform_11, window_bounds = array<i64: 4, 1>}, {pipeline_mode = #tpu.pipeline_mode<synchronous>, transform_indices = @transform_12, window_bounds = array<i64: 1, 1>}, {transform_indices = @transform_13, window_bounds = array<i64: 1, 256>}]} {
    %c0 = arith.constant 0 : index
    %c0_0 = arith.constant 0 : index
    %0 = vector.load %arg1[%c0, %c0_0] : memref<32x256xf32, #tpu.memory_space<vmem>>, vector<32x256xf32>
    %c0_1 = arith.constant 0 : index
    %c0_2 = arith.constant 0 : index
    %1 = vector.load %arg2[%c0_1, %c0_2] : memref<24x256xf32, #tpu.memory_space<vmem>>, vector<24x256xf32>
    %c0_3 = arith.constant 0 : index
    %c0_4 = arith.constant 0 : index
    %2 = vector.load %arg3[%c0_3, %c0_4] : memref<40x32xf32, #tpu.memory_space<vmem>>, vector<40x32xf32>
    %cst = arith.constant dense<0.000000e+00> : vector<40x256xf32>
    %3 = tpu.matmul %2, %0, %cst {dimension_numbers = #tpu.dot_dimension_numbers<[1], [0], [0], [1], [0, 0, 1, 1], [], []>} : vector<40x32xf32>, vector<32x256xf32>, vector<40x256xf32> -> vector<40x256xf32>
    %c0_5 = arith.constant 0 : index
    %c0_6 = arith.constant 0 : index
    %4 = vector.load %arg4[%c0_5, %c0_6] : memref<40x24xf32, #tpu.memory_space<vmem>>, vector<40x24xf32>
    %cst_7 = arith.constant dense<0.000000e+00> : vector<40x256xf32>
    %5 = tpu.matmul %4, %1, %cst_7 {dimension_numbers = #tpu.dot_dimension_numbers<[1], [0], [0], [1], [0, 0, 1, 1], [], []>} : vector<40x24xf32>, vector<24x256xf32>, vector<40x256xf32> -> vector<40x256xf32>
    %6 = arith.addf %3, %5 : vector<40x256xf32>
    %c0_8 = arith.constant 0 : index
    %c0_9 = arith.constant 0 : index
    %7 = vector.load %arg5[%c0_8, %c0_9] : memref<40x1xf32, #tpu.memory_space<vmem>>, vector<40x1xf32>
    %8 = vector.broadcast %7 : vector<40x1xf32> to vector<40x256xf32>
    %9 = arith.addf %6, %8 : vector<40x256xf32>
    %cst_10 = arith.constant 0.000000e+00 : f32
    %10 = vector.broadcast %cst_10 : f32 to vector<40x256xf32>
    %11 = arith.maximumf %9, %10 : vector<40x256xf32>
    %c0_11 = arith.constant 0 : index
    %c0_12 = arith.constant 0 : index
    %12 = vector.load %arg6[%c0_11, %c0_12] : memref<20x40xf32, #tpu.memory_space<vmem>>, vector<20x40xf32>
    %cst_13 = arith.constant dense<0.000000e+00> : vector<20x256xf32>
    %13 = tpu.matmul %12, %11, %cst_13 {dimension_numbers = #tpu.dot_dimension_numbers<[1], [0], [0], [1], [0, 0, 1, 1], [], []>} : vector<20x40xf32>, vector<40x256xf32>, vector<20x256xf32> -> vector<20x256xf32>
    %c0_14 = arith.constant 0 : index
    %c0_15 = arith.constant 0 : index
    %14 = vector.load %arg7[%c0_14, %c0_15] : memref<20x1xf32, #tpu.memory_space<vmem>>, vector<20x1xf32>
    %15 = vector.broadcast %14 : vector<20x1xf32> to vector<20x256xf32>
    %16 = arith.addf %13, %15 : vector<20x256xf32>
    %cst_16 = arith.constant 0.000000e+00 : f32
    %17 = vector.broadcast %cst_16 : f32 to vector<20x256xf32>
    %18 = arith.maximumf %16, %17 : vector<20x256xf32>
    %c0_17 = arith.constant 0 : index
    %c0_18 = arith.constant 0 : index
    %19 = vector.load %arg8[%c0_17, %c0_18] : memref<10x20xf32, #tpu.memory_space<vmem>>, vector<10x20xf32>
    %cst_19 = arith.constant dense<0.000000e+00> : vector<10x256xf32>
    %20 = tpu.matmul %19, %18, %cst_19 {dimension_numbers = #tpu.dot_dimension_numbers<[1], [0], [0], [1], [0, 0, 1, 1], [], []>} : vector<10x20xf32>, vector<20x256xf32>, vector<10x256xf32> -> vector<10x256xf32>
    %c0_20 = arith.constant 0 : index
    %c0_21 = arith.constant 0 : index
    %21 = vector.load %arg9[%c0_20, %c0_21] : memref<10x1xf32, #tpu.memory_space<vmem>>, vector<10x1xf32>
    %22 = vector.broadcast %21 : vector<10x1xf32> to vector<10x256xf32>
    %23 = arith.addf %20, %22 : vector<10x256xf32>
    %cst_22 = arith.constant 0.000000e+00 : f32
    %24 = vector.broadcast %cst_22 : f32 to vector<10x256xf32>
    %25 = arith.maximumf %23, %24 : vector<10x256xf32>
    %c0_23 = arith.constant 0 : index
    %c0_24 = arith.constant 0 : index
    %26 = vector.load %arg10[%c0_23, %c0_24] : memref<10x4xf32, #tpu.memory_space<vmem>>, vector<10x4xf32>
    %c0_25 = arith.constant 0 : index
    %c0_26 = arith.constant 0 : index
    %27 = vector.load %arg11[%c0_25, %c0_26] : memref<4x1xf32, #tpu.memory_space<vmem>>, vector<4x1xf32>
    %28 = vector.extract_strided_slice %26 {offsets = [0, 0], sizes = [10, 1], strides = [1, 1]} : vector<10x4xf32> to vector<10x1xf32>
    %29 = vector.broadcast %28 : vector<10x1xf32> to vector<10x256xf32>
    %30 = arith.mulf %29, %25 : vector<10x256xf32>
    %cst_27 = arith.constant dense<0.000000e+00> : vector<256xf32>
    %31 = vector.multi_reduction <add>, %30, %cst_27 [0] : vector<10x256xf32> to vector<256xf32>
    %32 = vector.shape_cast %31 : vector<256xf32> to vector<1x256xf32>
    %33 = vector.extract_strided_slice %27 {offsets = [0, 0], sizes = [1, 1], strides = [1, 1]} : vector<4x1xf32> to vector<1x1xf32>
    %34 = vector.broadcast %33 : vector<1x1xf32> to vector<1x256xf32>
    %35 = arith.addf %32, %34 : vector<1x256xf32>
    %cst_28 = arith.constant 0.000000e+00 : f32
    %36 = vector.broadcast %cst_28 : f32 to vector<1x256xf32>
    %37 = arith.maximumf %35, %36 : vector<1x256xf32>
    %38 = vector.extract_strided_slice %26 {offsets = [0, 1], sizes = [10, 1], strides = [1, 1]} : vector<10x4xf32> to vector<10x1xf32>
    %39 = vector.broadcast %38 : vector<10x1xf32> to vector<10x256xf32>
    %40 = arith.mulf %39, %25 : vector<10x256xf32>
    %cst_29 = arith.constant dense<0.000000e+00> : vector<256xf32>
    %41 = vector.multi_reduction <add>, %40, %cst_29 [0] : vector<10x256xf32> to vector<256xf32>
    %42 = vector.shape_cast %41 : vector<256xf32> to vector<1x256xf32>
    %43 = vector.extract_strided_slice %27 {offsets = [1, 0], sizes = [1, 1], strides = [1, 1]} : vector<4x1xf32> to vector<1x1xf32>
    %44 = vector.broadcast %43 : vector<1x1xf32> to vector<1x256xf32>
    %45 = arith.addf %42, %44 : vector<1x256xf32>
    %cst_30 = arith.constant 0.000000e+00 : f32
    %46 = vector.broadcast %cst_30 : f32 to vector<1x256xf32>
    %47 = arith.maximumf %45, %46 : vector<1x256xf32>
    %48 = vector.extract_strided_slice %26 {offsets = [0, 2], sizes = [10, 1], strides = [1, 1]} : vector<10x4xf32> to vector<10x1xf32>
    %49 = vector.broadcast %48 : vector<10x1xf32> to vector<10x256xf32>
    %50 = arith.mulf %49, %25 : vector<10x256xf32>
    %cst_31 = arith.constant dense<0.000000e+00> : vector<256xf32>
    %51 = vector.multi_reduction <add>, %50, %cst_31 [0] : vector<10x256xf32> to vector<256xf32>
    %52 = vector.shape_cast %51 : vector<256xf32> to vector<1x256xf32>
    %53 = vector.extract_strided_slice %27 {offsets = [2, 0], sizes = [1, 1], strides = [1, 1]} : vector<4x1xf32> to vector<1x1xf32>
    %54 = vector.broadcast %53 : vector<1x1xf32> to vector<1x256xf32>
    %55 = arith.addf %52, %54 : vector<1x256xf32>
    %cst_32 = arith.constant 0.000000e+00 : f32
    %56 = vector.broadcast %cst_32 : f32 to vector<1x256xf32>
    %57 = arith.maximumf %55, %56 : vector<1x256xf32>
    %58 = vector.extract_strided_slice %26 {offsets = [0, 3], sizes = [10, 1], strides = [1, 1]} : vector<10x4xf32> to vector<10x1xf32>
    %59 = vector.broadcast %58 : vector<10x1xf32> to vector<10x256xf32>
    %60 = arith.mulf %59, %25 : vector<10x256xf32>
    %cst_33 = arith.constant dense<0.000000e+00> : vector<256xf32>
    %61 = vector.multi_reduction <add>, %60, %cst_33 [0] : vector<10x256xf32> to vector<256xf32>
    %62 = vector.shape_cast %61 : vector<256xf32> to vector<1x256xf32>
    %63 = vector.extract_strided_slice %27 {offsets = [3, 0], sizes = [1, 1], strides = [1, 1]} : vector<4x1xf32> to vector<1x1xf32>
    %64 = vector.broadcast %63 : vector<1x1xf32> to vector<1x256xf32>
    %65 = arith.addf %62, %64 : vector<1x256xf32>
    %cst_34 = arith.constant 0.000000e+00 : f32
    %66 = vector.broadcast %cst_34 : f32 to vector<1x256xf32>
    %67 = arith.maximumf %65, %66 : vector<1x256xf32>
    %c0_35 = arith.constant 0 : index
    %c0_36 = arith.constant 0 : index
    %68 = vector.load %arg12[%c0_35, %c0_36] : memref<4x1xf32, #tpu.memory_space<vmem>>, vector<4x1xf32>
    %c0_37 = arith.constant 0 : index
    %c0_38 = arith.constant 0 : index
    %69 = vector.load %arg13[%c0_37, %c0_38] : memref<1x1xf32, #tpu.memory_space<vmem>>, vector<1x1xf32>
    %70 = vector.extract_strided_slice %68 {offsets = [0, 0], sizes = [1, 1], strides = [1, 1]} : vector<4x1xf32> to vector<1x1xf32>
    %71 = vector.broadcast %70 : vector<1x1xf32> to vector<1x256xf32>
    %72 = arith.mulf %71, %37 : vector<1x256xf32>
    %73 = vector.broadcast %69 : vector<1x1xf32> to vector<1x256xf32>
    %74 = arith.addf %73, %72 : vector<1x256xf32>
    %75 = vector.extract_strided_slice %68 {offsets = [1, 0], sizes = [1, 1], strides = [1, 1]} : vector<4x1xf32> to vector<1x1xf32>
    %76 = vector.broadcast %75 : vector<1x1xf32> to vector<1x256xf32>
    %77 = arith.mulf %76, %47 : vector<1x256xf32>
    %78 = arith.addf %74, %77 : vector<1x256xf32>
    %79 = vector.extract_strided_slice %68 {offsets = [2, 0], sizes = [1, 1], strides = [1, 1]} : vector<4x1xf32> to vector<1x1xf32>
    %80 = vector.broadcast %79 : vector<1x1xf32> to vector<1x256xf32>
    %81 = arith.mulf %80, %57 : vector<1x256xf32>
    %82 = arith.addf %78, %81 : vector<1x256xf32>
    %83 = vector.extract_strided_slice %68 {offsets = [3, 0], sizes = [1, 1], strides = [1, 1]} : vector<4x1xf32> to vector<1x1xf32>
    %84 = vector.broadcast %83 : vector<1x1xf32> to vector<1x256xf32>
    %85 = arith.mulf %84, %67 : vector<1x256xf32>
    %86 = arith.addf %82, %85 : vector<1x256xf32>
    %c0_39 = arith.constant 0 : index
    %c0_40 = arith.constant 0 : index
    %87 = vector.load %arg14[%c0_39, %c0_40] : memref<1x256xf32, #tpu.memory_space<vmem>>, vector<1x256xf32>
    tpu.vector_store %arg14[%c0_39, %c0_40], %86 {strides = array<i32>} : memref<1x256xf32, #tpu.memory_space<vmem>>, vector<1x256xf32>,
    return
  }
  func.func @transform_0(%arg0: i32) -> (i32, i32) {
    %c0_i32 = arith.constant 0 : i32
    %c0_i32_0 = arith.constant 0 : i32
    return %c0_i32, %arg0 : i32, i32
  }
  func.func @transform_1(%arg0: i32) -> (i32, i32) {
    %c0_i32 = arith.constant 0 : i32
    %c0_i32_0 = arith.constant 0 : i32
    return %c0_i32, %arg0 : i32, i32
  }
  func.func @transform_2(%arg0: i32) -> (i32, i32) {
    %c0_i32 = arith.constant 0 : i32
    %c0_i32_0 = arith.constant 0 : i32
    %c0_i32_1 = arith.constant 0 : i32
    return %c0_i32, %c0_i32_0 : i32, i32
  }
  func.func @transform_3(%arg0: i32) -> (i32, i32) {
    %c0_i32 = arith.constant 0 : i32
    %c0_i32_0 = arith.constant 0 : i32
    %c0_i32_1 = arith.constant 0 : i32
    return %c0_i32, %c0_i32_0 : i32, i32
  }
  func.func @transform_4(%arg0: i32) -> (i32, i32) {
    %c0_i32 = arith.constant 0 : i32
    %c0_i32_0 = arith.constant 0 : i32
    %c0_i32_1 = arith.constant 0 : i32
    return %c0_i32, %c0_i32_0 : i32, i32
  }
  func.func @transform_5(%arg0: i32) -> (i32, i32) {
    %c0_i32 = arith.constant 0 : i32
    %c0_i32_0 = arith.constant 0 : i32
    %c0_i32_1 = arith.constant 0 : i32
    return %c0_i32, %c0_i32_0 : i32, i32
  }
  func.func @transform_6(%arg0: i32) -> (i32, i32) {
    %c0_i32 = arith.constant 0 : i32
    %c0_i32_0 = arith.constant 0 : i32
    %c0_i32_1 = arith.constant 0 : i32
    return %c0_i32, %c0_i32_0 : i32, i32
  }
  func.func @transform_7(%arg0: i32) -> (i32, i32) {
    %c0_i32 = arith.constant 0 : i32
    %c0_i32_0 = arith.constant 0 : i32
    %c0_i32_1 = arith.constant 0 : i32
    return %c0_i32, %c0_i32_0 : i32, i32
  }
  func.func @transform_8(%arg0: i32) -> (i32, i32) {
    %c0_i32 = arith.constant 0 : i32
    %c0_i32_0 = arith.constant 0 : i32
    %c0_i32_1 = arith.constant 0 : i32
    return %c0_i32, %c0_i32_0 : i32, i32
  }
  func.func @transform_9(%arg0: i32) -> (i32, i32) {
    %c0_i32 = arith.constant 0 : i32
    %c0_i32_0 = arith.constant 0 : i32
    %c0_i32_1 = arith.constant 0 : i32
    return %c0_i32, %c0_i32_0 : i32, i32
  }
  func.func @transform_10(%arg0: i32) -> (i32, i32) {
    %c0_i32 = arith.constant 0 : i32
    %c0_i32_0 = arith.constant 0 : i32
    %c0_i32_1 = arith.constant 0 : i32
    return %c0_i32, %c0_i32_0 : i32, i32
  }
  func.func @transform_11(%arg0: i32) -> (i32, i32) {
    %c0_i32 = arith.constant 0 : i32
    %c0_i32_0 = arith.constant 0 : i32
    %c0_i32_1 = arith.constant 0 : i32
    return %c0_i32, %c0_i32_0 : i32, i32
  }
  func.func @transform_12(%arg0: i32) -> (i32, i32) {
    %c0_i32 = arith.constant 0 : i32
    %c0_i32_0 = arith.constant 0 : i32
    %c0_i32_1 = arith.constant 0 : i32
    return %c0_i32, %c0_i32_0 : i32, i32
  }
  func.func @transform_13(%arg0: i32) -> (i32, i32) {
    %c0_i32 = arith.constant 0 : i32
    %c0_i32_0 = arith.constant 0 : i32
    return %c0_i32, %arg0 : i32, i32
  }
}

</mosaic_0001>

<llo_original>
// kernel: ncf_forward.1
$region0: #{ncf_forward.1}
  #allocation0 [shape = 'u32[]', space=smem, size = 0x4, offset = 0x4, fixed_abs, tag = 'smem constant byte address 0x4 - core index']
  #allocation1 [shape = 'u32[144,128]{1,0:T(1,128)}', space=vmem, size = 0x12000, scoped, tag = 'internal scratch']
  #allocation2 [shape = 'f32[1,1]{1,0:T(1,128)S(1)}', space=vmem, size = 0x200, scoped, tag = 'scoped memory for ncf_forward.1']
  %s0 = inlined_call_operand.vmem [shape: f32[32,300], index: 0, kind: input, shape index: {}]
  %s1 = inlined_call_operand.vmem [shape: f32[24,300], index: 1, kind: input, shape index: {}]
  %s2 = inlined_call_operand.vmem [shape: f32[40,32], index: 2, kind: input, shape index: {}]
  %s3 = inlined_call_operand.vmem [shape: f32[40,24], index: 3, kind: input, shape index: {}]
  %s4 = inlined_call_operand.vmem [shape: f32[40,1], index: 4, kind: input, shape index: {}]
  %s5 = inlined_call_operand.vmem [shape: f32[20,40], index: 5, kind: input, shape index: {}]
  %s6 = inlined_call_operand.vmem [shape: f32[20,1], index: 6, kind: input, shape index: {}]
  %s7 = inlined_call_operand.vmem [shape: f32[10,20], index: 7, kind: input, shape index: {}]
  %s8 = inlined_call_operand.vmem [shape: f32[10,1], index: 8, kind: input, shape index: {}]
  %s9 = inlined_call_operand.vmem [shape: f32[10,4], index: 9, kind: input, shape index: {}]
  %s10 = inlined_call_operand.vmem [shape: f32[4,1], index: 10, kind: input, shape index: {}]
  %s11 = inlined_call_operand.vmem [shape: f32[4,1], index: 11, kind: input, shape index: {}]
  %s12 = inlined_call_operand.<no memory space> [shape: f32[1,1], index: 12, kind: input, shape index: {}]
  %s13 = inlined_call_operand.vmem [shape: f32[1,300], index: 13, kind: output, shape index: {}]
  %s14 = sld [smem:[#allocation0]]
  $region279: #{ncf_forward.1} parent=0
    _
  %s16 = ssub.s32 1, %s14
  %s17 = scalar_select 0, %s16, %s14
  %v18 = vstv %s12
  %19 = vst [vmem:[#allocation2] sm:$0x1] %v18
  $region1: #{ncf_forward.1} parent=0
    #allocation3 [shape = 'u8[65536]{0}', space=vmem, size = 0x10000, scoped, tag = 'input window, operand 0']
    #allocation4 [shape = 'u8[49152]{0}', space=vmem, size = 0xc000, scoped, tag = 'input window, operand 1']
    #allocation5 [shape = 'u8[2048]{0}', space=vmem, size = 0x800, scoped, tag = 'output window, operand 0']
    loop: start=0, step=1, limit=4
    $region2: #{ncf_forward.1} parent=1 // loop_pre_header
      _
    $region3: #{ncf_forward.1} parent=1 // loop_header
      %s21 = sphi 0, %s25
      %p22 = scmp.ge.s32.totalorder %s21, 4
      %s31 = sphi 0, %s33
      %s34 = sphi 0, %s31
      %s35 = sphi 0, %s34
      %s51 = sphi 0, %s35
      %s57 = sphi 0, %s59
      %s60 = sphi 0, %s57
      %s61 = sphi 0, %s60
      %s77 = sphi 0, %s61
      %s81 = sphi 0, %s81
      %s83 = sphi 0, %s81
      %s84 = sphi 0, %s83
      %s98 = sphi 0, %s84
      %s102 = sphi 0, %s102
      %s104 = sphi 0, %s102
      %s105 = sphi 0, %s104
      %s119 = sphi 0, %s105
      %s123 = sphi 0, %s123
      %s125 = sphi 0, %s123
      %s126 = sphi 0, %s125
      %s140 = sphi 0, %s126
      %s144 = sphi 0, %s144
      %s146 = sphi 0, %s144
      %s147 = sphi 0, %s146
      %s161 = sphi 0, %s147
      %s165 = sphi 0, %s165
      %s167 = sphi 0, %s165
      %s168 = sphi 0, %s167
      %s182 = sphi 0, %s168
      %s186 = sphi 0, %s186
      %s188 = sphi 0, %s186
      %s189 = sphi 0, %s188
      %s203 = sphi 0, %s189
      %s207 = sphi 0, %s207
      %s209 = sphi 0, %s207
      %s210 = sphi 0, %s209
      %s224 = sphi 0, %s210
      %s228 = sphi 0, %s228
      %s230 = sphi 0, %s228
      %s231 = sphi 0, %s230
      %s245 = sphi 0, %s231
      %s249 = sphi 0, %s249
      %s251 = sphi 0, %s249
      %s252 = sphi 0, %s251
      %s266 = sphi 0, %s252
      %s270 = sphi 0, %s270
      %s272 = sphi 0, %s270
      %s273 = sphi 0, %s272
      %s287 = sphi 0, %s273
      %s291 = sphi 0, %s291
      %s293 = sphi 0, %s291
      %s294 = sphi 0, %s293
      %s308 = sphi 0, %s294
      %s314 = sphi 0, %s316
      %s317 = sphi 0, %s314
      %s318 = sphi 0, %s317
      %s334 = sphi 0, %s318
    $region4: #{ncf_forward.1} parent=1 // loop_header_branch
      %24 = sbr.rel (%p22) target = $region8
    $region5: #{ncf_forward.1} parent=1 // loop_body
      %s26 = ssub.s32 %s21, 1
      %s27 = ssub.s32 %s21, 2
      %s28 = sadd.s32 %s21, 1
      %s29 = ssub.s32 %s21, %s28
      %p30 = scmp.eq.s32.totalorder %s29, 0
      %s32 = sadd.s32 %s31, 1
      %s33 = scalar_select %p30, %s31, %s32
      %p36 = pneg %p30
      %p37 = scmp.eq.s32.totalorder %s21, 1
      %p38 = por %p36, %p37
      %p39 = scmp.ne.s32.totalorder %s31, %s34
      %p40 = scmp.eq.s32.totalorder %s21, 0
      %p41 = por %p39, %p40
      %p42 = scmp.ne.s32.totalorder %s31, %s34
      %p43 = scmp.eq.s32.totalorder %s26, 1
      %p44 = por %p42, %p43
      %p45 = scmp.ne.s32.totalorder %s34, %s35
      %p46 = scmp.eq.s32.totalorder %s26, 0
      %p47 = por %p45, %p46
      %p48 = scmp.ne.s32.totalorder %s34, %s35
      %p49 = scmp.eq.s32.totalorder %s27, 1
      %p50 = por %p48, %p49
      %p52 = scmp.ne.s32.totalorder %s35, %s51
      %p53 = scmp.eq.s32.totalorder %s27, 0
      %p54 = por %p52, %p53
      %s55 = ssub.s32 %s21, %s28
      %p56 = scmp.eq.s32.totalorder %s55, 0
      %s58 = sadd.s32 %s57, 1
      %s59 = scalar_select %p56, %s57, %s58
      %p62 = pneg %p56
      %p63 = scmp.eq.s32.totalorder %s21, 1
      %p64 = por %p62, %p63
      %p65 = scmp.ne.s32.totalorder %s57, %s60
      %p66 = scmp.eq.s32.totalorder %s21, 0
      %p67 = por %p65, %p66
      %p68 = scmp.ne.s32.totalorder %s57, %s60
      %p69 = scmp.eq.s32.totalorder %s26, 1
      %p70 = por %p68, %p69
      %p71 = scmp.ne.s32.totalorder %s60, %s61
      %p72 = scmp.eq.s32.totalorder %s26, 0
      %p73 = por %p71, %p72
      %p74 = scmp.ne.s32.totalorder %s60, %s61
      %p75 = scmp.eq.s32.totalorder %s27, 1
      %p76 = por %p74, %p75
      %p78 = scmp.ne.s32.totalorder %s61, %s77
      %p79 = scmp.eq.s32.totalorder %s27, 0
      %p80 = por %p78, %p79
      %s82 = sadd.s32 %s81, 1
      %p85 = scmp.eq.s32.totalorder %s21, 1
      %p86 = scmp.ne.s32.totalorder %s81, %s83
      %p87 = scmp.eq.s32.totalorder %s21, 0
      %p88 = por %p86, %p87
      %p89 = scmp.ne.s32.totalorder %s81, %s83
      %p90 = scmp.eq.s32.totalorder %s26, 1
      %p91 = por %p89, %p90
      %p92 = scmp.ne.s32.totalorder %s83, %s84
      %p93 = scmp.eq.s32.totalorder %s26, 0
      %p94 = por %p92, %p93
      %p95 = scmp.ne.s32.totalorder %s83, %s84
      %p96 = scmp.eq.s32.totalorder %s27, 1
      %p97 = por %p95, %p96
      %p99 = scmp.ne.s32.totalorder %s84, %s98
      %p100 = scmp.eq.s32.totalorder %s27, 0
      %p101 = por %p99, %p100
      %s103 = sadd.s32 %s102, 1
      %p106 = scmp.eq.s32.totalorder %s21, 1
      %p107 = scmp.ne.s32.totalorder %s102, %s104
      %p108 = scmp.eq.s32.totalorder %s21, 0
      %p109 = por %p107, %p108
      %p110 = scmp.ne.s32.totalorder %s102, %s104
      %p111 = scmp.eq.s32.totalorder %s26, 1
      %p112 = por %p110, %p111
      %p113 = scmp.ne.s32.totalorder %s104, %s105
      %p114 = scmp.eq.s32.totalorder %s26, 0
      %p115 = por %p113, %p114
      %p116 = scmp.ne.s32.totalorder %s104, %s105
      %p117 = scmp.eq.s32.totalorder %s27, 1
      %p118 = por %p116, %p117
      %p120 = scmp.ne.s32.totalorder %s105, %s119
      %p121 = scmp.eq.s32.totalorder %s27, 0
      %p122 = por %p120, %p121
      %s124 = sadd.s32 %s123, 1
      %p127 = scmp.eq.s32.totalorder %s21, 1
      %p128 = scmp.ne.s32.totalorder %s123, %s125
      %p129 = scmp.eq.s32.totalorder %s21, 0
      %p130 = por %p128, %p129
      %p131 = scmp.ne.s32.totalorder %s123, %s125
      %p132 = scmp.eq.s32.totalorder %s26, 1
      %p133 = por %p131, %p132
      %p134 = scmp.ne.s32.totalorder %s125, %s126
      %p135 = scmp.eq.s32.totalorder %s26, 0
      %p136 = por %p134, %p135
      %p137 = scmp.ne.s32.totalorder %s125, %s126
      %p138 = scmp.eq.s32.totalorder %s27, 1
      %p139 = por %p137, %p138
      %p141 = scmp.ne.s32.totalorder %s126, %s140
      %p142 = scmp.eq.s32.totalorder %s27, 0
      %p143 = por %p141, %p142
      %s145 = sadd.s32 %s144, 1
      %p148 = scmp.eq.s32.totalorder %s21, 1
      %p149 = scmp.ne.s32.totalorder %s144, %s146
      %p150 = scmp.eq.s32.totalorder %s21, 0
      %p151 = por %p149, %p150
      %p152 = scmp.ne.s32.totalorder %s144, %s146
      %p153 = scmp.eq.s32.totalorder %s26, 1
      %p154 = por %p152, %p153
      %p155 = scmp.ne.s32.totalorder %s146, %s147
      %p156 = scmp.eq.s32.totalorder %s26, 0
      %p157 = por %p155, %p156
      %p158 = scmp.ne.s32.totalorder %s146, %s147
      %p159 = scmp.eq.s32.totalorder %s27, 1
      %p160 = por %p158, %p159
      %p162 = scmp.ne.s32.totalorder %s147, %s161
      %p163 = scmp.eq.s32.totalorder %s27, 0
      %p164 = por %p162, %p163
      %s166 = sadd.s32 %s165, 1
      %p169 = scmp.eq.s32.totalorder %s21, 1
      %p170 = scmp.ne.s32.totalorder %s165, %s167
      %p171 = scmp.eq.s32.totalorder %s21, 0
      %p172 = por %p170, %p171
      %p173 = scmp.ne.s32.totalorder %s165, %s167
      %p174 = scmp.eq.s32.totalorder %s26, 1
      %p175 = por %p173, %p174
      %p176 = scmp.ne.s32.totalorder %s167, %s168
      %p177 = scmp.eq.s32.totalorder %s26, 0
      %p178 = por %p176, %p177
      %p179 = scmp.ne.s32.totalorder %s167, %s168
      %p180 = scmp.eq.s32.totalorder %s27, 1
      %p181 = por %p179, %p180
      %p183 = scmp.ne.s32.totalorder %s168, %s182
      %p184 = scmp.eq.s32.totalorder %s27, 0
      %p185 = por %p183, %p184
      %s187 = sadd.s32 %s186, 1
      %p190 = scmp.eq.s32.totalorder %s21, 1
      %p191 = scmp.ne.s32.totalorder %s186, %s188
      %p192 = scmp.eq.s32.totalorder %s21, 0
      %p193 = por %p191, %p192
      %p194 = scmp.ne.s32.totalorder %s186, %s188
      %p195 = scmp.eq.s32.totalorder %s26, 1
      %p196 = por %p194, %p195
      %p197 = scmp.ne.s32.totalorder %s188, %s189
      %p198 = scmp.eq.s32.totalorder %s26, 0
      %p199 = por %p197, %p198
      %p200 = scmp.ne.s32.totalorder %s188, %s189
      %p201 = scmp.eq.s32.totalorder %s27, 1
      %p202 = por %p200, %p201
      %p204 = scmp.ne.s32.totalorder %s189, %s203
      %p205 = scmp.eq.s32.totalorder %s27, 0
      %p206 = por %p204, %p205
      %s208 = sadd.s32 %s207, 1
      %p211 = scmp.eq.s32.totalorder %s21, 1
      %p212 = scmp.ne.s32.totalorder %s207, %s209
      %p213 = scmp.eq.s32.totalorder %s21, 0
      %p214 = por %p212, %p213
      %p215 = scmp.ne.s32.totalorder %s207, %s209
      %p216 = scmp.eq.s32.totalorder %s26, 1
      %p217 = por %p215, %p216
      %p218 = scmp.ne.s32.totalorder %s209, %s210
      %p219 = scmp.eq.s32.totalorder %s26, 0
      %p220 = por %p218, %p219
      %p221 = scmp.ne.s32.totalorder %s209, %s210
      %p222 = scmp.eq.s32.totalorder %s27, 1
      %p223 = por %p221, %p222
      %p225 = scmp.ne.s32.totalorder %s210, %s224
      %p226 = scmp.eq.s32.totalorder %s27, 0
      %p227 = por %p225, %p226
      %s229 = sadd.s32 %s228, 1
      %p232 = scmp.eq.s32.totalorder %s21, 1
      %p233 = scmp.ne.s32.totalorder %s228, %s230
      %p234 = scmp.eq.s32.totalorder %s21, 0
      %p235 = por %p233, %p234
      %p236 = scmp.ne.s32.totalorder %s228, %s230
      %p237 = scmp.eq.s32.totalorder %s26, 1
      %p238 = por %p236, %p237
      %p239 = scmp.ne.s32.totalorder %s230, %s231
      %p240 = scmp.eq.s32.totalorder %s26, 0
      %p241 = por %p239, %p240
      %p242 = scmp.ne.s32.totalorder %s230, %s231
      %p243 = scmp.eq.s32.totalorder %s27, 1
      %p244 = por %p242, %p243
      %p246 = scmp.ne.s32.totalorder %s231, %s245
      %p247 = scmp.eq.s32.totalorder %s27, 0
      %p248 = por %p246, %p247
      %s250 = sadd.s32 %s249, 1
      %p253 = scmp.eq.s32.totalorder %s21, 1
      %p254 = scmp.ne.s32.totalorder %s249, %s251
      %p255 = scmp.eq.s32.totalorder %s21, 0
      %p256 = por %p254, %p255
      %p257 = scmp.ne.s32.totalorder %s249, %s251
      %p258 = scmp.eq.s32.totalorder %s26, 1
      %p259 = por %p257, %p258
      %p260 = scmp.ne.s32.totalorder %s251, %s252
      %p261 = scmp.eq.s32.totalorder %s26, 0
      %p262 = por %p260, %p261
      %p263 = scmp.ne.s32.totalorder %s251, %s252
      %p264 = scmp.eq.s32.totalorder %s27, 1
      %p265 = por %p263, %p264
      %p267 = scmp.ne.s32.totalorder %s252, %s266
      %p268 = scmp.eq.s32.totalorder %s27, 0
      %p269 = por %p267, %p268
      %s271 = sadd.s32 %s270, 1
      %p274 = scmp.eq.s32.totalorder %s21, 1
      %p275 = scmp.ne.s32.totalorder %s270, %s272
      %p276 = scmp.eq.s32.totalorder %s21, 0
      %p277 = por %p275, %p276
      %p278 = scmp.ne.s32.totalorder %s270, %s272
      %p279 = scmp.eq.s32.totalorder %s26, 1
      %p280 = por %p278, %p279
      %p281 = scmp.ne.s32.totalorder %s272, %s273
      %p282 = scmp.eq.s32.totalorder %s26, 0
      %p283 = por %p281, %p282
      %p284 = scmp.ne.s32.totalorder %s272, %s273
      %p285 = scmp.eq.s32.totalorder %s27, 1
      %p286 = por %p284, %p285
      %p288 = scmp.ne.s32.totalorder %s273, %s287
      %p289 = scmp.eq.s32.totalorder %s27, 0
      %p290 = por %p288, %p289
      %s292 = sadd.s32 %s291, 1
      %p295 = scmp.eq.s32.totalorder %s21, 1
      %p296 = scmp.ne.s32.totalorder %s291, %s293
      %p297 = scmp.eq.s32.totalorder %s21, 0
      %p298 = por %p296, %p297
      %p299 = scmp.ne.s32.totalorder %s291, %s293
      %p300 = scmp.eq.s32.totalorder %s26, 1
      %p301 = por %p299, %p300
      %p302 = scmp.ne.s32.totalorder %s293, %s294
      %p303 = scmp.eq.s32.totalorder %s26, 0
      %p304 = por %p302, %p303
      %p305 = scmp.ne.s32.totalorder %s293, %s294
      %p306 = scmp.eq.s32.totalorder %s27, 1
      %p307 = por %p305, %p306
      %p309 = scmp.ne.s32.totalorder %s294, %s308
      %p310 = scmp.eq.s32.totalorder %s27, 0
      %p311 = por %p309, %p310
      %s312 = ssub.s32 %s21, %s28
      %p313 = scmp.eq.s32.totalorder %s312, 0
      %s315 = sadd.s32 %s314, 1
      %s316 = scalar_select %p313, %s314, %s315
      %p319 = pneg %p313
      %p320 = scmp.eq.s32.totalorder %s21, 1
      %p321 = por %p319, %p320
      %p322 = scmp.ne.s32.totalorder %s314, %s317
      %p323 = scmp.eq.s32.totalorder %s21, 0
      %p324 = por %p322, %p323
      %p325 = scmp.ne.s32.totalorder %s314, %s317
      %p326 = scmp.eq.s32.totalorder %s26, 1
      %p327 = por %p325, %p326
      %p328 = scmp.ne.s32.totalorder %s317, %s318
      %p329 = scmp.eq.s32.totalorder %s26, 0
      %p330 = por %p328, %p329
      %p331 = scmp.ne.s32.totalorder %s317, %s318
      %p332 = scmp.eq.s32.totalorder %s27, 1
      %p333 = por %p331, %p332
      %p335 = scmp.ne.s32.totalorder %s318, %s334
      %p336 = scmp.eq.s32.totalorder %s27, 0
      %p337 = por %p335, %p336
      %p338 = scmp.le.s32.totalorder 1, %s21
      %p339 = scmp.lt.s32.totalorder %s21, 3
      %p340 = pnand %p338, %p339
      %p341 = pneg %p340
      // Predicated region
      $region9: #{ncf_forward.1} parent=5 // pred_check
        _
      $region10: #{ncf_forward.1} parent=5 // pred_check_branch
        %343 = sbr.rel (%p340) target = $region12
      $region11: #{ncf_forward.1} parent=5 // pred_region
        %s344 = ssub.s32 %s21, 1
        // Predicated region
        $region13: #{ncf_forward.1} parent=11 // pred_check
          %p345 = pneg %p94
        $region14: #{ncf_forward.1} parent=11 // pred_check_branch
          %347 = sbr.rel (%p345) target = $region16
        $region15: #{ncf_forward.1} parent=11 // pred_region
          _
        $region16: #{ncf_forward.1} parent=11 // pred_fallthru
          _
        // Predicated region
        $region17: #{ncf_forward.1} parent=11 // pred_check
          %p348 = pneg %p115
        $region18: #{ncf_forward.1} parent=11 // pred_check_branch
          %350 = sbr.rel (%p348) target = $region20
        $region19: #{ncf_forward.1} parent=11 // pred_region
          _
        $region20: #{ncf_forward.1} parent=11 // pred_fallthru
          _
        // Predicated region
        $region21: #{ncf_forward.1} parent=11 // pred_check
          %p351 = pneg %p136
        $region22: #{ncf_forward.1} parent=11 // pred_check_branch
          %353 = sbr.rel (%p351) target = $region24
        $region23: #{ncf_forward.1} parent=11 // pred_region
          _
        $region24: #{ncf_forward.1} parent=11 // pred_fallthru
          _
        // Predicated region
        $region25: #{ncf_forward.1} parent=11 // pred_check
          %p354 = pneg %p157
        $region26: #{ncf_forward.1} parent=11 // pred_check_branch
          %356 = sbr.rel (%p354) target = $region28
        $region27: #{ncf_forward.1} parent=11 // pred_region
          _
        $region28: #{ncf_forward.1} parent=11 // pred_fallthru
          _
        // Predicated region
        $region29: #{ncf_forward.1} parent=11 // pred_check
          %p357 = pneg %p178
        $region30: #{ncf_forward.1} parent=11 // pred_check_branch
          %359 = sbr.rel (%p357) target = $region32
        $region31: #{ncf_forward.1} parent=11 // pred_region
          _
        $region32: #{ncf_forward.1} parent=11 // pred_fallthru
          _
        // Predicated region
        $region33: #{ncf_forward.1} parent=11 // pred_check
          %p360 = pneg %p199
        $region34: #{ncf_forward.1} parent=11 // pred_check_branch
          %362 = sbr.rel (%p360) target = $region36
        $region35: #{ncf_forward.1} parent=11 // pred_region
          _
        $region36: #{ncf_forward.1} parent=11 // pred_fallthru
          _
        // Predicated region
        $region37: #{ncf_forward.1} parent=11 // pred_check
          %p363 = pneg %p220
        $region38: #{ncf_forward.1} parent=11 // pred_check_branch
          %365 = sbr.rel (%p363) target = $region40
        $region39: #{ncf_forward.1} parent=11 // pred_region
          _
        $region40: #{ncf_forward.1} parent=11 // pred_fallthru
          _
        // Predicated region
        $region41: #{ncf_forward.1} parent=11 // pred_check
          %p366 = pneg %p241
        $region42: #{ncf_forward.1} parent=11 // pred_check_branch
          %368 = sbr.rel (%p366) target = $region44
        $region43: #{ncf_forward.1} parent=11 // pred_region
          _
        $region44: #{ncf_forward.1} parent=11 // pred_fallthru
          _
        // Predicated region
        $region45: #{ncf_forward.1} parent=11 // pred_check
          %p369 = pneg %p262
        $region46: #{ncf_forward.1} parent=11 // pred_check_branch
          %371 = sbr.rel (%p369) target = $region48
        $region47: #{ncf_forward.1} parent=11 // pred_region
          _
        $region48: #{ncf_forward.1} parent=11 // pred_fallthru
          _
        // Predicated region
        $region49: #{ncf_forward.1} parent=11 // pred_check
          %p372 = pneg %p283
        $region50: #{ncf_forward.1} parent=11 // pred_check_branch
          %374 = sbr.rel (%p372) target = $region52
        $region51: #{ncf_forward.1} parent=11 // pred_region
          _
        $region52: #{ncf_forward.1} parent=11 // pred_fallthru
          _
        // Predicated region
        $region53: #{ncf_forward.1} parent=11 // pred_check
          %p375 = pneg %p304
        $region54: #{ncf_forward.1} parent=11 // pred_check_branch
          %377 = sbr.rel (%p375) target = $region56
        $region55: #{ncf_forward.1} parent=11 // pred_region
          _
        $region56: #{ncf_forward.1} parent=11 // pred_fallthru
          _
      $region12: #{ncf_forward.1} parent=5 // pred_fallthru
        _
      %p378 = scmp.lt.s32.totalorder %s21, 2
      // Predicated region
      $region57: #{ncf_forward.1} parent=5 // pred_check
        %p379 = pneg %p378
      $region58: #{ncf_forward.1} parent=5 // pred_check_branch
        %381 = sbr.rel (%p379) target = $region60
      $region59: #{ncf_forward.1} parent=5 // pred_region
        // Predicated region
        $region61: #{ncf_forward.1} parent=59 // pred_check
          %p382 = pneg %p41
        $region62: #{ncf_forward.1} parent=59 // pred_check_branch
          %384 = sbr.rel (%p382) target = $region64
        $region63: #{ncf_forward.1} parent=59 // pred_region
          %s385 = sand.u32 %s31, 1
          %s386 = sand.u32 %s31, 1
          %s387 = smul.addr %s386, 64
          %s388 = scalar_lea.vmem [#allocation3], %s387
          %s389 = smul.u32 2, %s21
          %s390 = ssub.s32 3, %s389
          %p391 = scmp.lt.s32.totalorder %s390, 2
          %s392 = scalar_select %p391, %s390, 2
          %s393 = smul.u32 512, %s392
          %p394 = scmp.ne.s32.totalorder 0, %s393
          %s395 = smul.addr %s389, 8
          %s396 = scalar_lea.vmem %s0, %s395
          %s397 = smul.u32 %s392, 8
          // Predicated region
          $region65: #{ncf_forward.1} parent=63 // pred_check
            %p398 = pneg %p394
          $region66: #{ncf_forward.1} parent=63 // pred_check_branch
            %400 = sbr.rel (%p398) target = $region68
          $region67: #{ncf_forward.1} parent=63 // pred_region
            %p401 = scmp.lt.u32.totalorder %s397, 8
            %p402 = pneg %p401
            // Predicated region
            $region69: #{ncf_forward.1} parent=67 // pred_check
              _
            $region70: #{ncf_forward.1} parent=67 // pred_check_branch
              %404 = sbr.rel (%p401) target = $region72
            $region71: #{ncf_forward.1} parent=67 // pred_region
              %s425 = sand.u32 %s397, 7
              %p426 = scmp.eq.s32.totalorder %s425, 0
              // Predicated region
              $region84: #{ncf_forward.1} parent=71 // pred_check
                %p427 = pneg %p426
              $region85: #{ncf_forward.1} parent=71 // pred_check_branch
                %429 = sbr.rel (%p427) target = $region87
              $region86: #{ncf_forward.1} parent=71 // pred_region
                %s430 = sshrl.u32 %s397, 3
                %s431 = sshrl.u32 %s430, 4
                // While loop
                $region88: #{ncf_forward.1} parent=86 // loop_pre_header
                  _
                $region89: #{ncf_forward.1} parent=86 // loop_header
                  %s435 = sphi 0, %s437
                  %p436 = scmp.ge.s32.totalorder %s435, %s431
                  %s440 = sphi 0, %s573
                  %s441 = sphi %s396, %s576
                  %s442 = sphi %s388, %s577
                $region90: #{ncf_forward.1} parent=86 // loop_header_branch
                  %439 = sbr.rel (%p436) target = $region94
                $region91: #{ncf_forward.1} parent=86 // loop_body
                  %v443 = vld [vmem:[%s441] sm:$0xff]
                  %444 = vst [vmem:[%s442] sm:$0xff] %v443
                  %v445 = vld [vmem:[%s441 + $0x8] sm:$0xff]
                  %446 = vst [vmem:[%s442 + $0x8] sm:$0xff] %v445
                  %v447 = vld [vmem:[%s441 + $0x10] sm:$0xff]
                  %448 = vst [vmem:[%s442 + $0x10] sm:$0xff] %v447
                  %v449 = vld [vmem:[%s441 + $0x18] sm:$0xff]
                  %450 = vst [vmem:[%s442 + $0x18] sm:$0xff] %v449
                  %v451 = vld [vmem:[%s441 + $0x20] sm:$0xff]
                  %452 = vst [vmem:[%s442 + $0x20] sm:$0xff] %v451
                  %v453 = vld [vmem:[%s441 + $0x28] sm:$0xff]
                  %454 = vst [vmem:[%s442 + $0x28] sm:$0xff] %v453
                  %v455 = vld [vmem:[%s441 + $0x30] sm:$0xff]
                  %456 = vst [vmem:[%s442 + $0x30] sm:$0xff] %v455
                  %v457 = vld [vmem:[%s441 + $0x38] sm:$0xff]
                  %458 = vst [vmem:[%s442 + $0x38] sm:$0xff] %v457
                  %v459 = vld [vmem:[%s441 + $0x40] sm:$0xff]
                  %460 = vst [vmem:[%s442 + $0x40] sm:$0xff] %v459
                  %v461 = vld [vmem:[%s441 + $0x48] sm:$0xff]
                  %462 = vst [vmem:[%s442 + $0x48] sm:$0xff] %v461
                  %v463 = vld [vmem:[%s441 + $0x50] sm:$0xff]
                  %464 = vst [vmem:[%s442 + $0x50] sm:$0xff] %v463
                  %v465 = vld [vmem:[%s441 + $0x58] sm:$0xff]
                  %466 = vst [vmem:[%s442 + $0x58] sm:$0xff] %v465
                  %v467 = vld [vmem:[%s441 + $0x60] sm:$0xff]
                  %468 = vst [vmem:[%s442 + $0x60] sm:$0xff] %v467
                  %v469 = vld [vmem:[%s441 + $0x68] sm:$0xff]
                  %470 = vst [vmem:[%s442 + $0x68] sm:$0xff] %v469
                  %v471 = vld [vmem:[%s441 + $0x70] sm:$0xff]
                  %472 = vst [vmem:[%s442 + $0x70] sm:$0xff] %v471
                  %v473 = vld [vmem:[%s441 + $0x78] sm:$0xff]
                  %474 = vst [vmem:[%s442 + $0x78] sm:$0xff] %v473
                  %v475 = vld [vmem:[%s441 + $0x18] sm:$0xff]
                  %476 = vst [vmem:[%s442 + $0x10] sm:$0xff] %v475
                  %v477 = vld [vmem:[%s441 + $0x20] sm:$0xff]
                  %478 = vst [vmem:[%s442 + $0x18] sm:$0xff] %v477
                  %v479 = vld [vmem:[%s441 + $0x28] sm:$0xff]
                  %480 = vst [vmem:[%s442 + $0x20] sm:$0xff] %v479
                  %v481 = vld [vmem:[%s441 + $0x30] sm:$0xff]
                  %482 = vst [vmem:[%s442 + $0x28] sm:$0xff] %v481
                  %v483 = vld [vmem:[%s441 + $0x38] sm:$0xff]
                  %484 = vst [vmem:[%s442 + $0x30] sm:$0xff] %v483
                  %v485 = vld [vmem:[%s441 + $0x40] sm:$0xff]
                  %486 = vst [vmem:[%s442 + $0x38] sm:$0xff] %v485
                  %v487 = vld [vmem:[%s441 + $0x48] sm:$0xff]
                  %488 = vst [vmem:[%s442 + $0x40] sm:$0xff] %v487
                  %v489 = vld [vmem:[%s441 + $0x50] sm:$0xff]
                  %490 = vst [vmem:[%s442 + $0x48] sm:$0xff] %v489
                  %v491 = vld [vmem:[%s441 + $0x58] sm:$0xff]
                  %492 = vst [vmem:[%s442 + $0x50] sm:$0xff] %v491
                  %v493 = vld [vmem:[%s441 + $0x60] sm:$0xff]
                  %494 = vst [vmem:[%s442 + $0x58] sm:$0xff] %v493
                  %v495 = vld [vmem:[%s441 + $0x68] sm:$0xff]
                  %496 = vst [vmem:[%s442 + $0x60] sm:$0xff] %v495
                  %v497 = vld [vmem:[%s441 + $0x70] sm:$0xff]
                  %498 = vst [vmem:[%s442 + $0x68] sm:$0xff] %v497
                  %v499 = vld [vmem:[%s441 + $0x78] sm:$0xff]
                  %500 = vst [vmem:[%s442 + $0x70] sm:$0xff] %v499
                  %v501 = vld [vmem:[%s441 + $0x80] sm:$0xff]
                  %502 = vst [vmem:[%s442 + $0x78] sm:$0xff] %v501
                  %v503 = vld [vmem:[%s441 + $0x88] sm:$0xff]
                  %504 = vst [vmem:[%s442 + $0x80] sm:$0xff] %v503
                  %v505 = vld [vmem:[%s441 + $0x90] sm:$0xff]
                  %506 = vst [vmem:[%s442 + $0x88] sm:$0xff] %v505
                  %v507 = vld [vmem:[%s441 + $0x30] sm:$0xff]
                  %508 = vst [vmem:[%s442 + $0x20] sm:$0xff] %v507
                  %v509 = vld [vmem:[%s441 + $0x38] sm:$0xff]
                  %510 = vst [vmem:[%s442 + $0x28] sm:$0xff] %v509
                  %v511 = vld [vmem:[%s441 + $0x40] sm:$0xff]
                  %512 = vst [vmem:[%s442 + $0x30] sm:$0xff] %v511
                  %v513 = vld [vmem:[%s441 + $0x48] sm:$0xff]
                  %514 = vst [vmem:[%s442 + $0x38] sm:$0xff] %v513
                  %v515 = vld [vmem:[%s441 + $0x50] sm:$0xff]
                  %516 = vst [vmem:[%s442 + $0x40] sm:$0xff] %v515
                  %v517 = vld [vmem:[%s441 + $0x58] sm:$0xff]
                  %518 = vst [vmem:[%s442 + $0x48] sm:$0xff] %v517
                  %v519 = vld [vmem:[%s441 + $0x60] sm:$0xff]
                  %520 = vst [vmem:[%s442 + $0x50] sm:$0xff] %v519
                  %v521 = vld [vmem:[%s441 + $0x68] sm:$0xff]
                  %522 = vst [vmem:[%s442 + $0x58] sm:$0xff] %v521
                  %v523 = vld [vmem:[%s441 + $0x70] sm:$0xff]
                  %524 = vst [vmem:[%s442 + $0x60] sm:$0xff] %v523
                  %v525 = vld [vmem:[%s441 + $0x78] sm:$0xff]
                  %526 = vst [vmem:[%s442 + $0x68] sm:$0xff] %v525
                  %v527 = vld [vmem:[%s441 + $0x80] sm:$0xff]
                  %528 = vst [vmem:[%s442 + $0x70] sm:$0xff] %v527
                  %v529 = vld [vmem:[%s441 + $0x88] sm:$0xff]
                  %530 = vst [vmem:[%s442 + $0x78] sm:$0xff] %v529
                  %v531 = vld [vmem:[%s441 + $0x90] sm:$0xff]
                  %532 = vst [vmem:[%s442 + $0x80] sm:$0xff] %v531
                  %v533 = vld [vmem:[%s441 + $0x98] sm:$0xff]
                  %534 = vst [vmem:[%s442 + $0x88] sm:$0xff] %v533
                  %v535 = vld [vmem:[%s441 + $0xa0] sm:$0xff]
                  %536 = vst [vmem:[%s442 + $0x90] sm:$0xff] %v535
                  %v537 = vld [vmem:[%s441 + $0xa8] sm:$0xff]
                  %538 = vst [vmem:[%s442 + $0x98] sm:$0xff] %v537
                  %v539 = vld [vmem:[%s441 + $0x48] sm:$0xff]
                  %540 = vst [vmem:[%s442 + $0x30] sm:$0xff] %v539
                  %v541 = vld [vmem:[%s441 + $0x50] sm:$0xff]
                  %542 = vst [vmem:[%s442 + $0x38] sm:$0xff] %v541
                  %v543 = vld [vmem:[%s441 + $0x58] sm:$0xff]
                  %544 = vst [vmem:[%s442 + $0x40] sm:$0xff] %v543
                  %v545 = vld [vmem:[%s441 + $0x60] sm:$0xff]
                  %546 = vst [vmem:[%s442 + $0x48] sm:$0xff] %v545
                  %v547 = vld [vmem:[%s441 + $0x68] sm:$0xff]
                  %548 = vst [vmem:[%s442 + $0x50] sm:$0xff] %v547
                  %v549 = vld [vmem:[%s441 + $0x70] sm:$0xff]
                  %550 = vst [vmem:[%s442 + $0x58] sm:$0xff] %v549
                  %v551 = vld [vmem:[%s441 + $0x78] sm:$0xff]
                  %552 = vst [vmem:[%s442 + $0x60] sm:$0xff] %v551
                  %v553 = vld [vmem:[%s441 + $0x80] sm:$0xff]
                  %554 = vst [vmem:[%s442 + $0x68] sm:$0xff] %v553
                  %v555 = vld [vmem:[%s441 + $0x88] sm:$0xff]
                  %556 = vst [vmem:[%s442 + $0x70] sm:$0xff] %v555
                  %v557 = vld [vmem:[%s441 + $0x90] sm:$0xff]
                  %558 = vst [vmem:[%s442 + $0x78] sm:$0xff] %v557
                  %v559 = vld [vmem:[%s441 + $0x98] sm:$0xff]
                  %560 = vst [vmem:[%s442 + $0x80] sm:$0xff] %v559
                  %v561 = vld [vmem:[%s441 + $0xa0] sm:$0xff]
                  %562 = vst [vmem:[%s442 + $0x88] sm:$0xff] %v561
                  %v563 = vld [vmem:[%s441 + $0xa8] sm:$0xff]
                  %564 = vst [vmem:[%s442 + $0x90] sm:$0xff] %v563
                  %v565 = vld [vmem:[%s441 + $0xb0] sm:$0xff]
                  %566 = vst [vmem:[%s442 + $0x98] sm:$0xff] %v565
                  %v567 = vld [vmem:[%s441 + $0xb8] sm:$0xff]
                  %568 = vst [vmem:[%s442 + $0xa0] sm:$0xff] %v567
                  %v569 = vld [vmem:[%s441 + $0xc0] sm:$0xff]
                  %570 = vst [vmem:[%s442 + $0xa8] sm:$0xff] %v569
                  %s571 = sadd.s32 1, %s440
                  %p572 = scmp.ge.s32.totalorder %s571, %s431
                  %s573 = scalar_select %p572, 0, %s571
                  %s574 = smul.u32 %s573, 128
                  %s575 = smul.u32 %s573, 128
                  %s576 = scalar_lea.vmem %s396, %s574
                  %s577 = scalar_lea.vmem %s388, %s575 [#allocation3]
                $region92: #{ncf_forward.1} parent=86 // loop_footer
                  %s437 = sadd.s32 %s435, 1
                $region93: #{ncf_forward.1} parent=86 // loop_footer_branch
                  %434 = sbr.rel target = $region89
                $region94: #{ncf_forward.1} parent=86 // loop_exit
                  _
                %s578 = sshrl.u32 %s430, 4
                %s579 = sand.u32 %s430, 15
                %s580 = smul.u32 %s578, 16
                %s581 = smul.u32 128, %s580
                %s582 = sshra.s32 %s581, 4
                %s583 = scalar_lea.vmem %s396, %s582
                %s584 = smul.u32 128, %s580
                %s585 = sshra.s32 %s584, 4
                %s586 = scalar_lea.vmem %s388, %s585 [#allocation3]
                // While loop
                $region95: #{ncf_forward.1} parent=86 // loop_pre_header
                  _
                $region96: #{ncf_forward.1} parent=86 // loop_header
                  %s590 = sphi 0, %s592
                  %p591 = scmp.ge.s32.totalorder %s590, %s579
                  %s595 = sphi 0, %s608
                  %s596 = sphi %s583, %s611
                  %s597 = sphi %s586, %s612
                $region97: #{ncf_forward.1} parent=86 // loop_header_branch
                  %594 = sbr.rel (%p591) target = $region101
                $region98: #{ncf_forward.1} parent=86 // loop_body
                  %v598 = vld [vmem:[%s596] sm:$0xff]
                  %599 = vst [vmem:[%s597] sm:$0xff] %v598
                  %v600 = vld [vmem:[%s596 + $0x18] sm:$0xff]
                  %601 = vst [vmem:[%s597 + $0x10] sm:$0xff] %v600
                  %v602 = vld [vmem:[%s596 + $0x30] sm:$0xff]
                  %603 = vst [vmem:[%s597 + $0x20] sm:$0xff] %v602
                  %v604 = vld [vmem:[%s596 + $0x48] sm:$0xff]
                  %605 = vst [vmem:[%s597 + $0x30] sm:$0xff] %v604
                  %s606 = sadd.s32 1, %s595
                  %p607 = scmp.ge.s32.totalorder %s606, %s579
                  %s608 = scalar_select %p607, 0, %s606
                  %s609 = smul.u32 %s608, 8
                  %s610 = smul.u32 %s608, 8
                  %s611 = scalar_lea.vmem %s583, %s609
                  %s612 = scalar_lea.vmem %s586, %s610 [#allocation3]
                $region99: #{ncf_forward.1} parent=86 // loop_footer
                  %s592 = sadd.s32 %s590, 1
                $region100: #{ncf_forward.1} parent=86 // loop_footer_branch
                  %589 = sbr.rel target = $region96
                $region101: #{ncf_forward.1} parent=86 // loop_exit
                  _
              $region87: #{ncf_forward.1} parent=71 // pred_fallthru
                _
              %p613 = pneg %p426
              // Predicated region
              $region102: #{ncf_forward.1} parent=71 // pred_check
                _
              $region103: #{ncf_forward.1} parent=71 // pred_check_branch
                %615 = sbr.rel (%p426) target = $region105
              $region104: #{ncf_forward.1} parent=71 // pred_region
                %s616 = sand.u32 %s397, 7
                %s617 = ssub.s32 %s397, %s616
                %s618 = scalar_lea.vmem %s396, %s617
                %s619 = ssub.s32 %s397, %s616
                %s620 = scalar_lea.vmem %s388, %s619 [#allocation3]
                %s621 = sshrl.u32 %s397, 3
                %s622 = sshrl.u32 %s621, 4
                // While loop
                $region106: #{ncf_forward.1} parent=104 // loop_pre_header
                  _
                $region107: #{ncf_forward.1} parent=104 // loop_header
                  %s626 = sphi 0, %s628
                  %p627 = scmp.ge.s32.totalorder %s626, %s622
                  %s631 = sphi 0, %s764
                  %s632 = sphi %s396, %s767
                  %s633 = sphi %s388, %s768
                $region108: #{ncf_forward.1} parent=104 // loop_header_branch
                  %630 = sbr.rel (%p627) target = $region112
                $region109: #{ncf_forward.1} parent=104 // loop_body
                  %v634 = vld [vmem:[%s632] sm:$0xff]
                  %635 = vst [vmem:[%s633] sm:$0xff] %v634
                  %v636 = vld [vmem:[%s632 + $0x8] sm:$0xff]
                  %637 = vst [vmem:[%s633 + $0x8] sm:$0xff] %v636
                  %v638 = vld [vmem:[%s632 + $0x10] sm:$0xff]
                  %639 = vst [vmem:[%s633 + $0x10] sm:$0xff] %v638
                  %v640 = vld [vmem:[%s632 + $0x18] sm:$0xff]
                  %641 = vst [vmem:[%s633 + $0x18] sm:$0xff] %v640
                  %v642 = vld [vmem:[%s632 + $0x20] sm:$0xff]
                  %643 = vst [vmem:[%s633 + $0x20] sm:$0xff] %v642
                  %v644 = vld [vmem:[%s632 + $0x28] sm:$0xff]
                  %645 = vst [vmem:[%s633 + $0x28] sm:$0xff] %v644
                  %v646 = vld [vmem:[%s632 + $0x30] sm:$0xff]
                  %647 = vst [vmem:[%s633 + $0x30] sm:$0xff] %v646
                  %v648 = vld [vmem:[%s632 + $0x38] sm:$0xff]
                  %649 = vst [vmem:[%s633 + $0x38] sm:$0xff] %v648
                  %v650 = vld [vmem:[%s632 + $0x40] sm:$0xff]
                  %651 = vst [vmem:[%s633 + $0x40] sm:$0xff] %v650
                  %v652 = vld [vmem:[%s632 + $0x48] sm:$0xff]
                  %653 = vst [vmem:[%s633 + $0x48] sm:$0xff] %v652
                  %v654 = vld [vmem:[%s632 + $0x50] sm:$0xff]
                  %655 = vst [vmem:[%s633 + $0x50] sm:$0xff] %v654
                  %v656 = vld [vmem:[%s632 + $0x58] sm:$0xff]
                  %657 = vst [vmem:[%s633 + $0x58] sm:$0xff] %v656
                  %v658 = vld [vmem:[%s632 + $0x60] sm:$0xff]
                  %659 = vst [vmem:[%s633 + $0x60] sm:$0xff] %v658
                  %v660 = vld [vmem:[%s632 + $0x68] sm:$0xff]
                  %661 = vst [vmem:[%s633 + $0x68] sm:$0xff] %v660
                  %v662 = vld [vmem:[%s632 + $0x70] sm:$0xff]
                  %663 = vst [vmem:[%s633 + $0x70] sm:$0xff] %v662
                  %v664 = vld [vmem:[%s632 + $0x78] sm:$0xff]
                  %665 = vst [vmem:[%s633 + $0x78] sm:$0xff] %v664
                  %v666 = vld [vmem:[%s632 + $0x18] sm:$0xff]
                  %667 = vst [vmem:[%s633 + $0x10] sm:$0xff] %v666
                  %v668 = vld [vmem:[%s632 + $0x20] sm:$0xff]
                  %669 = vst [vmem:[%s633 + $0x18] sm:$0xff] %v668
                  %v670 = vld [vmem:[%s632 + $0x28] sm:$0xff]
                  %671 = vst [vmem:[%s633 + $0x20] sm:$0xff] %v670
                  %v672 = vld [vmem:[%s632 + $0x30] sm:$0xff]
                  %673 = vst [vmem:[%s633 + $0x28] sm:$0xff] %v672
                  %v674 = vld [vmem:[%s632 + $0x38] sm:$0xff]
                  %675 = vst [vmem:[%s633 + $0x30] sm:$0xff] %v674
                  %v676 = vld [vmem:[%s632 + $0x40] sm:$0xff]
                  %677 = vst [vmem:[%s633 + $0x38] sm:$0xff] %v676
                  %v678 = vld [vmem:[%s632 + $0x48] sm:$0xff]
                  %679 = vst [vmem:[%s633 + $0x40] sm:$0xff] %v678
                  %v680 = vld [vmem:[%s632 + $0x50] sm:$0xff]
                  %681 = vst [vmem:[%s633 + $0x48] sm:$0xff] %v680
                  %v682 = vld [vmem:[%s632 + $0x58] sm:$0xff]
                  %683 = vst [vmem:[%s633 + $0x50] sm:$0xff] %v682
                  %v684 = vld [vmem:[%s632 + $0x60] sm:$0xff]
                  %685 = vst [vmem:[%s633 + $0x58] sm:$0xff] %v684
                  %v686 = vld [vmem:[%s632 + $0x68] sm:$0xff]
                  %687 = vst [vmem:[%s633 + $0x60] sm:$0xff] %v686
                  %v688 = vld [vmem:[%s632 + $0x70] sm:$0xff]
                  %689 = vst [vmem:[%s633 + $0x68] sm:$0xff] %v688
                  %v690 = vld [vmem:[%s632 + $0x78] sm:$0xff]
                  %691 = vst [vmem:[%s633 + $0x70] sm:$0xff] %v690
                  %v692 = vld [vmem:[%s632 + $0x80] sm:$0xff]
                  %693 = vst [vmem:[%s633 + $0x78] sm:$0xff] %v692
                  %v694 = vld [vmem:[%s632 + $0x88] sm:$0xff]
                  %695 = vst [vmem:[%s633 + $0x80] sm:$0xff] %v694
                  %v696 = vld [vmem:[%s632 + $0x90] sm:$0xff]
                  %697 = vst [vmem:[%s633 + $0x88] sm:$0xff] %v696
                  %v698 = vld [vmem:[%s632 + $0x30] sm:$0xff]
                  %699 = vst [vmem:[%s633 + $0x20] sm:$0xff] %v698
                  %v700 = vld [vmem:[%s632 + $0x38] sm:$0xff]
                  %701 = vst [vmem:[%s633 + $0x28] sm:$0xff] %v700
                  %v702 = vld [vmem:[%s632 + $0x40] sm:$0xff]
                  %703 = vst [vmem:[%s633 + $0x30] sm:$0xff] %v702
                  %v704 = vld [vmem:[%s632 + $0x48] sm:$0xff]
                  %705 = vst [vmem:[%s633 + $0x38] sm:$0xff] %v704
                  %v706 = vld [vmem:[%s632 + $0x50] sm:$0xff]
                  %707 = vst [vmem:[%s633 + $0x40] sm:$0xff] %v706
                  %v708 = vld [vmem:[%s632 + $0x58] sm:$0xff]
                  %709 = vst [vmem:[%s633 + $0x48] sm:$0xff] %v708
                  %v710 = vld [vmem:[%s632 + $0x60] sm:$0xff]
                  %711 = vst [vmem:[%s633 + $0x50] sm:$0xff] %v710
                  %v712 = vld [vmem:[%s632 + $0x68] sm:$0xff]
                  %713 = vst [vmem:[%s633 + $0x58] sm:$0xff] %v712
                  %v714 = vld [vmem:[%s632 + $0x70] sm:$0xff]
                  %715 = vst [vmem:[%s633 + $0x60] sm:$0xff] %v714
                  %v716 = vld [vmem:[%s632 + $0x78] sm:$0xff]
                  %717 = vst [vmem:[%s633 + $0x68] sm:$0xff] %v716
                  %v718 = vld [vmem:[%s632 + $0x80] sm:$0xff]
                  %719 = vst [vmem:[%s633 + $0x70] sm:$0xff] %v718
                  %v720 = vld [vmem:[%s632 + $0x88] sm:$0xff]
                  %721 = vst [vmem:[%s633 + $0x78] sm:$0xff] %v720
                  %v722 = vld [vmem:[%s632 + $0x90] sm:$0xff]
                  %723 = vst [vmem:[%s633 + $0x80] sm:$0xff] %v722
                  %v724 = vld [vmem:[%s632 + $0x98] sm:$0xff]
                  %725 = vst [vmem:[%s633 + $0x88] sm:$0xff] %v724
                  %v726 = vld [vmem:[%s632 + $0xa0] sm:$0xff]
                  %727 = vst [vmem:[%s633 + $0x90] sm:$0xff] %v726
                  %v728 = vld [vmem:[%s632 + $0xa8] sm:$0xff]
                  %729 = vst [vmem:[%s633 + $0x98] sm:$0xff] %v728
                  %v730 = vld [vmem:[%s632 + $0x48] sm:$0xff]
                  %731 = vst [vmem:[%s633 + $0x30] sm:$0xff] %v730
                  %v732 = vld [vmem:[%s632 + $0x50] sm:$0xff]
                  %733 = vst [vmem:[%s633 + $0x38] sm:$0xff] %v732
                  %v734 = vld [vmem:[%s632 + $0x58] sm:$0xff]
                  %735 = vst [vmem:[%s633 + $0x40] sm:$0xff] %v734
                  %v736 = vld [vmem:[%s632 + $0x60] sm:$0xff]
                  %737 = vst [vmem:[%s633 + $0x48] sm:$0xff] %v736
                  %v738 = vld [vmem:[%s632 + $0x68] sm:$0xff]
                  %739 = vst [vmem:[%s633 + $0x50] sm:$0xff] %v738
                  %v740 = vld [vmem:[%s632 + $0x70] sm:$0xff]
                  %741 = vst [vmem:[%s633 + $0x58] sm:$0xff] %v740
                  %v742 = vld [vmem:[%s632 + $0x78] sm:$0xff]
                  %743 = vst [vmem:[%s633 + $0x60] sm:$0xff] %v742
                  %v744 = vld [vmem:[%s632 + $0x80] sm:$0xff]
                  %745 = vst [vmem:[%s633 + $0x68] sm:$0xff] %v744
                  %v746 = vld [vmem:[%s632 + $0x88] sm:$0xff]
                  %747 = vst [vmem:[%s633 + $0x70] sm:$0xff] %v746
                  %v748 = vld [vmem:[%s632 + $0x90] sm:$0xff]
                  %749 = vst [vmem:[%s633 + $0x78] sm:$0xff] %v748
                  %v750 = vld [vmem:[%s632 + $0x98] sm:$0xff]
                  %751 = vst [vmem:[%s633 + $0x80] sm:$0xff] %v750
                  %v752 = vld [vmem:[%s632 + $0xa0] sm:$0xff]
                  %753 = vst [vmem:[%s633 + $0x88] sm:$0xff] %v752
                  %v754 = vld [vmem:[%s632 + $0xa8] sm:$0xff]
                  %755 = vst [vmem:[%s633 + $0x90] sm:$0xff] %v754
                  %v756 = vld [vmem:[%s632 + $0xb0] sm:$0xff]
                  %757 = vst [vmem:[%s633 + $0x98] sm:$0xff] %v756
                  %v758 = vld [vmem:[%s632 + $0xb8] sm:$0xff]
                  %759 = vst [vmem:[%s633 + $0xa0] sm:$0xff] %v758
                  %v760 = vld [vmem:[%s632 + $0xc0] sm:$0xff]
                  %761 = vst [vmem:[%s633 + $0xa8] sm:$0xff] %v760
                  %s762 = sadd.s32 1, %s631
                  %p763 = scmp.ge.s32.totalorder %s762, %s622
                  %s764 = scalar_select %p763, 0, %s762
                  %s765 = smul.u32 %s764, 128
                  %s766 = smul.u32 %s764, 128
                  %s767 = scalar_lea.vmem %s396, %s765
                  %s768 = scalar_lea.vmem %s388, %s766 [#allocation3]
                $region110: #{ncf_forward.1} parent=104 // loop_footer
                  %s628 = sadd.s32 %s626, 1
                $region111: #{ncf_forward.1} parent=104 // loop_footer_branch
                  %625 = sbr.rel target = $region107
                $region112: #{ncf_forward.1} parent=104 // loop_exit
                  _
                %s769 = sshrl.u32 %s621, 4
                %s770 = sand.u32 %s621, 15
                %s771 = smul.u32 %s769, 16
                %s772 = smul.u32 128, %s771
                %s773 = sshra.s32 %s772, 4
                %s774 = scalar_lea.vmem %s396, %s773
                %s775 = smul.u32 128, %s771
                %s776 = sshra.s32 %s775, 4
                %s777 = scalar_lea.vmem %s388, %s776 [#allocation3]
                // While loop
                $region113: #{ncf_forward.1} parent=104 // loop_pre_header
                  _
                $region114: #{ncf_forward.1} parent=104 // loop_header
                  %s781 = sphi 0, %s783
                  %p782 = scmp.ge.s32.totalorder %s781, %s770
                  %s786 = sphi 0, %s799
                  %s787 = sphi %s774, %s802
                  %s788 = sphi %s777, %s803
                $region115: #{ncf_forward.1} parent=104 // loop_header_branch
                  %785 = sbr.rel (%p782) target = $region119
                $region116: #{ncf_forward.1} parent=104 // loop_body
                  %v789 = vld [vmem:[%s787] sm:$0xff]
                  %790 = vst [vmem:[%s788] sm:$0xff] %v789
                  %v791 = vld [vmem:[%s787 + $0x18] sm:$0xff]
                  %792 = vst [vmem:[%s788 + $0x10] sm:$0xff] %v791
                  %v793 = vld [vmem:[%s787 + $0x30] sm:$0xff]
                  %794 = vst [vmem:[%s788 + $0x20] sm:$0xff] %v793
                  %v795 = vld [vmem:[%s787 + $0x48] sm:$0xff]
                  %796 = vst [vmem:[%s788 + $0x30] sm:$0xff] %v795
                  %s797 = sadd.s32 1, %s786
                  %p798 = scmp.ge.s32.totalorder %s797, %s770
                  %s799 = scalar_select %p798, 0, %s797
                  %s800 = smul.u32 %s799, 8
                  %s801 = smul.u32 %s799, 8
                  %s802 = scalar_lea.vmem %s774, %s800
                  %s803 = scalar_lea.vmem %s777, %s801 [#allocation3]
                $region117: #{ncf_forward.1} parent=104 // loop_footer
                  %s783 = sadd.s32 %s781, 1
                $region118: #{ncf_forward.1} parent=104 // loop_footer_branch
                  %780 = sbr.rel target = $region114
                $region119: #{ncf_forward.1} parent=104 // loop_exit
                  _
                %s804 = sshllo.u32 0, %s616
                loop: start=0, step=1, limit=1
                $region120: #{ncf_forward.1} parent=104 // loop_pre_header
                  _
                $region121: #{ncf_forward.1} parent=104 // loop_header
                  %s806 = sphi 0, %s810
                  %p807 = scmp.ge.s32.totalorder %s806, 1
                  %s811 = sphi %s618, %s618
                  %s812 = sphi %s620, %s620
                $region122: #{ncf_forward.1} parent=104 // loop_header_branch
                  %809 = sbr.rel (%p807) target = $region126
                $region123: #{ncf_forward.1} parent=104 // loop_body
                  %v813 = vld [vmem:[%s811] sm:%s804]
                  %814 = vst [vmem:[%s812] sm:%s804] %v813
                  %v815 = vld [vmem:[%s811 + $0x18] sm:%s804]
                  %816 = vst [vmem:[%s812 + $0x10] sm:%s804] %v815
                  %v817 = vld [vmem:[%s811 + $0x30] sm:%s804]
                  %818 = vst [vmem:[%s812 + $0x20] sm:%s804] %v817
                  %v819 = vld [vmem:[%s811 + $0x48] sm:%s804]
                  %820 = vst [vmem:[%s812 + $0x30] sm:%s804] %v819
                $region124: #{ncf_forward.1} parent=104 // loop_footer
                  %s810 = sadd.s32 1, %s806
                $region125: #{ncf_forward.1} parent=104 // loop_footer_branch
                  %805 = sbr.rel target = $region121
                $region126: #{ncf_forward.1} parent=104 // loop_exit
                  _
              $region105: #{ncf_forward.1} parent=71 // pred_fallthru
                _
            $region72: #{ncf_forward.1} parent=67 // pred_fallthru
              _
            // Predicated region
            $region73: #{ncf_forward.1} parent=67 // pred_check
              %p405 = pneg %p401
            $region74: #{ncf_forward.1} parent=67 // pred_check_branch
              %407 = sbr.rel (%p405) target = $region76
            $region75: #{ncf_forward.1} parent=67 // pred_region
              %s408 = sshllo.u32 0, %s397
              loop: start=0, step=1, limit=1
              $region77: #{ncf_forward.1} parent=75 // loop_pre_header
                _
              $region78: #{ncf_forward.1} parent=75 // loop_header
                %s410 = sphi 0, %s414
                %p411 = scmp.ge.s32.totalorder %s410, 1
                %s415 = sphi %s396, %s396
                %s416 = sphi %s388, %s388
              $region79: #{ncf_forward.1} parent=75 // loop_header_branch
                %413 = sbr.rel (%p411) target = $region83
              $region80: #{ncf_forward.1} parent=75 // loop_body
                %v417 = vld [vmem:[%s415] sm:%s408]
                %418 = vst [vmem:[%s416] sm:%s408] %v417
                %v419 = vld [vmem:[%s415 + $0x18] sm:%s408]
                %420 = vst [vmem:[%s416 + $0x10] sm:%s408] %v419
                %v421 = vld [vmem:[%s415 + $0x30] sm:%s408]
                %422 = vst [vmem:[%s416 + $0x20] sm:%s408] %v421
                %v423 = vld [vmem:[%s415 + $0x48] sm:%s408]
                %424 = vst [vmem:[%s416 + $0x30] sm:%s408] %v423
              $region81: #{ncf_forward.1} parent=75 // loop_footer
                %s414 = sadd.s32 1, %s410
              $region82: #{ncf_forward.1} parent=75 // loop_footer_branch
                %409 = sbr.rel target = $region78
              $region83: #{ncf_forward.1} parent=75 // loop_exit
                _
            $region76: #{ncf_forward.1} parent=67 // pred_fallthru
              _
          $region68: #{ncf_forward.1} parent=63 // pred_fallthru
            _
          %821 = vnop
        $region64: #{ncf_forward.1} parent=59 // pred_fallthru
          _
        // Predicated region
        $region127: #{ncf_forward.1} parent=59 // pred_check
          %p822 = pneg %p67
        $region128: #{ncf_forward.1} parent=59 // pred_check_branch
          %824 = sbr.rel (%p822) target = $region130
        $region129: #{ncf_forward.1} parent=59 // pred_region
          %s825 = sand.u32 %s57, 1
          %s826 = sand.u32 %s57, 1
          %s827 = smul.addr %s826, 48
          %s828 = scalar_lea.vmem [#allocation4], %s827
          %s829 = smul.u32 2, %s21
          %s830 = ssub.s32 3, %s829
          %p831 = scmp.lt.s32.totalorder %s830, 2
          %s832 = scalar_select %p831, %s830, 2
          %s833 = smul.u32 384, %s832
          %p834 = scmp.ne.s32.totalorder 0, %s833
          %s835 = smul.addr %s829, 8
          %s836 = scalar_lea.vmem %s1, %s835
          %s837 = smul.u32 %s832, 8
          // Predicated region
          $region131: #{ncf_forward.1} parent=129 // pred_check
            %p838 = pneg %p834
          $region132: #{ncf_forward.1} parent=129 // pred_check_branch
            %840 = sbr.rel (%p838) target = $region134
          $region133: #{ncf_forward.1} parent=129 // pred_region
            %p841 = scmp.lt.u32.totalorder %s837, 8
            %p842 = pneg %p841
            // Predicated region
            $region135: #{ncf_forward.1} parent=133 // pred_check
              _
            $region136: #{ncf_forward.1} parent=133 // pred_check_branch
              %844 = sbr.rel (%p841) target = $region138
            $region137: #{ncf_forward.1} parent=133 // pred_region
              %s863 = sand.u32 %s837, 7
              %p864 = scmp.eq.s32.totalorder %s863, 0
              // Predicated region
              $region150: #{ncf_forward.1} parent=137 // pred_check
                %p865 = pneg %p864
              $region151: #{ncf_forward.1} parent=137 // pred_check_branch
                %867 = sbr.rel (%p865) target = $region153
              $region152: #{ncf_forward.1} parent=137 // pred_region
                %s868 = sshrl.u32 %s837, 3
                %s869 = sdiv.u32.pop %s868, 24
                %s870 = srem.u32.pop %s868, 24
                // While loop
                $region154: #{ncf_forward.1} parent=152 // loop_pre_header
                  _
                $region155: #{ncf_forward.1} parent=152 // loop_header
                  %s874 = sphi 0, %s876
                  %p875 = scmp.ge.s32.totalorder %s874, %s869
                  %s879 = sphi 0, %s1028
                  %s880 = sphi %s836, %s1031
                  %s881 = sphi %s828, %s1032
                $region156: #{ncf_forward.1} parent=152 // loop_header_branch
                  %878 = sbr.rel (%p875) target = $region160
                $region157: #{ncf_forward.1} parent=152 // loop_body
                  %v882 = vld [vmem:[%s880] sm:$0xff]
                  %883 = vst [vmem:[%s881] sm:$0xff] %v882
                  %v884 = vld [vmem:[%s880 + $0x8] sm:$0xff]
                  %885 = vst [vmem:[%s881 + $0x8] sm:$0xff] %v884
                  %v886 = vld [vmem:[%s880 + $0x10] sm:$0xff]
                  %887 = vst [vmem:[%s881 + $0x10] sm:$0xff] %v886
                  %v888 = vld [vmem:[%s880 + $0x18] sm:$0xff]
                  %889 = vst [vmem:[%s881 + $0x18] sm:$0xff] %v888
                  %v890 = vld [vmem:[%s880 + $0x20] sm:$0xff]
                  %891 = vst [vmem:[%s881 + $0x20] sm:$0xff] %v890
                  %v892 = vld [vmem:[%s880 + $0x28] sm:$0xff]
                  %893 = vst [vmem:[%s881 + $0x28] sm:$0xff] %v892
                  %v894 = vld [vmem:[%s880 + $0x30] sm:$0xff]
                  %895 = vst [vmem:[%s881 + $0x30] sm:$0xff] %v894
                  %v896 = vld [vmem:[%s880 + $0x38] sm:$0xff]
                  %897 = vst [vmem:[%s881 + $0x38] sm:$0xff] %v896
                  %v898 = vld [vmem:[%s880 + $0x40] sm:$0xff]
                  %899 = vst [vmem:[%s881 + $0x40] sm:$0xff] %v898
                  %v900 = vld [vmem:[%s880 + $0x48] sm:$0xff]
                  %901 = vst [vmem:[%s881 + $0x48] sm:$0xff] %v900
                  %v902 = vld [vmem:[%s880 + $0x50] sm:$0xff]
                  %903 = vst [vmem:[%s881 + $0x50] sm:$0xff] %v902
                  %v904 = vld [vmem:[%s880 + $0x58] sm:$0xff]
                  %905 = vst [vmem:[%s881 + $0x58] sm:$0xff] %v904
                  %v906 = vld [vmem:[%s880 + $0x60] sm:$0xff]
                  %907 = vst [vmem:[%s881 + $0x60] sm:$0xff] %v906
                  %v908 = vld [vmem:[%s880 + $0x68] sm:$0xff]
                  %909 = vst [vmem:[%s881 + $0x68] sm:$0xff] %v908
                  %v910 = vld [vmem:[%s880 + $0x70] sm:$0xff]
                  %911 = vst [vmem:[%s881 + $0x70] sm:$0xff] %v910
                  %v912 = vld [vmem:[%s880 + $0x78] sm:$0xff]
                  %913 = vst [vmem:[%s881 + $0x78] sm:$0xff] %v912
                  %v914 = vld [vmem:[%s880 + $0x80] sm:$0xff]
                  %915 = vst [vmem:[%s881 + $0x80] sm:$0xff] %v914
                  %v916 = vld [vmem:[%s880 + $0x88] sm:$0xff]
                  %917 = vst [vmem:[%s881 + $0x88] sm:$0xff] %v916
                  %v918 = vld [vmem:[%s880 + $0x90] sm:$0xff]
                  %919 = vst [vmem:[%s881 + $0x90] sm:$0xff] %v918
                  %v920 = vld [vmem:[%s880 + $0x98] sm:$0xff]
                  %921 = vst [vmem:[%s881 + $0x98] sm:$0xff] %v920
                  %v922 = vld [vmem:[%s880 + $0xa0] sm:$0xff]
                  %923 = vst [vmem:[%s881 + $0xa0] sm:$0xff] %v922
                  %v924 = vld [vmem:[%s880 + $0xa8] sm:$0xff]
                  %925 = vst [vmem:[%s881 + $0xa8] sm:$0xff] %v924
                  %v926 = vld [vmem:[%s880 + $0xb0] sm:$0xff]
                  %927 = vst [vmem:[%s881 + $0xb0] sm:$0xff] %v926
                  %v928 = vld [vmem:[%s880 + $0xb8] sm:$0xff]
                  %929 = vst [vmem:[%s881 + $0xb8] sm:$0xff] %v928
                  %v930 = vld [vmem:[%s880 + $0x18] sm:$0xff]
                  %931 = vst [vmem:[%s881 + $0x10] sm:$0xff] %v930
                  %v932 = vld [vmem:[%s880 + $0x20] sm:$0xff]
                  %933 = vst [vmem:[%s881 + $0x18] sm:$0xff] %v932
                  %v934 = vld [vmem:[%s880 + $0x28] sm:$0xff]
                  %935 = vst [vmem:[%s881 + $0x20] sm:$0xff] %v934
                  %v936 = vld [vmem:[%s880 + $0x30] sm:$0xff]
                  %937 = vst [vmem:[%s881 + $0x28] sm:$0xff] %v936
                  %v938 = vld [vmem:[%s880 + $0x38] sm:$0xff]
                  %939 = vst [vmem:[%s881 + $0x30] sm:$0xff] %v938
                  %v940 = vld [vmem:[%s880 + $0x40] sm:$0xff]
                  %941 = vst [vmem:[%s881 + $0x38] sm:$0xff] %v940
                  %v942 = vld [vmem:[%s880 + $0x48] sm:$0xff]
                  %943 = vst [vmem:[%s881 + $0x40] sm:$0xff] %v942
                  %v944 = vld [vmem:[%s880 + $0x50] sm:$0xff]
                  %945 = vst [vmem:[%s881 + $0x48] sm:$0xff] %v944
                  %v946 = vld [vmem:[%s880 + $0x58] sm:$0xff]
                  %947 = vst [vmem:[%s881 + $0x50] sm:$0xff] %v946
                  %v948 = vld [vmem:[%s880 + $0x60] sm:$0xff]
                  %949 = vst [vmem:[%s881 + $0x58] sm:$0xff] %v948
                  %v950 = vld [vmem:[%s880 + $0x68] sm:$0xff]
                  %951 = vst [vmem:[%s881 + $0x60] sm:$0xff] %v950
                  %v952 = vld [vmem:[%s880 + $0x70] sm:$0xff]
                  %953 = vst [vmem:[%s881 + $0x68] sm:$0xff] %v952
                  %v954 = vld [vmem:[%s880 + $0x78] sm:$0xff]
                  %955 = vst [vmem:[%s881 + $0x70] sm:$0xff] %v954
                  %v956 = vld [vmem:[%s880 + $0x80] sm:$0xff]
                  %957 = vst [vmem:[%s881 + $0x78] sm:$0xff] %v956
                  %v958 = vld [vmem:[%s880 + $0x88] sm:$0xff]
                  %959 = vst [vmem:[%s881 + $0x80] sm:$0xff] %v958
                  %v960 = vld [vmem:[%s880 + $0x90] sm:$0xff]
                  %961 = vst [vmem:[%s881 + $0x88] sm:$0xff] %v960
                  %v962 = vld [vmem:[%s880 + $0x98] sm:$0xff]
                  %963 = vst [vmem:[%s881 + $0x90] sm:$0xff] %v962
                  %v964 = vld [vmem:[%s880 + $0xa0] sm:$0xff]
                  %965 = vst [vmem:[%s881 + $0x98] sm:$0xff] %v964
                  %v966 = vld [vmem:[%s880 + $0xa8] sm:$0xff]
                  %967 = vst [vmem:[%s881 + $0xa0] sm:$0xff] %v966
                  %v968 = vld [vmem:[%s880 + $0xb0] sm:$0xff]
                  %969 = vst [vmem:[%s881 + $0xa8] sm:$0xff] %v968
                  %v970 = vld [vmem:[%s880 + $0xb8] sm:$0xff]
                  %971 = vst [vmem:[%s881 + $0xb0] sm:$0xff] %v970
                  %v972 = vld [vmem:[%s880 + $0xc0] sm:$0xff]
                  %973 = vst [vmem:[%s881 + $0xb8] sm:$0xff] %v972
                  %v974 = vld [vmem:[%s880 + $0xc8] sm:$0xff]
                  %975 = vst [vmem:[%s881 + $0xc0] sm:$0xff] %v974
                  %v976 = vld [vmem:[%s880 + $0xd0] sm:$0xff]
                  %977 = vst [vmem:[%s881 + $0xc8] sm:$0xff] %v976
                  %v978 = vld [vmem:[%s880 + $0x30] sm:$0xff]
                  %979 = vst [vmem:[%s881 + $0x20] sm:$0xff] %v978
                  %v980 = vld [vmem:[%s880 + $0x38] sm:$0xff]
                  %981 = vst [vmem:[%s881 + $0x28] sm:$0xff] %v980
                  %v982 = vld [vmem:[%s880 + $0x40] sm:$0xff]
                  %983 = vst [vmem:[%s881 + $0x30] sm:$0xff] %v982
                  %v984 = vld [vmem:[%s880 + $0x48] sm:$0xff]
                  %985 = vst [vmem:[%s881 + $0x38] sm:$0xff] %v984
                  %v986 = vld [vmem:[%s880 + $0x50] sm:$0xff]
                  %987 = vst [vmem:[%s881 + $0x40] sm:$0xff] %v986
                  %v988 = vld [vmem:[%s880 + $0x58] sm:$0xff]
                  %989 = vst [vmem:[%s881 + $0x48] sm:$0xff] %v988
                  %v990 = vld [vmem:[%s880 + $0x60] sm:$0xff]
                  %991 = vst [vmem:[%s881 + $0x50] sm:$0xff] %v990
                  %v992 = vld [vmem:[%s880 + $0x68] sm:$0xff]
                  %993 = vst [vmem:[%s881 + $0x58] sm:$0xff] %v992
                  %v994 = vld [vmem:[%s880 + $0x70] sm:$0xff]
                  %995 = vst [vmem:[%s881 + $0x60] sm:$0xff] %v994
                  %v996 = vld [vmem:[%s880 + $0x78] sm:$0xff]
                  %997 = vst [vmem:[%s881 + $0x68] sm:$0xff] %v996
                  %v998 = vld [vmem:[%s880 + $0x80] sm:$0xff]
                  %999 = vst [vmem:[%s881 + $0x70] sm:$0xff] %v998
                  %v1000 = vld [vmem:[%s880 + $0x88] sm:$0xff]
                  %1001 = vst [vmem:[%s881 + $0x78] sm:$0xff] %v1000
                  %v1002 = vld [vmem:[%s880 + $0x90] sm:$0xff]
                  %1003 = vst [vmem:[%s881 + $0x80] sm:$0xff] %v1002
                  %v1004 = vld [vmem:[%s880 + $0x98] sm:$0xff]
                  %1005 = vst [vmem:[%s881 + $0x88] sm:$0xff] %v1004
                  %v1006 = vld [vmem:[%s880 + $0xa0] sm:$0xff]
                  %1007 = vst [vmem:[%s881 + $0x90] sm:$0xff] %v1006
                  %v1008 = vld [vmem:[%s880 + $0xa8] sm:$0xff]
                  %1009 = vst [vmem:[%s881 + $0x98] sm:$0xff] %v1008
                  %v1010 = vld [vmem:[%s880 + $0xb0] sm:$0xff]
                  %1011 = vst [vmem:[%s881 + $0xa0] sm:$0xff] %v1010
                  %v1012 = vld [vmem:[%s880 + $0xb8] sm:$0xff]
                  %1013 = vst [vmem:[%s881 + $0xa8] sm:$0xff] %v1012
                  %v1014 = vld [vmem:[%s880 + $0xc0] sm:$0xff]
                  %1015 = vst [vmem:[%s881 + $0xb0] sm:$0xff] %v1014
                  %v1016 = vld [vmem:[%s880 + $0xc8] sm:$0xff]
                  %1017 = vst [vmem:[%s881 + $0xb8] sm:$0xff] %v1016
                  %v1018 = vld [vmem:[%s880 + $0xd0] sm:$0xff]
                  %1019 = vst [vmem:[%s881 + $0xc0] sm:$0xff] %v1018
                  %v1020 = vld [vmem:[%s880 + $0xd8] sm:$0xff]
                  %1021 = vst [vmem:[%s881 + $0xc8] sm:$0xff] %v1020
                  %v1022 = vld [vmem:[%s880 + $0xe0] sm:$0xff]
                  %1023 = vst [vmem:[%s881 + $0xd0] sm:$0xff] %v1022
                  %v1024 = vld [vmem:[%s880 + $0xe8] sm:$0xff]
                  %1025 = vst [vmem:[%s881 + $0xd8] sm:$0xff] %v1024
                  %s1026 = sadd.s32 1, %s879
                  %p1027 = scmp.ge.s32.totalorder %s1026, %s869
                  %s1028 = scalar_select %p1027, 0, %s1026
                  %s1029 = smul.u32 %s1028, 192
                  %s1030 = smul.u32 %s1028, 192
                  %s1031 = scalar_lea.vmem %s836, %s1029
                  %s1032 = scalar_lea.vmem %s828, %s1030 [#allocation4]
                $region158: #{ncf_forward.1} parent=152 // loop_footer
                  %s876 = sadd.s32 %s874, 1
                $region159: #{ncf_forward.1} parent=152 // loop_footer_branch
                  %873 = sbr.rel target = $region155
                $region160: #{ncf_forward.1} parent=152 // loop_exit
                  _
                %s1033 = sdiv.u32.pop %s868, 24
                %s1034 = srem.u32.pop %s868, 24
                %s1035 = smul.u32 %s1033, 24
                %s1036 = smul.u32 128, %s1035
                %s1037 = sshra.s32 %s1036, 4
                %s1038 = scalar_lea.vmem %s836, %s1037
                %s1039 = smul.u32 128, %s1035
                %s1040 = sshra.s32 %s1039, 4
                %s1041 = scalar_lea.vmem %s828, %s1040 [#allocation4]
                // While loop
                $region161: #{ncf_forward.1} parent=152 // loop_pre_header
                  _
                $region162: #{ncf_forward.1} parent=152 // loop_header
                  %s1045 = sphi 0, %s1047
                  %p1046 = scmp.ge.s32.totalorder %s1045, %s1034
                  %s1050 = sphi 0, %s1061
                  %s1051 = sphi %s1038, %s1064
                  %s1052 = sphi %s1041, %s1065
                $region163: #{ncf_forward.1} parent=152 // loop_header_branch
                  %1049 = sbr.rel (%p1046) target = $region167
                $region164: #{ncf_forward.1} parent=152 // loop_body
                  %v1053 = vld [vmem:[%s1051] sm:$0xff]
                  %1054 = vst [vmem:[%s1052] sm:$0xff] %v1053
                  %v1055 = vld [vmem:[%s1051 + $0x18] sm:$0xff]
                  %1056 = vst [vmem:[%s1052 + $0x10] sm:$0xff] %v1055
                  %v1057 = vld [vmem:[%s1051 + $0x30] sm:$0xff]
                  %1058 = vst [vmem:[%s1052 + $0x20] sm:$0xff] %v1057
                  %s1059 = sadd.s32 1, %s1050
                  %p1060 = scmp.ge.s32.totalorder %s1059, %s1034
                  %s1061 = scalar_select %p1060, 0, %s1059
                  %s1062 = smul.u32 %s1061, 8
                  %s1063 = smul.u32 %s1061, 8
                  %s1064 = scalar_lea.vmem %s1038, %s1062
                  %s1065 = scalar_lea.vmem %s1041, %s1063 [#allocation4]
                $region165: #{ncf_forward.1} parent=152 // loop_footer
                  %s1047 = sadd.s32 %s1045, 1
                $region166: #{ncf_forward.1} parent=152 // loop_footer_branch
                  %1044 = sbr.rel target = $region162
                $region167: #{ncf_forward.1} parent=152 // loop_exit
                  _
              $region153: #{ncf_forward.1} parent=137 // pred_fallthru
                _
              %p1066 = pneg %p864
              // Predicated region
              $region168: #{ncf_forward.1} parent=137 // pred_check
                _
              $region169: #{ncf_forward.1} parent=137 // pred_check_branch
                %1068 = sbr.rel (%p864) target = $region171
              $region170: #{ncf_forward.1} parent=137 // pred_region
                %s1069 = sand.u32 %s837, 7
                %s1070 = ssub.s32 %s837, %s1069
                %s1071 = scalar_lea.vmem %s836, %s1070
                %s1072 = ssub.s32 %s837, %s1069
                %s1073 = scalar_lea.vmem %s828, %s1072 [#allocation4]
                %s1074 = sshrl.u32 %s837, 3
                %s1075 = sdiv.u32.pop %s1074, 24
                %s1076 = srem.u32.pop %s1074, 24
                // While loop
                $region172: #{ncf_forward.1} parent=170 // loop_pre_header
                  _
                $region173: #{ncf_forward.1} parent=170 // loop_header
                  %s1080 = sphi 0, %s1082
                  %p1081 = scmp.ge.s32.totalorder %s1080, %s1075
                  %s1085 = sphi 0, %s1234
                  %s1086 = sphi %s836, %s1237
                  %s1087 = sphi %s828, %s1238
                $region174: #{ncf_forward.1} parent=170 // loop_header_branch
                  %1084 = sbr.rel (%p1081) target = $region178
                $region175: #{ncf_forward.1} parent=170 // loop_body
                  %v1088 = vld [vmem:[%s1086] sm:$0xff]
                  %1089 = vst [vmem:[%s1087] sm:$0xff] %v1088
                  %v1090 = vld [vmem:[%s1086 + $0x8] sm:$0xff]
                  %1091 = vst [vmem:[%s1087 + $0x8] sm:$0xff] %v1090
                  %v1092 = vld [vmem:[%s1086 + $0x10] sm:$0xff]
                  %1093 = vst [vmem:[%s1087 + $0x10] sm:$0xff] %v1092
                  %v1094 = vld [vmem:[%s1086 + $0x18] sm:$0xff]
                  %1095 = vst [vmem:[%s1087 + $0x18] sm:$0xff] %v1094
                  %v1096 = vld [vmem:[%s1086 + $0x20] sm:$0xff]
                  %1097 = vst [vmem:[%s1087 + $0x20] sm:$0xff] %v1096
                  %v1098 = vld [vmem:[%s1086 + $0x28] sm:$0xff]
                  %1099 = vst [vmem:[%s1087 + $0x28] sm:$0xff] %v1098
                  %v1100 = vld [vmem:[%s1086 + $0x30] sm:$0xff]
                  %1101 = vst [vmem:[%s1087 + $0x30] sm:$0xff] %v1100
                  %v1102 = vld [vmem:[%s1086 + $0x38] sm:$0xff]
                  %1103 = vst [vmem:[%s1087 + $0x38] sm:$0xff] %v1102
                  %v1104 = vld [vmem:[%s1086 + $0x40] sm:$0xff]
                  %1105 = vst [vmem:[%s1087 + $0x40] sm:$0xff] %v1104
                  %v1106 = vld [vmem:[%s1086 + $0x48] sm:$0xff]
                  %1107 = vst [vmem:[%s1087 + $0x48] sm:$0xff] %v1106
                  %v1108 = vld [vmem:[%s1086 + $0x50] sm:$0xff]
                  %1109 = vst [vmem:[%s1087 + $0x50] sm:$0xff] %v1108
                  %v1110 = vld [vmem:[%s1086 + $0x58] sm:$0xff]
                  %1111 = vst [vmem:[%s1087 + $0x58] sm:$0xff] %v1110
                  %v1112 = vld [vmem:[%s1086 + $0x60] sm:$0xff]
                  %1113 = vst [vmem:[%s1087 + $0x60] sm:$0xff] %v1112
                  %v1114 = vld [vmem:[%s1086 + $0x68] sm:$0xff]
                  %1115 = vst [vmem:[%s1087 + $0x68] sm:$0xff] %v1114
                  %v1116 = vld [vmem:[%s1086 + $0x70] sm:$0xff]
                  %1117 = vst [vmem:[%s1087 + $0x70] sm:$0xff] %v1116
                  %v1118 = vld [vmem:[%s1086 + $0x78] sm:$0xff]
                  %1119 = vst [vmem:[%s1087 + $0x78] sm:$0xff] %v1118
                  %v1120 = vld [vmem:[%s1086 + $0x80] sm:$0xff]
                  %1121 = vst [vmem:[%s1087 + $0x80] sm:$0xff] %v1120
                  %v1122 = vld [vmem:[%s1086 + $0x88] sm:$0xff]
                  %1123 = vst [vmem:[%s1087 + $0x88] sm:$0xff] %v1122
                  %v1124 = vld [vmem:[%s1086 + $0x90] sm:$0xff]
                  %1125 = vst [vmem:[%s1087 + $0x90] sm:$0xff] %v1124
                  %v1126 = vld [vmem:[%s1086 + $0x98] sm:$0xff]
                  %1127 = vst [vmem:[%s1087 + $0x98] sm:$0xff] %v1126
                  %v1128 = vld [vmem:[%s1086 + $0xa0] sm:$0xff]
                  %1129 = vst [vmem:[%s1087 + $0xa0] sm:$0xff] %v1128
                  %v1130 = vld [vmem:[%s1086 + $0xa8] sm:$0xff]
                  %1131 = vst [vmem:[%s1087 + $0xa8] sm:$0xff] %v1130
                  %v1132 = vld [vmem:[%s1086 + $0xb0] sm:$0xff]
                  %1133 = vst [vmem:[%s1087 + $0xb0] sm:$0xff] %v1132
                  %v1134 = vld [vmem:[%s1086 + $0xb8] sm:$0xff]
                  %1135 = vst [vmem:[%s1087 + $0xb8] sm:$0xff] %v1134
                  %v1136 = vld [vmem:[%s1086 + $0x18] sm:$0xff]
                  %1137 = vst [vmem:[%s1087 + $0x10] sm:$0xff] %v1136
                  %v1138 = vld [vmem:[%s1086 + $0x20] sm:$0xff]
                  %1139 = vst [vmem:[%s1087 + $0x18] sm:$0xff] %v1138
                  %v1140 = vld [vmem:[%s1086 + $0x28] sm:$0xff]
                  %1141 = vst [vmem:[%s1087 + $0x20] sm:$0xff] %v1140
                  %v1142 = vld [vmem:[%s1086 + $0x30] sm:$0xff]
                  %1143 = vst [vmem:[%s1087 + $0x28] sm:$0xff] %v1142
                  %v1144 = vld [vmem:[%s1086 + $0x38] sm:$0xff]
                  %1145 = vst [vmem:[%s1087 + $0x30] sm:$0xff] %v1144
                  %v1146 = vld [vmem:[%s1086 + $0x40] sm:$0xff]
                  %1147 = vst [vmem:[%s1087 + $0x38] sm:$0xff] %v1146
                  %v1148 = vld [vmem:[%s1086 + $0x48] sm:$0xff]
                  %1149 = vst [vmem:[%s1087 + $0x40] sm:$0xff] %v1148
                  %v1150 = vld [vmem:[%s1086 + $0x50] sm:$0xff]
                  %1151 = vst [vmem:[%s1087 + $0x48] sm:$0xff] %v1150
                  %v1152 = vld [vmem:[%s1086 + $0x58] sm:$0xff]
                  %1153 = vst [vmem:[%s1087 + $0x50] sm:$0xff] %v1152
                  %v1154 = vld [vmem:[%s1086 + $0x60] sm:$0xff]
                  %1155 = vst [vmem:[%s1087 + $0x58] sm:$0xff] %v1154
                  %v1156 = vld [vmem:[%s1086 + $0x68] sm:$0xff]
                  %1157 = vst [vmem:[%s1087 + $0x60] sm:$0xff] %v1156
                  %v1158 = vld [vmem:[%s1086 + $0x70] sm:$0xff]
                  %1159 = vst [vmem:[%s1087 + $0x68] sm:$0xff] %v1158
                  %v1160 = vld [vmem:[%s1086 + $0x78] sm:$0xff]
                  %1161 = vst [vmem:[%s1087 + $0x70] sm:$0xff] %v1160
                  %v1162 = vld [vmem:[%s1086 + $0x80] sm:$0xff]
                  %1163 = vst [vmem:[%s1087 + $0x78] sm:$0xff] %v1162
                  %v1164 = vld [vmem:[%s1086 + $0x88] sm:$0xff]
                  %1165 = vst [vmem:[%s1087 + $0x80] sm:$0xff] %v1164
                  %v1166 = vld [vmem:[%s1086 + $0x90] sm:$0xff]
                  %1167 = vst [vmem:[%s1087 + $0x88] sm:$0xff] %v1166
                  %v1168 = vld [vmem:[%s1086 + $0x98] sm:$0xff]
                  %1169 = vst [vmem:[%s1087 + $0x90] sm:$0xff] %v1168
                  %v1170 = vld [vmem:[%s1086 + $0xa0] sm:$0xff]
                  %1171 = vst [vmem:[%s1087 + $0x98] sm:$0xff] %v1170
                  %v1172 = vld [vmem:[%s1086 + $0xa8] sm:$0xff]
                  %1173 = vst [vmem:[%s1087 + $0xa0] sm:$0xff] %v1172
                  %v1174 = vld [vmem:[%s1086 + $0xb0] sm:$0xff]
                  %1175 = vst [vmem:[%s1087 + $0xa8] sm:$0xff] %v1174
                  %v1176 = vld [vmem:[%s1086 + $0xb8] sm:$0xff]
                  %1177 = vst [vmem:[%s1087 + $0xb0] sm:$0xff] %v1176
                  %v1178 = vld [vmem:[%s1086 + $0xc0] sm:$0xff]
                  %1179 = vst [vmem:[%s1087 + $0xb8] sm:$0xff] %v1178
                  %v1180 = vld [vmem:[%s1086 + $0xc8] sm:$0xff]
                  %1181 = vst [vmem:[%s1087 + $0xc0] sm:$0xff] %v1180
                  %v1182 = vld [vmem:[%s1086 + $0xd0] sm:$0xff]
                  %1183 = vst [vmem:[%s1087 + $0xc8] sm:$0xff] %v1182
                  %v1184 = vld [vmem:[%s1086 + $0x30] sm:$0xff]
                  %1185 = vst [vmem:[%s1087 + $0x20] sm:$0xff] %v1184
                  %v1186 = vld [vmem:[%s1086 + $0x38] sm:$0xff]
                  %1187 = vst [vmem:[%s1087 + $0x28] sm:$0xff] %v1186
                  %v1188 = vld [vmem:[%s1086 + $0x40] sm:$0xff]
                  %1189 = vst [vmem:[%s1087 + $0x30] sm:$0xff] %v1188
                  %v1190 = vld [vmem:[%s1086 + $0x48] sm:$0xff]
                  %1191 = vst [vmem:[%s1087 + $0x38] sm:$0xff] %v1190
                  %v1192 = vld [vmem:[%s1086 + $0x50] sm:$0xff]
                  %1193 = vst [vmem:[%s1087 + $0x40] sm:$0xff] %v1192
                  %v1194 = vld [vmem:[%s1086 + $0x58] sm:$0xff]
                  %1195 = vst [vmem:[%s1087 + $0x48] sm:$0xff] %v1194
                  %v1196 = vld [vmem:[%s1086 + $0x60] sm:$0xff]
                  %1197 = vst [vmem:[%s1087 + $0x50] sm:$0xff] %v1196
                  %v1198 = vld [vmem:[%s1086 + $0x68] sm:$0xff]
                  %1199 = vst [vmem:[%s1087 + $0x58] sm:$0xff] %v1198
                  %v1200 = vld [vmem:[%s1086 + $0x70] sm:$0xff]
                  %1201 = vst [vmem:[%s1087 + $0x60] sm:$0xff] %v1200
                  %v1202 = vld [vmem:[%s1086 + $0x78] sm:$0xff]
                  %1203 = vst [vmem:[%s1087 + $0x68] sm:$0xff] %v1202
                  %v1204 = vld [vmem:[%s1086 + $0x80] sm:$0xff]
                  %1205 = vst [vmem:[%s1087 + $0x70] sm:$0xff] %v1204
                  %v1206 = vld [vmem:[%s1086 + $0x88] sm:$0xff]
                  %1207 = vst [vmem:[%s1087 + $0x78] sm:$0xff] %v1206
                  %v1208 = vld [vmem:[%s1086 + $0x90] sm:$0xff]
                  %1209 = vst [vmem:[%s1087 + $0x80] sm:$0xff] %v1208
                  %v1210 = vld [vmem:[%s1086 + $0x98] sm:$0xff]
                  %1211 = vst [vmem:[%s1087 + $0x88] sm:$0xff] %v1210
                  %v1212 = vld [vmem:[%s1086 + $0xa0] sm:$0xff]
                  %1213 = vst [vmem:[%s1087 + $0x90] sm:$0xff] %v1212
                  %v1214 = vld [vmem:[%s1086 + $0xa8] sm:$0xff]
                  %1215 = vst [vmem:[%s1087 + $0x98] sm:$0xff] %v1214
                  %v1216 = vld [vmem:[%s1086 + $0xb0] sm:$0xff]
                  %1217 = vst [vmem:[%s1087 + $0xa0] sm:$0xff] %v1216
                  %v1218 = vld [vmem:[%s1086 + $0xb8] sm:$0xff]
                  %1219 = vst [vmem:[%s1087 + $0xa8] sm:$0xff] %v1218
                  %v1220 = vld [vmem:[%s1086 + $0xc0] sm:$0xff]
                  %1221 = vst [vmem:[%s1087 + $0xb0] sm:$0xff] %v1220
                  %v1222 = vld [vmem:[%s1086 + $0xc8] sm:$0xff]
                  %1223 = vst [vmem:[%s1087 + $0xb8] sm:$0xff] %v1222
                  %v1224 = vld [vmem:[%s1086 + $0xd0] sm:$0xff]
                  %1225 = vst [vmem:[%s1087 + $0xc0] sm:$0xff] %v1224
                  %v1226 = vld [vmem:[%s1086 + $0xd8] sm:$0xff]
                  %1227 = vst [vmem:[%s1087 + $0xc8] sm:$0xff] %v1226
                  %v1228 = vld [vmem:[%s1086 + $0xe0] sm:$0xff]
                  %1229 = vst [vmem:[%s1087 + $0xd0] sm:$0xff] %v1228
                  %v1230 = vld [vmem:[%s1086 + $0xe8] sm:$0xff]
                  %1231 = vst [vmem:[%s1087 + $0xd8] sm:$0xff] %v1230
                  %s1232 = sadd.s32 1, %s1085
                  %p1233 = scmp.ge.s32.totalorder %s1232, %s1075
                  %s1234 = scalar_select %p1233, 0, %s1232
                  %s1235 = smul.u32 %s1234, 192
                  %s1236 = smul.u32 %s1234, 192
                  %s1237 = scalar_lea.vmem %s836, %s1235
                  %s1238 = scalar_lea.vmem %s828, %s1236 [#allocation4]
                $region176: #{ncf_forward.1} parent=170 // loop_footer
                  %s1082 = sadd.s32 %s1080, 1
                $region177: #{ncf_forward.1} parent=170 // loop_footer_branch
                  %1079 = sbr.rel target = $region173
                $region178: #{ncf_forward.1} parent=170 // loop_exit
                  _
                %s1239 = sdiv.u32.pop %s1074, 24
                %s1240 = srem.u32.pop %s1074, 24
                %s1241 = smul.u32 %s1239, 24
                %s1242 = smul.u32 128, %s1241
                %s1243 = sshra.s32 %s1242, 4
                %s1244 = scalar_lea.vmem %s836, %s1243
                %s1245 = smul.u32 128, %s1241
                %s1246 = sshra.s32 %s1245, 4
                %s1247 = scalar_lea.vmem %s828, %s1246 [#allocation4]
                // While loop
                $region179: #{ncf_forward.1} parent=170 // loop_pre_header
                  _
                $region180: #{ncf_forward.1} parent=170 // loop_header
                  %s1251 = sphi 0, %s1253
                  %p1252 = scmp.ge.s32.totalorder %s1251, %s1240
                  %s1256 = sphi 0, %s1267
                  %s1257 = sphi %s1244, %s1270
                  %s1258 = sphi %s1247, %s1271
                $region181: #{ncf_forward.1} parent=170 // loop_header_branch
                  %1255 = sbr.rel (%p1252) target = $region185
                $region182: #{ncf_forward.1} parent=170 // loop_body
                  %v1259 = vld [vmem:[%s1257] sm:$0xff]
                  %1260 = vst [vmem:[%s1258] sm:$0xff] %v1259
                  %v1261 = vld [vmem:[%s1257 + $0x18] sm:$0xff]
                  %1262 = vst [vmem:[%s1258 + $0x10] sm:$0xff] %v1261
                  %v1263 = vld [vmem:[%s1257 + $0x30] sm:$0xff]
                  %1264 = vst [vmem:[%s1258 + $0x20] sm:$0xff] %v1263
                  %s1265 = sadd.s32 1, %s1256
                  %p1266 = scmp.ge.s32.totalorder %s1265, %s1240
                  %s1267 = scalar_select %p1266, 0, %s1265
                  %s1268 = smul.u32 %s1267, 8
                  %s1269 = smul.u32 %s1267, 8
                  %s1270 = scalar_lea.vmem %s1244, %s1268
                  %s1271 = scalar_lea.vmem %s1247, %s1269 [#allocation4]
                $region183: #{ncf_forward.1} parent=170 // loop_footer
                  %s1253 = sadd.s32 %s1251, 1
                $region184: #{ncf_forward.1} parent=170 // loop_footer_branch
                  %1250 = sbr.rel target = $region180
                $region185: #{ncf_forward.1} parent=170 // loop_exit
                  _
                %s1272 = sshllo.u32 0, %s1069
                loop: start=0, step=1, limit=1
                $region186: #{ncf_forward.1} parent=170 // loop_pre_header
                  _
                $region187: #{ncf_forward.1} parent=170 // loop_header
                  %s1274 = sphi 0, %s1278
                  %p1275 = scmp.ge.s32.totalorder %s1274, 1
                  %s1279 = sphi %s1071, %s1071
                  %s1280 = sphi %s1073, %s1073
                $region188: #{ncf_forward.1} parent=170 // loop_header_branch
                  %1277 = sbr.rel (%p1275) target = $region192
                $region189: #{ncf_forward.1} parent=170 // loop_body
                  %v1281 = vld [vmem:[%s1279] sm:%s1272]
                  %1282 = vst [vmem:[%s1280] sm:%s1272] %v1281
                  %v1283 = vld [vmem:[%s1279 + $0x18] sm:%s1272]
                  %1284 = vst [vmem:[%s1280 + $0x10] sm:%s1272] %v1283
                  %v1285 = vld [vmem:[%s1279 + $0x30] sm:%s1272]
                  %1286 = vst [vmem:[%s1280 + $0x20] sm:%s1272] %v1285
                $region190: #{ncf_forward.1} parent=170 // loop_footer
                  %s1278 = sadd.s32 1, %s1274
                $region191: #{ncf_forward.1} parent=170 // loop_footer_branch
                  %1273 = sbr.rel target = $region187
                $region192: #{ncf_forward.1} parent=170 // loop_exit
                  _
              $region171: #{ncf_forward.1} parent=137 // pred_fallthru
                _
            $region138: #{ncf_forward.1} parent=133 // pred_fallthru
              _
            // Predicated region
            $region139: #{ncf_forward.1} parent=133 // pred_check
              %p845 = pneg %p841
            $region140: #{ncf_forward.1} parent=133 // pred_check_branch
              %847 = sbr.rel (%p845) target = $region142
            $region141: #{ncf_forward.1} parent=133 // pred_region
              %s848 = sshllo.u32 0, %s837
              loop: start=0, step=1, limit=1
              $region143: #{ncf_forward.1} parent=141 // loop_pre_header
                _
              $region144: #{ncf_forward.1} parent=141 // loop_header
                %s850 = sphi 0, %s854
                %p851 = scmp.ge.s32.totalorder %s850, 1
                %s855 = sphi %s836, %s836
                %s856 = sphi %s828, %s828
              $region145: #{ncf_forward.1} parent=141 // loop_header_branch
                %853 = sbr.rel (%p851) target = $region149
              $region146: #{ncf_forward.1} parent=141 // loop_body
                %v857 = vld [vmem:[%s855] sm:%s848]
                %858 = vst [vmem:[%s856] sm:%s848] %v857
                %v859 = vld [vmem:[%s855 + $0x18] sm:%s848]
                %860 = vst [vmem:[%s856 + $0x10] sm:%s848] %v859
                %v861 = vld [vmem:[%s855 + $0x30] sm:%s848]
                %862 = vst [vmem:[%s856 + $0x20] sm:%s848] %v861
              $region147: #{ncf_forward.1} parent=141 // loop_footer
                %s854 = sadd.s32 1, %s850
              $region148: #{ncf_forward.1} parent=141 // loop_footer_branch
                %849 = sbr.rel target = $region144
              $region149: #{ncf_forward.1} parent=141 // loop_exit
                _
            $region142: #{ncf_forward.1} parent=133 // pred_fallthru
              _
          $region134: #{ncf_forward.1} parent=129 // pred_fallthru
            _
          %1287 = vnop
        $region130: #{ncf_forward.1} parent=59 // pred_fallthru
          _
      $region60: #{ncf_forward.1} parent=5 // pred_fallthru
        _
      %p1288 = scmp.le.s32.totalorder 1, %s21
      %p1289 = scmp.lt.s32.totalorder %s21, 3
      %p1290 = pnand %p1288, %p1289
      %p1291 = pneg %p1290
      // Predicated region
      $region193: #{ncf_forward.1} parent=5 // pred_check
        _
      $region194: #{ncf_forward.1} parent=5 // pred_check_branch
        %1293 = sbr.rel (%p1290) target = $region196
      $region195: #{ncf_forward.1} parent=5 // pred_region
        %s1294 = ssub.s32 %s21, 1
        %s1295 = sand.u32 %s34, 1
        %s1296 = sand.u32 %s34, 1
        %s1297 = smul.addr %s1296, 64
        %s1298 = scalar_lea.vmem [#allocation3], %s1297
        // Predicated region
        $region197: #{ncf_forward.1} parent=195 // pred_check
          %p1299 = pneg %p47
        $region198: #{ncf_forward.1} parent=195 // pred_check_branch
          %1301 = sbr.rel (%p1299) target = $region200
        $region199: #{ncf_forward.1} parent=195 // pred_region
          _
        $region200: #{ncf_forward.1} parent=195 // pred_fallthru
          _
        %s1302 = sand.u32 %s60, 1
        %s1303 = sand.u32 %s60, 1
        %s1304 = smul.addr %s1303, 48
        %s1305 = scalar_lea.vmem [#allocation4], %s1304
        // Predicated region
        $region201: #{ncf_forward.1} parent=195 // pred_check
          %p1306 = pneg %p73
        $region202: #{ncf_forward.1} parent=195 // pred_check_branch
          %1308 = sbr.rel (%p1306) target = $region204
        $region203: #{ncf_forward.1} parent=195 // pred_region
          _
        $region204: #{ncf_forward.1} parent=195 // pred_fallthru
          _
        %s1309 = sand.u32 %s34, 1
        %s1310 = sand.u32 %s34, 1
        %s1311 = smul.addr %s1310, 64
        %s1312 = scalar_lea.vmem [#allocation3], %s1311
        %p1313 = pneg %p47
        %p1314 = pneg %p44
        %s1315 = sand.u32 %s60, 1
        %s1316 = sand.u32 %s60, 1
        %s1317 = smul.addr %s1316, 48
        %s1318 = scalar_lea.vmem [#allocation4], %s1317
        %p1319 = pneg %p73
        %p1320 = pneg %p70
        %p1321 = pneg %p94
        %p1322 = pneg %p91
        %p1323 = pneg %p115
        %p1324 = pneg %p112
        %p1325 = pneg %p136
        %p1326 = pneg %p133
        %p1327 = pneg %p157
        %p1328 = pneg %p154
        %p1329 = pneg %p178
        %p1330 = pneg %p175
        %p1331 = pneg %p199
        %p1332 = pneg %p196
        %p1333 = pneg %p220
        %p1334 = pneg %p217
        %p1335 = pneg %p241
        %p1336 = pneg %p238
        %p1337 = pneg %p262
        %p1338 = pneg %p259
        %p1339 = pneg %p283
        %p1340 = pneg %p280
        %p1341 = pneg %p304
        %p1342 = pneg %p301
        %p1343 = pneg %p330
        %p1344 = pneg %p327
        %s1345 = sand.u32 %s317, 1
        %s1346 = sand.u32 %s317, 1
        %s1347 = smul.addr %s1346, 2
        %s1348 = scalar_lea.vmem [#allocation5], %s1347
        %s1349 = smul.u32 2, %s26
        %s1350 = ssub.s32 3, %s1349
        %p1351 = scmp.lt.s32.totalorder %s1350, 2
        %s1352 = scalar_select %p1351, %s1350, 2
        %s1353 = smul.u32 512, %s1352
        %s1354 = smul.u32 2, %s26
        %s1355 = ssub.s32 3, %s1354
        %p1356 = scmp.lt.s32.totalorder %s1355, 2
        %s1357 = scalar_select %p1356, %s1355, 2
        %s1358 = smul.u32 384, %s1357
        %s1359 = smul.u32 2, %s26
        %s1360 = ssub.s32 3, %s1359
        %p1361 = scmp.lt.s32.totalorder %s1360, 2
        %s1362 = scalar_select %p1361, %s1360, 2
        %s1363 = smul.u32 16, %s1362
        %v1364 = vld [vmem:[%s1298] sm:$0xff]
        %v1365 = vld [vmem:[%s1298 + $0x8] sm:$0xff]
        %v1366 = vld [vmem:[%s1298 + $0x10] sm:$0xff]
        %v1367 = vld [vmem:[%s1298 + $0x18] sm:$0xff]
        %v1368 = vld [vmem:[%s1298 + $0x20] sm:$0xff]
        %v1369 = vld [vmem:[%s1298 + $0x28] sm:$0xff]
        %v1370 = vld [vmem:[%s1298 + $0x30] sm:$0xff]
        %v1371 = vld [vmem:[%s1298 + $0x38] sm:$0xff]
        %v1372 = vld [vmem:[%s1305] sm:$0xff]
        %v1373 = vld [vmem:[%s1305 + $0x8] sm:$0xff]
        %v1374 = vld [vmem:[%s1305 + $0x10] sm:$0xff]
        %v1375 = vld [vmem:[%s1305 + $0x18] sm:$0xff]
        %v1376 = vld [vmem:[%s1305 + $0x20] sm:$0xff]
        %v1377 = vld [vmem:[%s1305 + $0x28] sm:$0xff]
        %v1378 = vld [vmem:[%s2] sm:$0xff]
        %v1379 = vld [vmem:[%s2 + $0x8] sm:$0xff]
        %v1380 = vld [vmem:[%s2 + $0x10] sm:$0xff]
        %v1381 = vld [vmem:[%s2 + $0x18] sm:$0xff]
        %v1382 = vld [vmem:[%s2 + $0x20] sm:$0xff]
        %v1383 = vld [vmem:[%s3] sm:$0xff]
        %v1384 = vld [vmem:[%s3 + $0x8] sm:$0xff]
        %v1385 = vld [vmem:[%s3 + $0x10] sm:$0xff]
        %v1386 = vld [vmem:[%s3 + $0x18] sm:$0xff]
        %v1387 = vld [vmem:[%s3 + $0x20] sm:$0xff]
        %vm1388 = vcmask 195584
        %v1390 = vsel %vm1388, %v1383, 0
        %v1393 = vsel %vm1388, %v1384, 0
        %v1396 = vsel %vm1388, %v1385, 0
        %v1399 = vsel %vm1388, %v1386, 0
        %v1402 = vsel %vm1388, %v1387, 0
        %1404 = vmatprep.subr.mxu0 %v1373
        %1405 = vmatpush1.msra.mxu0 %v1372
        %1406 = vmatprep.subr.mxu0 %v1375
        %1407 = vmatpush1.msra.mxu0 %v1374
        %1408 = vmatprep.subr.mxu0 %v1377
        %1409 = vmatpush1.msra.mxu0 %v1376
        %1410 = vmatprep.subr.mxu0 0.0
        %1411 = vmatpush1.msra.mxu0 0.0
        %1412 = vmatprep.subr.mxu0 0.0
        %1413 = vmatpush1.msra.mxu0 0.0
        %1414 = vmatprep.subr.mxu0 0.0
        %1415 = vmatpush1.msra.mxu0 0.0
        %1416 = vmatprep.subr.mxu0 0.0
        %1417 = vmatpush1.msra.mxu0 0.0
        %1418 = vmatprep.subr.mxu0 0.0
        %1419 = vmatpush1.msra.mxu0 0.0
        %1420 = vmatprep.subr.mxu0 0.0
        %1421 = vmatpush1.msra.mxu0 0.0
        %1422 = vmatprep.subr.mxu0 0.0
        %1423 = vmatpush1.msra.mxu0 0.0
        %1424 = vmatprep.subr.mxu0 0.0
        %1425 = vmatpush1.msra.mxu0 0.0
        %1426 = vmatprep.subr.mxu0 0.0
        %1427 = vmatpush1.msra.mxu0 0.0
        %1428 = vmatprep.subr.mxu0 0.0
        %1429 = vmatpush1.msra.mxu0 0.0
        %1430 = vmatprep.subr.mxu0 0.0
        %1431 = vmatpush1.msra.mxu0 0.0
        %1432 = vmatprep.subr.mxu0 0.0
        %1433 = vmatpush1.msra.mxu0 0.0
        %1434 = vmatprep.subr.mxu0 0.0
        %1435 = vmatpush1.msra.mxu0 0.0
        %1436 = vmatprep.subr.mxu0 0.0
        %1437 = vmatpush1.msra.mxu0 0.0
        %1438 = vmatprep.subr.mxu0 0.0
        %1439 = vmatpush1.msra.mxu0 0.0
        %1440 = vmatprep.subr.mxu0 0.0
        %1441 = vmatpush1.msra.mxu0 0.0
        %1442 = vmatprep.subr.mxu0 0.0
        %1443 = vmatpush1.msra.mxu0 0.0
        %1444 = vmatprep.subr.mxu0 0.0
        %1445 = vmatpush1.msra.mxu0 0.0
        %1446 = vmatprep.subr.mxu0 0.0
        %1447 = vmatpush1.msra.mxu0 0.0
        %1448 = vmatprep.subr.mxu0 0.0
        %1449 = vmatpush1.msra.mxu0 0.0
        %1450 = vmatprep.subr.mxu0 0.0
        %1451 = vmatpush1.msra.mxu0 0.0
        %1452 = vmatprep.subr.mxu0 0.0
        %1453 = vmatpush1.msra.mxu0 0.0
        %1454 = vmatprep.subr.mxu0 0.0
        %1455 = vmatpush1.msra.mxu0 0.0
        %1456 = vmatprep.subr.mxu0 0.0
        %1457 = vmatpush1.msra.mxu0 0.0
        %1458 = vmatprep.subr.mxu0 0.0
        %1459 = vmatpush1.msra.mxu0 0.0
        %1460 = vmatprep.subr.mxu0 0.0
        %1461 = vmatpush1.msra.mxu0 0.0
        %1462 = vmatprep.subr.mxu0 0.0
        %1463 = vmatpush1.msra.mxu0 0.0
        %1464 = vmatprep.subr.mxu0 0.0
        %1465 = vmatpush1.msra.mxu0 0.0
        %1466 = vmatprep.subr.mxu0 0.0
        %1467 = vmatpush1.msra.mxu0 0.0
        %1468 = vmatprep.mubr.f32.mxu0 0.0
        %1469 = vmatmul.mubr.f32.gmra.mrb[0].mxu0 %v1390
        %v1470 = vpop.f32.mrb[0].mxu0
        %v1471 = vadd.f32 0.0, %v1470
        %v1472 = vpop.f32.mrb[0].mxu0
        %v1473 = vadd.f32 0.0, %v1472
        %1474 = vmatprep.mubr.f32.mxu0 0.0
        %1475 = vmatmul.mubr.f32.gmra.mrb[0].mxu0 %v1393
        %v1476 = vpop.f32.mrb[0].mxu0
        %v1477 = vadd.f32 0.0, %v1476
        %v1478 = vpop.f32.mrb[0].mxu0
        %v1479 = vadd.f32 0.0, %v1478
        %1480 = vmatprep.mubr.f32.mxu0 0.0
        %1481 = vmatmul.mubr.f32.gmra.mrb[0].mxu0 %v1396
        %v1482 = vpop.f32.mrb[0].mxu0
        %v1483 = vadd.f32 0.0, %v1482
        %v1484 = vpop.f32.mrb[0].mxu0
        %v1485 = vadd.f32 0.0, %v1484
        %1486 = vmatprep.mubr.f32.mxu0 0.0
        %1487 = vmatmul.mubr.f32.gmra.mrb[0].mxu0 %v1399
        %v1488 = vpop.f32.mrb[0].mxu0
        %v1489 = vadd.f32 0.0, %v1488
        %v1490 = vpop.f32.mrb[0].mxu0
        %v1491 = vadd.f32 0.0, %v1490
        %1492 = vmatprep.mubr.f32.mxu0 0.0
        %1493 = vmatmul.mubr.f32.gmra.mrb[0].mxu0 %v1402
        %v1494 = vpop.f32.mrb[0].mxu0
        %v1495 = vadd.f32 0.0, %v1494
        %v1496 = vpop.f32.mrb[0].mxu0
        %v1497 = vadd.f32 0.0, %v1496
        %1498 = vdwg.mxu0
        %vm1499 = vcmask 261120
        %v1501 = vsel %vm1499, %v1378, 0
        %v1504 = vsel %vm1499, %v1379, 0
        %v1507 = vsel %vm1499, %v1380, 0
        %v1510 = vsel %vm1499, %v1381, 0
        %v1513 = vsel %vm1499, %v1382, 0
        %1515 = vmatprep.subr.mxu0 %v1365
        %1516 = vmatpush1.msra.mxu0 %v1364
        %1517 = vmatprep.subr.mxu0 %v1367
        %1518 = vmatpush1.msra.mxu0 %v1366
        %1519 = vmatprep.subr.mxu0 %v1369
        %1520 = vmatpush1.msra.mxu0 %v1368
        %1521 = vmatprep.subr.mxu0 %v1371
        %1522 = vmatpush1.msra.mxu0 %v1370
        %1523 = vmatprep.subr.mxu0 0.0
        %1524 = vmatpush1.msra.mxu0 0.0
        %1525 = vmatprep.subr.mxu0 0.0
        %1526 = vmatpush1.msra.mxu0 0.0
        %1527 = vmatprep.subr.mxu0 0.0
        %1528 = vmatpush1.msra.mxu0 0.0
        %1529 = vmatprep.subr.mxu0 0.0
        %1530 = vmatpush1.msra.mxu0 0.0
        %1531 = vmatprep.subr.mxu0 0.0
        %1532 = vmatpush1.msra.mxu0 0.0
        %1533 = vmatprep.subr.mxu0 0.0
        %1534 = vmatpush1.msra.mxu0 0.0
        %1535 = vmatprep.subr.mxu0 0.0
        %1536 = vmatpush1.msra.mxu0 0.0
        %1537 = vmatprep.subr.mxu0 0.0
        %1538 = vmatpush1.msra.mxu0 0.0
        %1539 = vmatprep.subr.mxu0 0.0
        %1540 = vmatpush1.msra.mxu0 0.0
        %1541 = vmatprep.subr.mxu0 0.0
        %1542 = vmatpush1.msra.mxu0 0.0
        %1543 = vmatprep.subr.mxu0 0.0
        %1544 = vmatpush1.msra.mxu0 0.0
        %1545 = vmatprep.subr.mxu0 0.0
        %1546 = vmatpush1.msra.mxu0 0.0
        %1547 = vmatprep.subr.mxu0 0.0
        %1548 = vmatpush1.msra.mxu0 0.0
        %1549 = vmatprep.subr.mxu0 0.0
        %1550 = vmatpush1.msra.mxu0 0.0
        %1551 = vmatprep.subr.mxu0 0.0
        %1552 = vmatpush1.msra.mxu0 0.0
        %1553 = vmatprep.subr.mxu0 0.0
        %1554 = vmatpush1.msra.mxu0 0.0
        %1555 = vmatprep.subr.mxu0 0.0
        %1556 = vmatpush1.msra.mxu0 0.0
        %1557 = vmatprep.subr.mxu0 0.0
        %1558 = vmatpush1.msra.mxu0 0.0
        %1559 = vmatprep.subr.mxu0 0.0
        %1560 = vmatpush1.msra.mxu0 0.0
        %1561 = vmatprep.subr.mxu0 0.0
        %1562 = vmatpush1.msra.mxu0 0.0
        %1563 = vmatprep.subr.mxu0 0.0
        %1564 = vmatpush1.msra.mxu0 0.0
        %1565 = vmatprep.subr.mxu0 0.0
        %1566 = vmatpush1.msra.mxu0 0.0
        %1567 = vmatprep.subr.mxu0 0.0
        %1568 = vmatpush1.msra.mxu0 0.0
        %1569 = vmatprep.subr.mxu0 0.0
        %1570 = vmatpush1.msra.mxu0 0.0
        %1571 = vmatprep.subr.mxu0 0.0
        %1572 = vmatpush1.msra.mxu0 0.0
        %1573 = vmatprep.subr.mxu0 0.0
        %1574 = vmatpush1.msra.mxu0 0.0
        %1575 = vmatprep.subr.mxu0 0.0
        %1576 = vmatpush1.msra.mxu0 0.0
        %1577 = vmatprep.subr.mxu0 0.0
        %1578 = vmatpush1.msra.mxu0 0.0
        %1579 = vmatprep.mubr.f32.mxu0 0.0
        %1580 = vmatmul.mubr.f32.gmra.mrb[0].mxu0 %v1501
        %v1581 = vpop.f32.mrb[0].mxu0
        %v1582 = vadd.f32 %v1471, %v1581
        %v1583 = vpop.f32.mrb[0].mxu0
        %v1584 = vadd.f32 %v1473, %v1583
        %1585 = vmatprep.mubr.f32.mxu0 0.0
        %1586 = vmatmul.mubr.f32.gmra.mrb[0].mxu0 %v1504
        %v1587 = vpop.f32.mrb[0].mxu0
        %v1588 = vadd.f32 %v1477, %v1587
        %v1589 = vpop.f32.mrb[0].mxu0
        %v1590 = vadd.f32 %v1479, %v1589
        %1591 = vmatprep.mubr.f32.mxu0 0.0
        %1592 = vmatmul.mubr.f32.gmra.mrb[0].mxu0 %v1507
        %v1593 = vpop.f32.mrb[0].mxu0
        %v1594 = vadd.f32 %v1483, %v1593
        %v1595 = vpop.f32.mrb[0].mxu0
        %v1596 = vadd.f32 %v1485, %v1595
        %1597 = vmatprep.mubr.f32.mxu0 0.0
        %1598 = vmatmul.mubr.f32.gmra.mrb[0].mxu0 %v1510
        %v1599 = vpop.f32.mrb[0].mxu0
        %v1600 = vadd.f32 %v1489, %v1599
        %v1601 = vpop.f32.mrb[0].mxu0
        %v1602 = vadd.f32 %v1491, %v1601
        %1603 = vmatprep.mubr.f32.mxu0 0.0
        %1604 = vmatmul.mubr.f32.gmra.mrb[0].mxu0 %v1513
        %v1605 = vpop.f32.mrb[0].mxu0
        %v1606 = vadd.f32 %v1495, %v1605
        %v1607 = vpop.f32.mrb[0].mxu0
        %v1608 = vadd.f32 %v1497, %v1607
        %1609 = vdwg.mxu0
        %v1610 = vld [vmem:[%s4] sm:$0xff]
        %v1611 = vld [vmem:[%s4 + $0x8] sm:$0xff]
        %v1612 = vld [vmem:[%s4 + $0x10] sm:$0xff]
        %v1613 = vld [vmem:[%s4 + $0x18] sm:$0xff]
        %v1614 = vld [vmem:[%s4 + $0x20] sm:$0xff]
        %1616 = vset.pattern.permute.xlu0 0
        %1617 = vperm.xlu0 %1616, %v1610
        %v1618 = vpop.permute.xlu0 %1617
        %1621 = vset.pattern.permute.xlu0 0
        %1622 = vperm.xlu0 %1621, %v1611
        %v1623 = vpop.permute.xlu0 %1622
        %1626 = vset.pattern.permute.xlu0 0
        %1627 = vperm.xlu0 %1626, %v1612
        %v1628 = vpop.permute.xlu0 %1627
        %1631 = vset.pattern.permute.xlu0 0
        %1632 = vperm.xlu0 %1631, %v1613
        %v1633 = vpop.permute.xlu0 %1632
        %1636 = vset.pattern.permute.xlu0 0
        %1637 = vperm.xlu0 %1636, %v1614
        %v1638 = vpop.permute.xlu0 %1637
        %v1640 = vadd.f32 %v1582, %v1618
        %v1641 = vadd.f32 %v1584, %v1618
        %v1642 = vadd.f32 %v1588, %v1623
        %v1643 = vadd.f32 %v1590, %v1623
        %v1644 = vadd.f32 %v1594, %v1628
        %v1645 = vadd.f32 %v1596, %v1628
        %v1646 = vadd.f32 %v1600, %v1633
        %v1647 = vadd.f32 %v1602, %v1633
        %v1648 = vadd.f32 %v1606, %v1638
        %v1649 = vadd.f32 %v1608, %v1638
        %v1650 = vmax.f32 %v1640, 0.0
        %v1651 = vmax.f32 %v1641, 0.0
        %v1652 = vmax.f32 %v1642, 0.0
        %v1653 = vmax.f32 %v1643, 0.0
        %v1654 = vmax.f32 %v1644, 0.0
        %v1655 = vmax.f32 %v1645, 0.0
        %v1656 = vmax.f32 %v1646, 0.0
        %v1657 = vmax.f32 %v1647, 0.0
        %v1658 = vmax.f32 %v1648, 0.0
        %v1659 = vmax.f32 %v1649, 0.0
        %v1660 = vld [vmem:[%s5] sm:$0xff]
        %v1661 = vld [vmem:[%s5 + $0x8] sm:$0xff]
        %v1662 = vld [vmem:[%s5 + $0x10] sm:$0xf]
        %v1663 = vld [vmem:[%s6] sm:$0xff]
        %v1664 = vld [vmem:[%s6 + $0x8] sm:$0xff]
        %v1665 = vld [vmem:[%s6 + $0x10] sm:$0xf]
        %1667 = vset.pattern.permute.xlu0 0
        %1668 = vperm.xlu0 %1667, %v1663
        %v1669 = vpop.permute.xlu0 %1668
        %1672 = vset.pattern.permute.xlu0 0
        %1673 = vperm.xlu0 %1672, %v1664
        %v1674 = vpop.permute.xlu0 %1673
        %1677 = vset.pattern.permute.xlu0 0
        %1678 = vperm.xlu0 %1677, %v1665
        %v1679 = vpop.permute.xlu0 %1678
        %vm1681 = vcmask 326656
        %v1683 = vsel %vm1681, %v1660, 0
        %v1686 = vsel %vm1681, %v1661, 0
        %v1689 = vsel %vm1681, %v1662, 0
        %1691 = vmatprep.subr.mxu0 %v1651
        %1692 = vmatpush1.msra.mxu0 %v1650
        %1693 = vmatprep.subr.mxu0 %v1653
        %1694 = vmatpush1.msra.mxu0 %v1652
        %1695 = vmatprep.subr.mxu0 %v1655
        %1696 = vmatpush1.msra.mxu0 %v1654
        %1697 = vmatprep.subr.mxu0 %v1657
        %1698 = vmatpush1.msra.mxu0 %v1656
        %1699 = vmatprep.subr.mxu0 %v1659
        %1700 = vmatpush1.msra.mxu0 %v1658
        %1701 = vmatprep.subr.mxu0 0.0
        %1702 = vmatpush1.msra.mxu0 0.0
        %1703 = vmatprep.subr.mxu0 0.0
        %1704 = vmatpush1.msra.mxu0 0.0
        %1705 = vmatprep.subr.mxu0 0.0
        %1706 = vmatpush1.msra.mxu0 0.0
        %1707 = vmatprep.subr.mxu0 0.0
        %1708 = vmatpush1.msra.mxu0 0.0
        %1709 = vmatprep.subr.mxu0 0.0
        %1710 = vmatpush1.msra.mxu0 0.0
        %1711 = vmatprep.subr.mxu0 0.0
        %1712 = vmatpush1.msra.mxu0 0.0
        %1713 = vmatprep.subr.mxu0 0.0
        %1714 = vmatpush1.msra.mxu0 0.0
        %1715 = vmatprep.subr.mxu0 0.0
        %1716 = vmatpush1.msra.mxu0 0.0
        %1717 = vmatprep.subr.mxu0 0.0
        %1718 = vmatpush1.msra.mxu0 0.0
        %1719 = vmatprep.subr.mxu0 0.0
        %1720 = vmatpush1.msra.mxu0 0.0
        %1721 = vmatprep.subr.mxu0 0.0
        %1722 = vmatpush1.msra.mxu0 0.0
        %1723 = vmatprep.subr.mxu0 0.0
        %1724 = vmatpush1.msra.mxu0 0.0
        %1725 = vmatprep.subr.mxu0 0.0
        %1726 = vmatpush1.msra.mxu0 0.0
        %1727 = vmatprep.subr.mxu0 0.0
        %1728 = vmatpush1.msra.mxu0 0.0
        %1729 = vmatprep.subr.mxu0 0.0
        %1730 = vmatpush1.msra.mxu0 0.0
        %1731 = vmatprep.subr.mxu0 0.0
        %1732 = vmatpush1.msra.mxu0 0.0
        %1733 = vmatprep.subr.mxu0 0.0
        %1734 = vmatpush1.msra.mxu0 0.0
        %1735 = vmatprep.subr.mxu0 0.0
        %1736 = vmatpush1.msra.mxu0 0.0
        %1737 = vmatprep.subr.mxu0 0.0
        %1738 = vmatpush1.msra.mxu0 0.0
        %1739 = vmatprep.subr.mxu0 0.0
        %1740 = vmatpush1.msra.mxu0 0.0
        %1741 = vmatprep.subr.mxu0 0.0
        %1742 = vmatpush1.msra.mxu0 0.0
        %1743 = vmatprep.subr.mxu0 0.0
        %1744 = vmatpush1.msra.mxu0 0.0
        %1745 = vmatprep.subr.mxu0 0.0
        %1746 = vmatpush1.msra.mxu0 0.0
        %1747 = vmatprep.subr.mxu0 0.0
        %1748 = vmatpush1.msra.mxu0 0.0
        %1749 = vmatprep.subr.mxu0 0.0
        %1750 = vmatpush1.msra.mxu0 0.0
        %1751 = vmatprep.subr.mxu0 0.0
        %1752 = vmatpush1.msra.mxu0 0.0
        %1753 = vmatprep.subr.mxu0 0.0
        %1754 = vmatpush1.msra.mxu0 0.0
        %1755 = vmatprep.mubr.f32.mxu0 0.0
        %1756 = vmatmul.mubr.f32.gmra.mrb[0].mxu0 %v1683
        %v1757 = vpop.f32.mrb[0].mxu0
        %v1758 = vadd.f32 %v1669, %v1757
        %v1759 = vpop.f32.mrb[0].mxu0
        %v1760 = vadd.f32 %v1669, %v1759
        %1761 = vmatprep.mubr.f32.mxu0 0.0
        %1762 = vmatmul.mubr.f32.gmra.mrb[0].mxu0 %v1686
        %v1763 = vpop.f32.mrb[0].mxu0
        %v1764 = vadd.f32 %v1674, %v1763
        %v1765 = vpop.f32.mrb[0].mxu0
        %v1766 = vadd.f32 %v1674, %v1765
        %1767 = vmatprep.mubr.f32.mxu0 0.0
        %1768 = vmatmul.mubr.f32.gmra.mrb[0].mxu0 %v1689
        %v1769 = vpop.f32.mrb[0].mxu0
        %v1770 = vadd.f32 %v1679, %v1769
        %v1771 = vpop.f32.mrb[0].mxu0
        %v1772 = vadd.f32 %v1679, %v1771
        %1773 = vdwg.mxu0
        %v1774 = vmax.f32 %v1758, 0.0
        %v1775 = vmax.f32 %v1760, 0.0
        %v1776 = vmax.f32 %v1764, 0.0
        %v1777 = vmax.f32 %v1766, 0.0
        %v1778 = vmax.f32 %v1770, 0.0
        %v1779 = vmax.f32 %v1772, 0.0
        %v1780 = vld [vmem:[%s7] sm:$0xff]
        %v1781 = vld [vmem:[%s7 + $0x8] sm:$0x3]
        %v1782 = vld [vmem:[%s8] sm:$0xff]
        %v1783 = vld [vmem:[%s8 + $0x8] sm:$0x3]
        %1785 = vset.pattern.permute.xlu0 0
        %1786 = vperm.xlu0 %1785, %v1782
        %v1787 = vpop.permute.xlu0 %1786
        %1790 = vset.pattern.permute.xlu0 0
        %1791 = vperm.xlu0 %1790, %v1783
        %v1792 = vpop.permute.xlu0 %1791
        %vm1794 = vcmask 162816
        %v1796 = vsel %vm1794, %v1780, 0
        %v1799 = vsel %vm1794, %v1781, 0
        %vm1801 = vcmask 1043456
        %v1803 = vsel %vm1801, %v1778, 0
        %v1806 = vsel %vm1801, %v1779, 0
        %1808 = vmatprep.subr.mxu0 %v1775
        %1809 = vmatpush1.msra.mxu0 %v1774
        %1810 = vmatprep.subr.mxu0 %v1777
        %1811 = vmatpush1.msra.mxu0 %v1776
        %1812 = vmatprep.subr.mxu0 %v1806
        %1813 = vmatpush1.msra.mxu0 %v1803
        %1814 = vmatprep.subr.mxu0 0.0
        %1815 = vmatpush1.msra.mxu0 0.0
        %1816 = vmatprep.subr.mxu0 0.0
        %1817 = vmatpush1.msra.mxu0 0.0
        %1818 = vmatprep.subr.mxu0 0.0
        %1819 = vmatpush1.msra.mxu0 0.0
        %1820 = vmatprep.subr.mxu0 0.0
        %1821 = vmatpush1.msra.mxu0 0.0
        %1822 = vmatprep.subr.mxu0 0.0
        %1823 = vmatpush1.msra.mxu0 0.0
        %1824 = vmatprep.subr.mxu0 0.0
        %1825 = vmatpush1.msra.mxu0 0.0
        %1826 = vmatprep.subr.mxu0 0.0
        %1827 = vmatpush1.msra.mxu0 0.0
        %1828 = vmatprep.subr.mxu0 0.0
        %1829 = vmatpush1.msra.mxu0 0.0
        %1830 = vmatprep.subr.mxu0 0.0
        %1831 = vmatpush1.msra.mxu0 0.0
        %1832 = vmatprep.subr.mxu0 0.0
        %1833 = vmatpush1.msra.mxu0 0.0
        %1834 = vmatprep.subr.mxu0 0.0
        %1835 = vmatpush1.msra.mxu0 0.0
        %1836 = vmatprep.subr.mxu0 0.0
        %1837 = vmatpush1.msra.mxu0 0.0
        %1838 = vmatprep.subr.mxu0 0.0
        %1839 = vmatpush1.msra.mxu0 0.0
        %1840 = vmatprep.subr.mxu0 0.0
        %1841 = vmatpush1.msra.mxu0 0.0
        %1842 = vmatprep.subr.mxu0 0.0
        %1843 = vmatpush1.msra.mxu0 0.0
        %1844 = vmatprep.subr.mxu0 0.0
        %1845 = vmatpush1.msra.mxu0 0.0
        %1846 = vmatprep.subr.mxu0 0.0
        %1847 = vmatpush1.msra.mxu0 0.0
        %1848 = vmatprep.subr.mxu0 0.0
        %1849 = vmatpush1.msra.mxu0 0.0
        %1850 = vmatprep.subr.mxu0 0.0
        %1851 = vmatpush1.msra.mxu0 0.0
        %1852 = vmatprep.subr.mxu0 0.0
        %1853 = vmatpush1.msra.mxu0 0.0
        %1854 = vmatprep.subr.mxu0 0.0
        %1855 = vmatpush1.msra.mxu0 0.0
        %1856 = vmatprep.subr.mxu0 0.0
        %1857 = vmatpush1.msra.mxu0 0.0
        %1858 = vmatprep.subr.mxu0 0.0
        %1859 = vmatpush1.msra.mxu0 0.0
        %1860 = vmatprep.subr.mxu0 0.0
        %1861 = vmatpush1.msra.mxu0 0.0
        %1862 = vmatprep.subr.mxu0 0.0
        %1863 = vmatpush1.msra.mxu0 0.0
        %1864 = vmatprep.subr.mxu0 0.0
        %1865 = vmatpush1.msra.mxu0 0.0
        %1866 = vmatprep.subr.mxu0 0.0
        %1867 = vmatpush1.msra.mxu0 0.0
        %1868 = vmatprep.subr.mxu0 0.0
        %1869 = vmatpush1.msra.mxu0 0.0
        %1870 = vmatprep.subr.mxu0 0.0
        %1871 = vmatpush1.msra.mxu0 0.0
        %1872 = vmatprep.mubr.f32.mxu0 0.0
        %1873 = vmatmul.mubr.f32.gmra.mrb[0].mxu0 %v1796
        %v1874 = vpop.f32.mrb[0].mxu0
        %v1875 = vadd.f32 %v1787, %v1874
        %v1876 = vpop.f32.mrb[0].mxu0
        %v1877 = vadd.f32 %v1787, %v1876
        %1878 = vmatprep.mubr.f32.mxu0 0.0
        %1879 = vmatmul.mubr.f32.gmra.mrb[0].mxu0 %v1799
        %v1880 = vpop.f32.mrb[0].mxu0
        %v1881 = vadd.f32 %v1792, %v1880
        %v1882 = vpop.f32.mrb[0].mxu0
        %v1883 = vadd.f32 %v1792, %v1882
        %1884 = vdwg.mxu0
        %v1885 = vmax.f32 %v1875, 0.0
        %v1886 = vmax.f32 %v1877, 0.0
        %v1887 = vmax.f32 %v1881, 0.0
        %v1888 = vmax.f32 %v1883, 0.0
        %v1889 = vld [vmem:[%s9] sm:$0xff]
        %v1890 = vld [vmem:[%s9 + $0x8] sm:$0x3]
        %v1891 = vld [vmem:[%s10] sm:$0xf]
        %1893 = vset.pattern.permute.xlu0 0
        %1894 = vperm.xlu0 %1893, %v1889
        %v1895 = vpop.permute.xlu0 %1894
        %1898 = vset.pattern.permute.xlu0 0
        %1899 = vperm.xlu0 %1898, %v1890
        %v1900 = vpop.permute.xlu0 %1899
        %v1902 = vmul.f32 %v1895, %v1885
        %v1903 = vmul.f32 %v1895, %v1886
        %v1904 = vmul.f32 %v1900, %v1887
        %v1905 = vmul.f32 %v1900, %v1888
        %vm1906 = vcmask 1041408
        %v1907 = vsel %vm1906, %v1904, 0.0
        %v1908 = vadd.f32 %v1902, %v1907
        %v1909 = vrot.slane %v1908, 4
        %v1910 = vadd.f32 %v1908, %v1909
        %v1911 = vrot.slane %v1910, 2
        %v1912 = vadd.f32 %v1910, %v1911
        %v1913 = vrot.slane %v1912, 1
        %v1914 = vadd.f32 %v1912, %v1913
        %v1915 = vsel %vm1906, %v1905, 0.0
        %v1916 = vadd.f32 %v1903, %v1915
        %v1917 = vrot.slane %v1916, 4
        %v1918 = vadd.f32 %v1916, %v1917
        %v1919 = vrot.slane %v1918, 2
        %v1920 = vadd.f32 %v1918, %v1919
        %v1921 = vrot.slane %v1920, 1
        %v1922 = vadd.f32 %v1920, %v1921
        %1924 = vset.pattern.permute.xlu0 0
        %1925 = vperm.xlu0 %1924, %v1891
        %v1926 = vpop.permute.xlu0 %1925
        %v1928 = vadd.f32 %v1914, %v1926
        %v1929 = vadd.f32 %v1922, %v1926
        %v1930 = vmax.f32 %v1928, 0.0
        %v1931 = vmax.f32 %v1929, 0.0
        %1932 = vset.pattern.permute.xlu0 1
        %1933 = vperm.xlu0 %1932, %v1889
        %v1934 = vpop.permute.xlu0 %1933
        %1936 = vset.pattern.permute.xlu0 1
        %1937 = vperm.xlu0 %1936, %v1890
        %v1938 = vpop.permute.xlu0 %1937
        %v1940 = vmul.f32 %v1934, %v1885
        %v1941 = vmul.f32 %v1934, %v1886
        %v1942 = vmul.f32 %v1938, %v1887
        %v1943 = vmul.f32 %v1938, %v1888
        %v1944 = vsel %vm1906, %v1942, 0.0
        %v1945 = vadd.f32 %v1940, %v1944
        %v1946 = vrot.slane %v1945, 4
        %v1947 = vadd.f32 %v1945, %v1946
        %v1948 = vrot.slane %v1947, 2
        %v1949 = vadd.f32 %v1947, %v1948
        %v1950 = vrot.slane %v1949, 1
        %v1951 = vadd.f32 %v1949, %v1950
        %v1952 = vsel %vm1906, %v1943, 0.0
        %v1953 = vadd.f32 %v1941, %v1952
        %v1954 = vrot.slane %v1953, 4
        %v1955 = vadd.f32 %v1953, %v1954
        %v1956 = vrot.slane %v1955, 2
        %v1957 = vadd.f32 %v1955, %v1956
        %v1958 = vrot.slane %v1957, 1
        %v1959 = vadd.f32 %v1957, %v1958
        %v1960 = vadd.f32 %v1951, %v1926
        %v1961 = vadd.f32 %v1959, %v1926
        %v1962 = vmax.f32 %v1960, 0.0
        %v1963 = vmax.f32 %v1961, 0.0
        %1964 = vset.pattern.permute.xlu0 2
        %1965 = vperm.xlu0 %1964, %v1889
        %v1966 = vpop.permute.xlu0 %1965
        %1968 = vset.pattern.permute.xlu0 2
        %1969 = vperm.xlu0 %1968, %v1890
        %v1970 = vpop.permute.xlu0 %1969
        %v1972 = vmul.f32 %v1966, %v1885
        %v1973 = vmul.f32 %v1966, %v1886
        %v1974 = vmul.f32 %v1970, %v1887
        %v1975 = vmul.f32 %v1970, %v1888
        %v1976 = vsel %vm1906, %v1974, 0.0
        %v1977 = vadd.f32 %v1972, %v1976
        %v1978 = vrot.slane %v1977, 4
        %v1979 = vadd.f32 %v1977, %v1978
        %v1980 = vrot.slane %v1979, 2
        %v1981 = vadd.f32 %v1979, %v1980
        %v1982 = vrot.slane %v1981, 1
        %v1983 = vadd.f32 %v1981, %v1982
        %v1984 = vsel %vm1906, %v1975, 0.0
        %v1985 = vadd.f32 %v1973, %v1984
        %v1986 = vrot.slane %v1985, 4
        %v1987 = vadd.f32 %v1985, %v1986
        %v1988 = vrot.slane %v1987, 2
        %v1989 = vadd.f32 %v1987, %v1988
        %v1990 = vrot.slane %v1989, 1
        %v1991 = vadd.f32 %v1989, %v1990
        %v1992 = vadd.f32 %v1983, %v1926
        %v1993 = vadd.f32 %v1991, %v1926
        %v1994 = vmax.f32 %v1992, 0.0
        %v1995 = vmax.f32 %v1993, 0.0
        %1996 = vset.pattern.permute.xlu0 3
        %1997 = vperm.xlu0 %1996, %v1889
        %v1998 = vpop.permute.xlu0 %1997
        %2000 = vset.pattern.permute.xlu0 3
        %2001 = vperm.xlu0 %2000, %v1890
        %v2002 = vpop.permute.xlu0 %2001
        %v2004 = vmul.f32 %v1998, %v1885
        %v2005 = vmul.f32 %v1998, %v1886
        %v2006 = vmul.f32 %v2002, %v1887
        %v2007 = vmul.f32 %v2002, %v1888
        %v2008 = vsel %vm1906, %v2006, 0.0
        %v2009 = vadd.f32 %v2004, %v2008
        %v2010 = vrot.slane %v2009, 4
        %v2011 = vadd.f32 %v2009, %v2010
        %v2012 = vrot.slane %v2011, 2
        %v2013 = vadd.f32 %v2011, %v2012
        %v2014 = vrot.slane %v2013, 1
        %v2015 = vadd.f32 %v2013, %v2014
        %v2016 = vsel %vm1906, %v2007, 0.0
        %v2017 = vadd.f32 %v2005, %v2016
        %v2018 = vrot.slane %v2017, 4
        %v2019 = vadd.f32 %v2017, %v2018
        %v2020 = vrot.slane %v2019, 2
        %v2021 = vadd.f32 %v2019, %v2020
        %v2022 = vrot.slane %v2021, 1
        %v2023 = vadd.f32 %v2021, %v2022
        %v2024 = vadd.f32 %v2015, %v1926
        %v2025 = vadd.f32 %v2023, %v1926
        %v2026 = vmax.f32 %v2024, 0.0
        %v2027 = vmax.f32 %v2025, 0.0
        %v2028 = vld [vmem:[%s11] sm:$0xf]
        %v2029 = vld [vmem:[#allocation2] sm:$0x1]
        %2031 = vset.pattern.permute.xlu0 0
        %2032 = vperm.xlu0 %2031, %v2028
        %v2033 = vpop.permute.xlu0 %2032
        %v2035 = vmul.f32 %v2033, %v1930
        %v2036 = vmul.f32 %v2033, %v1931
        %2038 = vset.pattern.permute.xlu0 0
        %2039 = vperm.xlu0 %2038, %v2029
        %v2040 = vpop.permute.xlu0 %2039
        %v2042 = vlaneseq
        %v2043 = vshrl.u32 %v2042, 7
        %v2044 = vsub.s32 0, %v2043
        %v2045 = vrot.slane %v2040, %v2044
        %v2046 = vadd.f32 %v2045, %v2035
        %v2047 = vadd.f32 %v2045, %v2036
        %v2048 = vmul.f32 %v2033, %v1962
        %v2049 = vmul.f32 %v2033, %v1963
        %v2052 = vrot.slane %v2048, 1
        %v2053 = vrot.slane %v2049, 1
        %v2056 = vadd.f32 %v2046, %v2052
        %v2057 = vadd.f32 %v2047, %v2053
        %v2058 = vmul.f32 %v2033, %v1994
        %v2059 = vmul.f32 %v2033, %v1995
        %v2062 = vrot.slane %v2058, 2
        %v2063 = vrot.slane %v2059, 2
        %v2066 = vadd.f32 %v2056, %v2062
        %v2067 = vadd.f32 %v2057, %v2063
        %v2068 = vmul.f32 %v2033, %v2026
        %v2069 = vmul.f32 %v2033, %v2027
        %v2072 = vrot.slane %v2068, 3
        %v2073 = vrot.slane %v2069, 3
        %v2076 = vadd.f32 %v2066, %v2072
        %v2077 = vadd.f32 %v2067, %v2073
        %v2080 = vcombine.low %v2076, %v2077
        %v2082 = vunpack.c.l.s4 1966171168
        %v2083 = vunpack.c.0.s8 %v2082
        %v2084 = vlaneseq
        %v2085 = vshrl.u32 %v2084, 7
        %v2086 = vsub.s32 %v2083, %v2085
        %v2087 = vrot.slane %v2080, %v2086
        %v2089 = vunpack.c.l.s4 1966171168
        %v2090 = vunpack.c.0.s8 %v2089
        %v2091 = vlaneseq
        %v2092 = vshrl.u32 %v2091, 7
        %v2093 = vsub.s32 %v2090, %v2092
        %v2094 = vrot.slane %v2087, %v2093
        %v2096 = vlaneseq
        %vm2097 = vcmp.ge.s32.totalorder %v2096, 0
        %vm2098 = vcmp.lt.s32.totalorder %v2096, 256
        %vm2099 = vmand %vm2097, %vm2098
        %2100 = vst.msk [vmem:[%s1348] sm:$0x3] %vm2099, %v2094
        %s2101 = sand.u32 %s317, 1
        %s2102 = sand.u32 %s317, 1
        %s2103 = smul.addr %s2102, 2
        %s2104 = scalar_lea.vmem [#allocation5], %s2103
        // Predicated region
        $region205: #{ncf_forward.1} parent=195 // pred_check
          %p2105 = pneg %p327
        $region206: #{ncf_forward.1} parent=195 // pred_check_branch
          %2107 = sbr.rel (%p2105) target = $region208
        $region207: #{ncf_forward.1} parent=195 // pred_region
          %s2108 = smul.u32 2, %s26
          %s2109 = ssub.s32 3, %s2108
          %p2110 = scmp.lt.s32.totalorder %s2109, 2
          %s2111 = scalar_select %p2110, %s2109, 2
          %s2112 = smul.u32 16, %s2111
          %p2113 = scmp.ne.s32.totalorder 0, %s2112
          %s2114 = scalar_lea.vmem %s13, %s2108
          // Predicated region
          $region209: #{ncf_forward.1} parent=207 // pred_check
            %p2115 = pneg %p2113
          $region210: #{ncf_forward.1} parent=207 // pred_check_branch
            %2117 = sbr.rel (%p2115) target = $region212
          $region211: #{ncf_forward.1} parent=207 // pred_region
            %p2118 = scmp.lt.u32.totalorder %s2111, 8
            %p2119 = pneg %p2118
            // Predicated region
            $region213: #{ncf_forward.1} parent=211 // pred_check
              _
            $region214: #{ncf_forward.1} parent=211 // pred_check_branch
              %2121 = sbr.rel (%p2118) target = $region216
            $region215: #{ncf_forward.1} parent=211 // pred_region
              %s2136 = sand.u32 %s2111, 7
              %p2137 = scmp.eq.s32.totalorder %s2136, 0
              // Predicated region
              $region228: #{ncf_forward.1} parent=215 // pred_check
                %p2138 = pneg %p2137
              $region229: #{ncf_forward.1} parent=215 // pred_check_branch
                %2140 = sbr.rel (%p2138) target = $region231
              $region230: #{ncf_forward.1} parent=215 // pred_region
                %s2141 = sshrl.u32 %s2111, 3
                %s2142 = sshrl.u32 %s2141, 6
                // While loop
                $region232: #{ncf_forward.1} parent=230 // loop_pre_header
                  _
                $region233: #{ncf_forward.1} parent=230 // loop_header
                  %s2146 = sphi 0, %s2148
                  %p2147 = scmp.ge.s32.totalorder %s2146, %s2142
                  %s2151 = sphi 0, %s2284
                  %s2152 = sphi %s2104, %s2287
                  %s2153 = sphi %s2114, %s2288
                $region234: #{ncf_forward.1} parent=230 // loop_header_branch
                  %2150 = sbr.rel (%p2147) target = $region238
                $region235: #{ncf_forward.1} parent=230 // loop_body
                  %v2154 = vld [vmem:[%s2152] sm:$0xff]
                  %2155 = vst [vmem:[%s2153] sm:$0xff] %v2154
                  %v2156 = vld [vmem:[%s2152 + $0x8] sm:$0xff]
                  %2157 = vst [vmem:[%s2153 + $0x8] sm:$0xff] %v2156
                  %v2158 = vld [vmem:[%s2152 + $0x10] sm:$0xff]
                  %2159 = vst [vmem:[%s2153 + $0x10] sm:$0xff] %v2158
                  %v2160 = vld [vmem:[%s2152 + $0x18] sm:$0xff]
                  %2161 = vst [vmem:[%s2153 + $0x18] sm:$0xff] %v2160
                  %v2162 = vld [vmem:[%s2152 + $0x20] sm:$0xff]
                  %2163 = vst [vmem:[%s2153 + $0x20] sm:$0xff] %v2162
                  %v2164 = vld [vmem:[%s2152 + $0x28] sm:$0xff]
                  %2165 = vst [vmem:[%s2153 + $0x28] sm:$0xff] %v2164
                  %v2166 = vld [vmem:[%s2152 + $0x30] sm:$0xff]
                  %2167 = vst [vmem:[%s2153 + $0x30] sm:$0xff] %v2166
                  %v2168 = vld [vmem:[%s2152 + $0x38] sm:$0xff]
                  %2169 = vst [vmem:[%s2153 + $0x38] sm:$0xff] %v2168
                  %v2170 = vld [vmem:[%s2152 + $0x40] sm:$0xff]
                  %2171 = vst [vmem:[%s2153 + $0x40] sm:$0xff] %v2170
                  %v2172 = vld [vmem:[%s2152 + $0x48] sm:$0xff]
                  %2173 = vst [vmem:[%s2153 + $0x48] sm:$0xff] %v2172
                  %v2174 = vld [vmem:[%s2152 + $0x50] sm:$0xff]
                  %2175 = vst [vmem:[%s2153 + $0x50] sm:$0xff] %v2174
                  %v2176 = vld [vmem:[%s2152 + $0x58] sm:$0xff]
                  %2177 = vst [vmem:[%s2153 + $0x58] sm:$0xff] %v2176
                  %v2178 = vld [vmem:[%s2152 + $0x60] sm:$0xff]
                  %2179 = vst [vmem:[%s2153 + $0x60] sm:$0xff] %v2178
                  %v2180 = vld [vmem:[%s2152 + $0x68] sm:$0xff]
                  %2181 = vst [vmem:[%s2153 + $0x68] sm:$0xff] %v2180
                  %v2182 = vld [vmem:[%s2152 + $0x70] sm:$0xff]
                  %2183 = vst [vmem:[%s2153 + $0x70] sm:$0xff] %v2182
                  %v2184 = vld [vmem:[%s2152 + $0x78] sm:$0xff]
                  %2185 = vst [vmem:[%s2153 + $0x78] sm:$0xff] %v2184
                  %v2186 = vld [vmem:[%s2152 + $0x80] sm:$0xff]
                  %2187 = vst [vmem:[%s2153 + $0x80] sm:$0xff] %v2186
                  %v2188 = vld [vmem:[%s2152 + $0x88] sm:$0xff]
                  %2189 = vst [vmem:[%s2153 + $0x88] sm:$0xff] %v2188
                  %v2190 = vld [vmem:[%s2152 + $0x90] sm:$0xff]
                  %2191 = vst [vmem:[%s2153 + $0x90] sm:$0xff] %v2190
                  %v2192 = vld [vmem:[%s2152 + $0x98] sm:$0xff]
                  %2193 = vst [vmem:[%s2153 + $0x98] sm:$0xff] %v2192
                  %v2194 = vld [vmem:[%s2152 + $0xa0] sm:$0xff]
                  %2195 = vst [vmem:[%s2153 + $0xa0] sm:$0xff] %v2194
                  %v2196 = vld [vmem:[%s2152 + $0xa8] sm:$0xff]
                  %2197 = vst [vmem:[%s2153 + $0xa8] sm:$0xff] %v2196
                  %v2198 = vld [vmem:[%s2152 + $0xb0] sm:$0xff]
                  %2199 = vst [vmem:[%s2153 + $0xb0] sm:$0xff] %v2198
                  %v2200 = vld [vmem:[%s2152 + $0xb8] sm:$0xff]
                  %2201 = vst [vmem:[%s2153 + $0xb8] sm:$0xff] %v2200
                  %v2202 = vld [vmem:[%s2152 + $0xc0] sm:$0xff]
                  %2203 = vst [vmem:[%s2153 + $0xc0] sm:$0xff] %v2202
                  %v2204 = vld [vmem:[%s2152 + $0xc8] sm:$0xff]
                  %2205 = vst [vmem:[%s2153 + $0xc8] sm:$0xff] %v2204
                  %v2206 = vld [vmem:[%s2152 + $0xd0] sm:$0xff]
                  %2207 = vst [vmem:[%s2153 + $0xd0] sm:$0xff] %v2206
                  %v2208 = vld [vmem:[%s2152 + $0xd8] sm:$0xff]
                  %2209 = vst [vmem:[%s2153 + $0xd8] sm:$0xff] %v2208
                  %v2210 = vld [vmem:[%s2152 + $0xe0] sm:$0xff]
                  %2211 = vst [vmem:[%s2153 + $0xe0] sm:$0xff] %v2210
                  %v2212 = vld [vmem:[%s2152 + $0xe8] sm:$0xff]
                  %2213 = vst [vmem:[%s2153 + $0xe8] sm:$0xff] %v2212
                  %v2214 = vld [vmem:[%s2152 + $0xf0] sm:$0xff]
                  %2215 = vst [vmem:[%s2153 + $0xf0] sm:$0xff] %v2214
                  %v2216 = vld [vmem:[%s2152 + $0xf8] sm:$0xff]
                  %2217 = vst [vmem:[%s2153 + $0xf8] sm:$0xff] %v2216
                  %v2218 = vld [vmem:[%s2152 + $0x100] sm:$0xff]
                  %2219 = vst [vmem:[%s2153 + $0x100] sm:$0xff] %v2218
                  %v2220 = vld [vmem:[%s2152 + $0x108] sm:$0xff]
                  %2221 = vst [vmem:[%s2153 + $0x108] sm:$0xff] %v2220
                  %v2222 = vld [vmem:[%s2152 + $0x110] sm:$0xff]
                  %2223 = vst [vmem:[%s2153 + $0x110] sm:$0xff] %v2222
                  %v2224 = vld [vmem:[%s2152 + $0x118] sm:$0xff]
                  %2225 = vst [vmem:[%s2153 + $0x118] sm:$0xff] %v2224
                  %v2226 = vld [vmem:[%s2152 + $0x120] sm:$0xff]
                  %2227 = vst [vmem:[%s2153 + $0x120] sm:$0xff] %v2226
                  %v2228 = vld [vmem:[%s2152 + $0x128] sm:$0xff]
                  %2229 = vst [vmem:[%s2153 + $0x128] sm:$0xff] %v2228
                  %v2230 = vld [vmem:[%s2152 + $0x130] sm:$0xff]
                  %2231 = vst [vmem:[%s2153 + $0x130] sm:$0xff] %v2230
                  %v2232 = vld [vmem:[%s2152 + $0x138] sm:$0xff]
                  %2233 = vst [vmem:[%s2153 + $0x138] sm:$0xff] %v2232
                  %v2234 = vld [vmem:[%s2152 + $0x140] sm:$0xff]
                  %2235 = vst [vmem:[%s2153 + $0x140] sm:$0xff] %v2234
                  %v2236 = vld [vmem:[%s2152 + $0x148] sm:$0xff]
                  %2237 = vst [vmem:[%s2153 + $0x148] sm:$0xff] %v2236
                  %v2238 = vld [vmem:[%s2152 + $0x150] sm:$0xff]
                  %2239 = vst [vmem:[%s2153 + $0x150] sm:$0xff] %v2238
                  %v2240 = vld [vmem:[%s2152 + $0x158] sm:$0xff]
                  %2241 = vst [vmem:[%s2153 + $0x158] sm:$0xff] %v2240
                  %v2242 = vld [vmem:[%s2152 + $0x160] sm:$0xff]
                  %2243 = vst [vmem:[%s2153 + $0x160] sm:$0xff] %v2242
                  %v2244 = vld [vmem:[%s2152 + $0x168] sm:$0xff]
                  %2245 = vst [vmem:[%s2153 + $0x168] sm:$0xff] %v2244
                  %v2246 = vld [vmem:[%s2152 + $0x170] sm:$0xff]
                  %2247 = vst [vmem:[%s2153 + $0x170] sm:$0xff] %v2246
                  %v2248 = vld [vmem:[%s2152 + $0x178] sm:$0xff]
                  %2249 = vst [vmem:[%s2153 + $0x178] sm:$0xff] %v2248
                  %v2250 = vld [vmem:[%s2152 + $0x180] sm:$0xff]
                  %2251 = vst [vmem:[%s2153 + $0x180] sm:$0xff] %v2250
                  %v2252 = vld [vmem:[%s2152 + $0x188] sm:$0xff]
                  %2253 = vst [vmem:[%s2153 + $0x188] sm:$0xff] %v2252
                  %v2254 = vld [vmem:[%s2152 + $0x190] sm:$0xff]
                  %2255 = vst [vmem:[%s2153 + $0x190] sm:$0xff] %v2254
                  %v2256 = vld [vmem:[%s2152 + $0x198] sm:$0xff]
                  %2257 = vst [vmem:[%s2153 + $0x198] sm:$0xff] %v2256
                  %v2258 = vld [vmem:[%s2152 + $0x1a0] sm:$0xff]
                  %2259 = vst [vmem:[%s2153 + $0x1a0] sm:$0xff] %v2258
                  %v2260 = vld [vmem:[%s2152 + $0x1a8] sm:$0xff]
                  %2261 = vst [vmem:[%s2153 + $0x1a8] sm:$0xff] %v2260
                  %v2262 = vld [vmem:[%s2152 + $0x1b0] sm:$0xff]
                  %2263 = vst [vmem:[%s2153 + $0x1b0] sm:$0xff] %v2262
                  %v2264 = vld [vmem:[%s2152 + $0x1b8] sm:$0xff]
                  %2265 = vst [vmem:[%s2153 + $0x1b8] sm:$0xff] %v2264
                  %v2266 = vld [vmem:[%s2152 + $0x1c0] sm:$0xff]
                  %2267 = vst [vmem:[%s2153 + $0x1c0] sm:$0xff] %v2266
                  %v2268 = vld [vmem:[%s2152 + $0x1c8] sm:$0xff]
                  %2269 = vst [vmem:[%s2153 + $0x1c8] sm:$0xff] %v2268
                  %v2270 = vld [vmem:[%s2152 + $0x1d0] sm:$0xff]
                  %2271 = vst [vmem:[%s2153 + $0x1d0] sm:$0xff] %v2270
                  %v2272 = vld [vmem:[%s2152 + $0x1d8] sm:$0xff]
                  %2273 = vst [vmem:[%s2153 + $0x1d8] sm:$0xff] %v2272
                  %v2274 = vld [vmem:[%s2152 + $0x1e0] sm:$0xff]
                  %2275 = vst [vmem:[%s2153 + $0x1e0] sm:$0xff] %v2274
                  %v2276 = vld [vmem:[%s2152 + $0x1e8] sm:$0xff]
                  %2277 = vst [vmem:[%s2153 + $0x1e8] sm:$0xff] %v2276
                  %v2278 = vld [vmem:[%s2152 + $0x1f0] sm:$0xff]
                  %2279 = vst [vmem:[%s2153 + $0x1f0] sm:$0xff] %v2278
                  %v2280 = vld [vmem:[%s2152 + $0x1f8] sm:$0xff]
                  %2281 = vst [vmem:[%s2153 + $0x1f8] sm:$0xff] %v2280
                  %s2282 = sadd.s32 1, %s2151
                  %p2283 = scmp.ge.s32.totalorder %s2282, %s2142
                  %s2284 = scalar_select %p2283, 0, %s2282
                  %s2285 = smul.u32 %s2284, 512
                  %s2286 = smul.u32 %s2284, 512
                  %s2287 = scalar_lea.vmem %s2104, %s2285 [#allocation5]
                  %s2288 = scalar_lea.vmem %s2114, %s2286
                $region236: #{ncf_forward.1} parent=230 // loop_footer
                  %s2148 = sadd.s32 %s2146, 1
                $region237: #{ncf_forward.1} parent=230 // loop_footer_branch
                  %2145 = sbr.rel target = $region233
                $region238: #{ncf_forward.1} parent=230 // loop_exit
                  _
                %s2289 = sshrl.u32 %s2141, 6
                %s2290 = sand.u32 %s2141, 63
                %s2291 = smul.u32 %s2289, 64
                %s2292 = smul.u32 128, %s2291
                %s2293 = sshra.s32 %s2292, 4
                %s2294 = scalar_lea.vmem %s2104, %s2293 [#allocation5]
                %s2295 = smul.u32 128, %s2291
                %s2296 = sshra.s32 %s2295, 4
                %s2297 = scalar_lea.vmem %s2114, %s2296
                // While loop
                $region239: #{ncf_forward.1} parent=230 // loop_pre_header
                  _
                $region240: #{ncf_forward.1} parent=230 // loop_header
                  %s2301 = sphi 0, %s2303
                  %p2302 = scmp.ge.s32.totalorder %s2301, %s2290
                  %s2306 = sphi 0, %s2313
                  %s2307 = sphi %s2294, %s2316
                  %s2308 = sphi %s2297, %s2317
                $region241: #{ncf_forward.1} parent=230 // loop_header_branch
                  %2305 = sbr.rel (%p2302) target = $region245
                $region242: #{ncf_forward.1} parent=230 // loop_body
                  %v2309 = vld [vmem:[%s2307] sm:$0xff]
                  %2310 = vst [vmem:[%s2308] sm:$0xff] %v2309
                  %s2311 = sadd.s32 1, %s2306
                  %p2312 = scmp.ge.s32.totalorder %s2311, %s2290
                  %s2313 = scalar_select %p2312, 0, %s2311
                  %s2314 = smul.u32 %s2313, 8
                  %s2315 = smul.u32 %s2313, 8
                  %s2316 = scalar_lea.vmem %s2294, %s2314 [#allocation5]
                  %s2317 = scalar_lea.vmem %s2297, %s2315
                $region243: #{ncf_forward.1} parent=230 // loop_footer
                  %s2303 = sadd.s32 %s2301, 1
                $region244: #{ncf_forward.1} parent=230 // loop_footer_branch
                  %2300 = sbr.rel target = $region240
                $region245: #{ncf_forward.1} parent=230 // loop_exit
                  _
              $region231: #{ncf_forward.1} parent=215 // pred_fallthru
                _
              %p2318 = pneg %p2137
              // Predicated region
              $region246: #{ncf_forward.1} parent=215 // pred_check
                _
              $region247: #{ncf_forward.1} parent=215 // pred_check_branch
                %2320 = sbr.rel (%p2137) target = $region249
              $region248: #{ncf_forward.1} parent=215 // pred_region
                %s2321 = sand.u32 %s2111, 7
                %s2322 = ssub.s32 %s2111, %s2321
                %s2323 = scalar_lea.vmem %s2104, %s2322 [#allocation5]
                %s2324 = ssub.s32 %s2111, %s2321
                %s2325 = scalar_lea.vmem %s2114, %s2324
                %s2326 = sshrl.u32 %s2111, 3
                %s2327 = sshrl.u32 %s2326, 6
                // While loop
                $region250: #{ncf_forward.1} parent=248 // loop_pre_header
                  _
                $region251: #{ncf_forward.1} parent=248 // loop_header
                  %s2331 = sphi 0, %s2333
                  %p2332 = scmp.ge.s32.totalorder %s2331, %s2327
                  %s2336 = sphi 0, %s2469
                  %s2337 = sphi %s2104, %s2472
                  %s2338 = sphi %s2114, %s2473
                $region252: #{ncf_forward.1} parent=248 // loop_header_branch
                  %2335 = sbr.rel (%p2332) target = $region256
                $region253: #{ncf_forward.1} parent=248 // loop_body
                  %v2339 = vld [vmem:[%s2337] sm:$0xff]
                  %2340 = vst [vmem:[%s2338] sm:$0xff] %v2339
                  %v2341 = vld [vmem:[%s2337 + $0x8] sm:$0xff]
                  %2342 = vst [vmem:[%s2338 + $0x8] sm:$0xff] %v2341
                  %v2343 = vld [vmem:[%s2337 + $0x10] sm:$0xff]
                  %2344 = vst [vmem:[%s2338 + $0x10] sm:$0xff] %v2343
                  %v2345 = vld [vmem:[%s2337 + $0x18] sm:$0xff]
                  %2346 = vst [vmem:[%s2338 + $0x18] sm:$0xff] %v2345
                  %v2347 = vld [vmem:[%s2337 + $0x20] sm:$0xff]
                  %2348 = vst [vmem:[%s2338 + $0x20] sm:$0xff] %v2347
                  %v2349 = vld [vmem:[%s2337 + $0x28] sm:$0xff]
                  %2350 = vst [vmem:[%s2338 + $0x28] sm:$0xff] %v2349
                  %v2351 = vld [vmem:[%s2337 + $0x30] sm:$0xff]
                  %2352 = vst [vmem:[%s2338 + $0x30] sm:$0xff] %v2351
                  %v2353 = vld [vmem:[%s2337 + $0x38] sm:$0xff]
                  %2354 = vst [vmem:[%s2338 + $0x38] sm:$0xff] %v2353
                  %v2355 = vld [vmem:[%s2337 + $0x40] sm:$0xff]
                  %2356 = vst [vmem:[%s2338 + $0x40] sm:$0xff] %v2355
                  %v2357 = vld [vmem:[%s2337 + $0x48] sm:$0xff]
                  %2358 = vst [vmem:[%s2338 + $0x48] sm:$0xff] %v2357
                  %v2359 = vld [vmem:[%s2337 + $0x50] sm:$0xff]
                  %2360 = vst [vmem:[%s2338 + $0x50] sm:$0xff] %v2359
                  %v2361 = vld [vmem:[%s2337 + $0x58] sm:$0xff]
                  %2362 = vst [vmem:[%s2338 + $0x58] sm:$0xff] %v2361
                  %v2363 = vld [vmem:[%s2337 + $0x60] sm:$0xff]
                  %2364 = vst [vmem:[%s2338 + $0x60] sm:$0xff] %v2363
                  %v2365 = vld [vmem:[%s2337 + $0x68] sm:$0xff]
                  %2366 = vst [vmem:[%s2338 + $0x68] sm:$0xff] %v2365
                  %v2367 = vld [vmem:[%s2337 + $0x70] sm:$0xff]
                  %2368 = vst [vmem:[%s2338 + $0x70] sm:$0xff] %v2367
                  %v2369 = vld [vmem:[%s2337 + $0x78] sm:$0xff]
                  %2370 = vst [vmem:[%s2338 + $0x78] sm:$0xff] %v2369
                  %v2371 = vld [vmem:[%s2337 + $0x80] sm:$0xff]
                  %2372 = vst [vmem:[%s2338 + $0x80] sm:$0xff] %v2371
                  %v2373 = vld [vmem:[%s2337 + $0x88] sm:$0xff]
                  %2374 = vst [vmem:[%s2338 + $0x88] sm:$0xff] %v2373
                  %v2375 = vld [vmem:[%s2337 + $0x90] sm:$0xff]
                  %2376 = vst [vmem:[%s2338 + $0x90] sm:$0xff] %v2375
                  %v2377 = vld [vmem:[%s2337 + $0x98] sm:$0xff]
                  %2378 = vst [vmem:[%s2338 + $0x98] sm:$0xff] %v2377
                  %v2379 = vld [vmem:[%s2337 + $0xa0] sm:$0xff]
                  %2380 = vst [vmem:[%s2338 + $0xa0] sm:$0xff] %v2379
                  %v2381 = vld [vmem:[%s2337 + $0xa8] sm:$0xff]
                  %2382 = vst [vmem:[%s2338 + $0xa8] sm:$0xff] %v2381
                  %v2383 = vld [vmem:[%s2337 + $0xb0] sm:$0xff]
                  %2384 = vst [vmem:[%s2338 + $0xb0] sm:$0xff] %v2383
                  %v2385 = vld [vmem:[%s2337 + $0xb8] sm:$0xff]
                  %2386 = vst [vmem:[%s2338 + $0xb8] sm:$0xff] %v2385
                  %v2387 = vld [vmem:[%s2337 + $0xc0] sm:$0xff]
                  %2388 = vst [vmem:[%s2338 + $0xc0] sm:$0xff] %v2387
                  %v2389 = vld [vmem:[%s2337 + $0xc8] sm:$0xff]
                  %2390 = vst [vmem:[%s2338 + $0xc8] sm:$0xff] %v2389
                  %v2391 = vld [vmem:[%s2337 + $0xd0] sm:$0xff]
                  %2392 = vst [vmem:[%s2338 + $0xd0] sm:$0xff] %v2391
                  %v2393 = vld [vmem:[%s2337 + $0xd8] sm:$0xff]
                  %2394 = vst [vmem:[%s2338 + $0xd8] sm:$0xff] %v2393
                  %v2395 = vld [vmem:[%s2337 + $0xe0] sm:$0xff]
                  %2396 = vst [vmem:[%s2338 + $0xe0] sm:$0xff] %v2395
                  %v2397 = vld [vmem:[%s2337 + $0xe8] sm:$0xff]
                  %2398 = vst [vmem:[%s2338 + $0xe8] sm:$0xff] %v2397
                  %v2399 = vld [vmem:[%s2337 + $0xf0] sm:$0xff]
                  %2400 = vst [vmem:[%s2338 + $0xf0] sm:$0xff] %v2399
                  %v2401 = vld [vmem:[%s2337 + $0xf8] sm:$0xff]
                  %2402 = vst [vmem:[%s2338 + $0xf8] sm:$0xff] %v2401
                  %v2403 = vld [vmem:[%s2337 + $0x100] sm:$0xff]
                  %2404 = vst [vmem:[%s2338 + $0x100] sm:$0xff] %v2403
                  %v2405 = vld [vmem:[%s2337 + $0x108] sm:$0xff]
                  %2406 = vst [vmem:[%s2338 + $0x108] sm:$0xff] %v2405
                  %v2407 = vld [vmem:[%s2337 + $0x110] sm:$0xff]
                  %2408 = vst [vmem:[%s2338 + $0x110] sm:$0xff] %v2407
                  %v2409 = vld [vmem:[%s2337 + $0x118] sm:$0xff]
                  %2410 = vst [vmem:[%s2338 + $0x118] sm:$0xff] %v2409
                  %v2411 = vld [vmem:[%s2337 + $0x120] sm:$0xff]
                  %2412 = vst [vmem:[%s2338 + $0x120] sm:$0xff] %v2411
                  %v2413 = vld [vmem:[%s2337 + $0x128] sm:$0xff]
                  %2414 = vst [vmem:[%s2338 + $0x128] sm:$0xff] %v2413
                  %v2415 = vld [vmem:[%s2337 + $0x130] sm:$0xff]
                  %2416 = vst [vmem:[%s2338 + $0x130] sm:$0xff] %v2415
                  %v2417 = vld [vmem:[%s2337 + $0x138] sm:$0xff]
                  %2418 = vst [vmem:[%s2338 + $0x138] sm:$0xff] %v2417
                  %v2419 = vld [vmem:[%s2337 + $0x140] sm:$0xff]
                  %2420 = vst [vmem:[%s2338 + $0x140] sm:$0xff] %v2419
                  %v2421 = vld [vmem:[%s2337 + $0x148] sm:$0xff]
                  %2422 = vst [vmem:[%s2338 + $0x148] sm:$0xff] %v2421
                  %v2423 = vld [vmem:[%s2337 + $0x150] sm:$0xff]
                  %2424 = vst [vmem:[%s2338 + $0x150] sm:$0xff] %v2423
                  %v2425 = vld [vmem:[%s2337 + $0x158] sm:$0xff]
                  %2426 = vst [vmem:[%s2338 + $0x158] sm:$0xff] %v2425
                  %v2427 = vld [vmem:[%s2337 + $0x160] sm:$0xff]
                  %2428 = vst [vmem:[%s2338 + $0x160] sm:$0xff] %v2427
                  %v2429 = vld [vmem:[%s2337 + $0x168] sm:$0xff]
                  %2430 = vst [vmem:[%s2338 + $0x168] sm:$0xff] %v2429
                  %v2431 = vld [vmem:[%s2337 + $0x170] sm:$0xff]
                  %2432 = vst [vmem:[%s2338 + $0x170] sm:$0xff] %v2431
                  %v2433 = vld [vmem:[%s2337 + $0x178] sm:$0xff]
                  %2434 = vst [vmem:[%s2338 + $0x178] sm:$0xff] %v2433
                  %v2435 = vld [vmem:[%s2337 + $0x180] sm:$0xff]
                  %2436 = vst [vmem:[%s2338 + $0x180] sm:$0xff] %v2435
                  %v2437 = vld [vmem:[%s2337 + $0x188] sm:$0xff]
                  %2438 = vst [vmem:[%s2338 + $0x188] sm:$0xff] %v2437
                  %v2439 = vld [vmem:[%s2337 + $0x190] sm:$0xff]
                  %2440 = vst [vmem:[%s2338 + $0x190] sm:$0xff] %v2439
                  %v2441 = vld [vmem:[%s2337 + $0x198] sm:$0xff]
                  %2442 = vst [vmem:[%s2338 + $0x198] sm:$0xff] %v2441
                  %v2443 = vld [vmem:[%s2337 + $0x1a0] sm:$0xff]
                  %2444 = vst [vmem:[%s2338 + $0x1a0] sm:$0xff] %v2443
                  %v2445 = vld [vmem:[%s2337 + $0x1a8] sm:$0xff]
                  %2446 = vst [vmem:[%s2338 + $0x1a8] sm:$0xff] %v2445
                  %v2447 = vld [vmem:[%s2337 + $0x1b0] sm:$0xff]
                  %2448 = vst [vmem:[%s2338 + $0x1b0] sm:$0xff] %v2447
                  %v2449 = vld [vmem:[%s2337 + $0x1b8] sm:$0xff]
                  %2450 = vst [vmem:[%s2338 + $0x1b8] sm:$0xff] %v2449
                  %v2451 = vld [vmem:[%s2337 + $0x1c0] sm:$0xff]
                  %2452 = vst [vmem:[%s2338 + $0x1c0] sm:$0xff] %v2451
                  %v2453 = vld [vmem:[%s2337 + $0x1c8] sm:$0xff]
                  %2454 = vst [vmem:[%s2338 + $0x1c8] sm:$0xff] %v2453
                  %v2455 = vld [vmem:[%s2337 + $0x1d0] sm:$0xff]
                  %2456 = vst [vmem:[%s2338 + $0x1d0] sm:$0xff] %v2455
                  %v2457 = vld [vmem:[%s2337 + $0x1d8] sm:$0xff]
                  %2458 = vst [vmem:[%s2338 + $0x1d8] sm:$0xff] %v2457
                  %v2459 = vld [vmem:[%s2337 + $0x1e0] sm:$0xff]
                  %2460 = vst [vmem:[%s2338 + $0x1e0] sm:$0xff] %v2459
                  %v2461 = vld [vmem:[%s2337 + $0x1e8] sm:$0xff]
                  %2462 = vst [vmem:[%s2338 + $0x1e8] sm:$0xff] %v2461
                  %v2463 = vld [vmem:[%s2337 + $0x1f0] sm:$0xff]
                  %2464 = vst [vmem:[%s2338 + $0x1f0] sm:$0xff] %v2463
                  %v2465 = vld [vmem:[%s2337 + $0x1f8] sm:$0xff]
                  %2466 = vst [vmem:[%s2338 + $0x1f8] sm:$0xff] %v2465
                  %s2467 = sadd.s32 1, %s2336
                  %p2468 = scmp.ge.s32.totalorder %s2467, %s2327
                  %s2469 = scalar_select %p2468, 0, %s2467
                  %s2470 = smul.u32 %s2469, 512
                  %s2471 = smul.u32 %s2469, 512
                  %s2472 = scalar_lea.vmem %s2104, %s2470 [#allocation5]
                  %s2473 = scalar_lea.vmem %s2114, %s2471
                $region254: #{ncf_forward.1} parent=248 // loop_footer
                  %s2333 = sadd.s32 %s2331, 1
                $region255: #{ncf_forward.1} parent=248 // loop_footer_branch
                  %2330 = sbr.rel target = $region251
                $region256: #{ncf_forward.1} parent=248 // loop_exit
                  _
                %s2474 = sshrl.u32 %s2326, 6
                %s2475 = sand.u32 %s2326, 63
                %s2476 = smul.u32 %s2474, 64
                %s2477 = smul.u32 128, %s2476
                %s2478 = sshra.s32 %s2477, 4
                %s2479 = scalar_lea.vmem %s2104, %s2478 [#allocation5]
                %s2480 = smul.u32 128, %s2476
                %s2481 = sshra.s32 %s2480, 4
                %s2482 = scalar_lea.vmem %s2114, %s2481
                // While loop
                $region257: #{ncf_forward.1} parent=248 // loop_pre_header
                  _
                $region258: #{ncf_forward.1} parent=248 // loop_header
                  %s2486 = sphi 0, %s2488
                  %p2487 = scmp.ge.s32.totalorder %s2486, %s2475
                  %s2491 = sphi 0, %s2498
                  %s2492 = sphi %s2479, %s2501
                  %s2493 = sphi %s2482, %s2502
                $region259: #{ncf_forward.1} parent=248 // loop_header_branch
                  %2490 = sbr.rel (%p2487) target = $region263
                $region260: #{ncf_forward.1} parent=248 // loop_body
                  %v2494 = vld [vmem:[%s2492] sm:$0xff]
                  %2495 = vst [vmem:[%s2493] sm:$0xff] %v2494
                  %s2496 = sadd.s32 1, %s2491
                  %p2497 = scmp.ge.s32.totalorder %s2496, %s2475
                  %s2498 = scalar_select %p2497, 0, %s2496
                  %s2499 = smul.u32 %s2498, 8
                  %s2500 = smul.u32 %s2498, 8
                  %s2501 = scalar_lea.vmem %s2479, %s2499 [#allocation5]
                  %s2502 = scalar_lea.vmem %s2482, %s2500
                $region261: #{ncf_forward.1} parent=248 // loop_footer
                  %s2488 = sadd.s32 %s2486, 1
                $region262: #{ncf_forward.1} parent=248 // loop_footer_branch
                  %2485 = sbr.rel target = $region258
                $region263: #{ncf_forward.1} parent=248 // loop_exit
                  _
                %s2503 = sshllo.u32 0, %s2321
                loop: start=0, step=1, limit=1
                $region264: #{ncf_forward.1} parent=248 // loop_pre_header
                  _
                $region265: #{ncf_forward.1} parent=248 // loop_header
                  %s2505 = sphi 0, %s2509
                  %p2506 = scmp.ge.s32.totalorder %s2505, 1
                  %s2510 = sphi %s2323, %s2323
                  %s2511 = sphi %s2325, %s2325
                $region266: #{ncf_forward.1} parent=248 // loop_header_branch
                  %2508 = sbr.rel (%p2506) target = $region270
                $region267: #{ncf_forward.1} parent=248 // loop_body
                  %v2512 = vld [vmem:[%s2510] sm:%s2503]
                  %2513 = vst [vmem:[%s2511] sm:%s2503] %v2512
                $region268: #{ncf_forward.1} parent=248 // loop_footer
                  %s2509 = sadd.s32 1, %s2505
                $region269: #{ncf_forward.1} parent=248 // loop_footer_branch
                  %2504 = sbr.rel target = $region265
                $region270: #{ncf_forward.1} parent=248 // loop_exit
                  _
              $region249: #{ncf_forward.1} parent=215 // pred_fallthru
                _
            $region216: #{ncf_forward.1} parent=211 // pred_fallthru
              _
            // Predicated region
            $region217: #{ncf_forward.1} parent=211 // pred_check
              %p2122 = pneg %p2118
            $region218: #{ncf_forward.1} parent=211 // pred_check_branch
              %2124 = sbr.rel (%p2122) target = $region220
            $region219: #{ncf_forward.1} parent=211 // pred_region
              %s2125 = sshllo.u32 0, %s2111
              loop: start=0, step=1, limit=1
              $region221: #{ncf_forward.1} parent=219 // loop_pre_header
                _
              $region222: #{ncf_forward.1} parent=219 // loop_header
                %s2127 = sphi 0, %s2131
                %p2128 = scmp.ge.s32.totalorder %s2127, 1
                %s2132 = sphi %s2104, %s2104
                %s2133 = sphi %s2114, %s2114
              $region223: #{ncf_forward.1} parent=219 // loop_header_branch
                %2130 = sbr.rel (%p2128) target = $region227
              $region224: #{ncf_forward.1} parent=219 // loop_body
                %v2134 = vld [vmem:[%s2132] sm:%s2125]
                %2135 = vst [vmem:[%s2133] sm:%s2125] %v2134
              $region225: #{ncf_forward.1} parent=219 // loop_footer
                %s2131 = sadd.s32 1, %s2127
              $region226: #{ncf_forward.1} parent=219 // loop_footer_branch
                %2126 = sbr.rel target = $region222
              $region227: #{ncf_forward.1} parent=219 // loop_exit
                _
            $region220: #{ncf_forward.1} parent=211 // pred_fallthru
              _
          $region212: #{ncf_forward.1} parent=207 // pred_fallthru
            _
          %2514 = vnop
        $region208: #{ncf_forward.1} parent=195 // pred_fallthru
          _
      $region196: #{ncf_forward.1} parent=5 // pred_fallthru
        _
      %p2515 = scmp.le.s32.totalorder 2, %s21
      // Predicated region
      $region271: #{ncf_forward.1} parent=5 // pred_check
        %p2516 = pneg %p2515
      $region272: #{ncf_forward.1} parent=5 // pred_check_branch
        %2518 = sbr.rel (%p2516) target = $region274
      $region273: #{ncf_forward.1} parent=5 // pred_region
        %s2519 = ssub.s32 %s21, 2
        // Predicated region
        $region275: #{ncf_forward.1} parent=273 // pred_check
          %p2520 = pneg %p333
        $region276: #{ncf_forward.1} parent=273 // pred_check_branch
          %2522 = sbr.rel (%p2520) target = $region278
        $region277: #{ncf_forward.1} parent=273 // pred_region
          %s2523 = sand.u32 %s318, 1
          %s2524 = sand.u32 %s318, 1
          %s2525 = smul.addr %s2524, 2
          %s2526 = scalar_lea.vmem [#allocation5], %s2525
        $region278: #{ncf_forward.1} parent=273 // pred_fallthru
          _
      $region274: #{ncf_forward.1} parent=5 // pred_fallthru
        _
    $region6: #{ncf_forward.1} parent=1 // loop_footer
      %s25 = sadd.s32 1, %s21
    $region7: #{ncf_forward.1} parent=1 // loop_footer_branch
      %20 = sbr.rel target = $region3
    $region8: #{ncf_forward.1} parent=1 // loop_exit
      _

</llo_original>
